<compile_context>
chip_gen: v7x
topology: tpu7x:2x2x1
jax: 0.10.0
libtpu: 0.0.40
codegen_flags: <defaults>
</compile_context>

<pallas_src>
import functools

import numpy as np

import jax
import jax.numpy as jnp
from jax import lax
from jax.experimental import pallas as pl
from jax.experimental.pallas import tpu as pltpu


# (ri, ro) pairs: ri = output-row parity (phase), ro = row offset into the
# stitched (TH+2)-row input slab that this phase reads.
_ROW_PAIRS = ((0, 0), (0, 1), (1, 1), (1, 2))


# ----------------------------------------------------------------------------
# Kernel
# ----------------------------------------------------------------------------
def _upconv2x_kernel(xc_ref, xn_ref, m_ref, a_ref, wv_ref, b_ref, o_ref,
                     xrow_ref):
    """Fused (nearest x2 upsample + 3x3 'same' conv) for one (batch, row-tile).

    xc_ref  : (1, C, TH, W)     current row-block of the row-padded input (VMEM)
    xn_ref  : (1, C, TH, W)     next row-block (only its first 2 rows are used)
    m_ref   : (3, W, 2W)        0/1 column upsample+pad+tap-shift matrices
    a_ref   : (4, 2TH, TH+2)    0/1 row phase-select / interleave matrices
    wv_ref  : SMEM (4*3*C*C,)   regrouped conv weights V[pair, dw, cin, cout]
    b_ref   : SMEM (C,)         bias
    o_ref   : (1, C, 2TH, 2W)   output tile (NCHW)
    xrow_ref: VMEM (C, TH+2, W) scratch: current row-block + 2-row halo
    """
    C = xc_ref.shape[1]
    TH = xc_ref.shape[2]
    W = xc_ref.shape[3]

    # Stitch the 2-row halo (rows TH, TH+1 come from the next row-block).
    xrow_ref[:, :TH, :] = xc_ref[0]
    xrow_ref[:, TH:, :] = xn_ref[0, :, 0:2, :]

    # MXU: column upsample + SAME pad + per-tap shift as 0/1 matmuls (exact
    # gather of original columns into the 2W-wide, lane-dense layout).
    # xu[c][dw][r, j] == upsampled&padded row r of channel c at column (j + dw).
    xu = []
    for c in range(C):
        rows_c = xrow_ref[c]                              # (TH+2, W)
        xu.append([
            jnp.dot(rows_c, m_ref[dw], preferred_element_type=jnp.float32)
            for dw in range(3)
        ])                                                # each (TH+2, 2W)

    # VPU: per (row-phase pair, cout) accumulation with scalar weights from SMEM
    # (C is tiny, so an MXU channel contraction would waste >99% of its lanes),
    # then one small 0/1 MXU matmul per pair selects the rows each phase needs
    # and interleaves even/odd output rows into a dense (2TH, 2W) slab.
    for o in range(C):
        out_c = None
        for pidx in range(4):
            s = None
            for dw in range(3):
                for c in range(C):
                    w_s = wv_ref[((pidx * 3 + dw) * C + c) * C + o]
                    term = w_s * xu[c][dw]
                    s = term if s is None else s + term
            contrib = jnp.dot(a_ref[pidx], s,
                              preferred_element_type=jnp.float32)  # (2TH, 2W)
            out_c = contrib if out_c is None else out_c + contrib
        o_ref[0, o] = (out_c + b_ref[o]).astype(o_ref.dtype)


# ----------------------------------------------------------------------------
# Host-side constant matrices / weight regrouping (all tiny)
# ----------------------------------------------------------------------------
def _column_matrices(w):
    """M[dw, q, j] = 1 iff column tap dw at output col j reads original col q."""
    w2 = 2 * w
    m = np.zeros((3, w, w2), dtype=np.float32)
    for dw in range(3):
        for j in range(w2):
            src = j + dw          # col in the zero-padded upsampled row [0, 2W+1]
            if 1 <= src <= w2:
                m[dw, (src - 1) // 2, j] = 1.0
    return jnp.asarray(m)


def _row_matrices(th):
    """A[pair, i, r] = 1 iff output row i (parity ri) reads stitched row r."""
    a = np.zeros((4, 2 * th, th + 2), dtype=np.float32)
    for pidx, (ri, ro) in enumerate(_ROW_PAIRS):
        for p in range(th):
            a[pidx, 2 * p + ri, p + ro] = 1.0
    return jnp.asarray(a)


def _regroup_weights(w_hwio):
    """Polyphase row regrouping of the 3x3 filter, ordered as _ROW_PAIRS."""
    # w_hwio: (3, 3, Cin, Cout) indexed (dh, dw, cin, cout)
    v = jnp.stack([
        w_hwio[0],                # (ri=0, ro=0): original row p-1, even out rows
        w_hwio[1] + w_hwio[2],    # (ri=0, ro=1): original row p,   even out rows
        w_hwio[0] + w_hwio[1],    # (ri=1, ro=1): original row p,   odd  out rows
        w_hwio[2],                # (ri=1, ro=2): original row p+1, odd  out rows
    ], axis=0)                    # (4, 3, Cin, Cout)
    return v.reshape(-1).astype(jnp.float32)


# ----------------------------------------------------------------------------
# pallas_call wrapper
# ----------------------------------------------------------------------------
def upsample_conv2x_pallas(x_nchw, w_hwio, bias, *, tile_h=None):
    """2x nearest upsample + Conv2d(k=3, s=1, p=1), fused, NCHW in / NCHW out."""
    B, C, H, W = x_nchw.shape
    if tile_h is None:
        # TODO(synk): re-derive the tile for v7x (64 MiB VMEM) at very large H*W*C.
        tile_h = 32 if H >= 64 else 8
    assert tile_h % 8 == 0, "row tile must be a multiple of 8 sublanes"

    n_tiles = pl.cdiv(H, tile_h)
    h_eff = n_tiles * tile_h
    # One zero row on top ('same' conv pad) + zeros at the bottom up to
    # (n_tiles + 1) * tile_h rows so the +1 halo row-block of the last tile is
    # always in range (extra rows are zero => bottom conv padding stays exact).
    rows_total = (n_tiles + 1) * tile_h
    x_rows = jnp.pad(x_nchw, ((0, 0), (0, 0), (1, rows_total - H - 1), (0, 0)))

    m_cols = _column_matrices(W)                  # (3, W, 2W)
    a_rows = _row_matrices(tile_h)                # (4, 2TH, TH+2)
    wv = _regroup_weights(w_hwio)                 # (4*3*C*C,)
    b_vec = bias.reshape(C).astype(jnp.float32)   # (C,)
    w2 = 2 * W

    out = pl.pallas_call(
        _upconv2x_kernel,
        out_shape=jax.ShapeDtypeStruct((B, C, 2 * h_eff, w2), x_nchw.dtype),
        grid_spec=pltpu.PrefetchScalarGridSpec(
            num_scalar_prefetch=0,
            grid=(B, n_tiles),
            in_specs=[
                # current row-block
                pl.BlockSpec((1, C, tile_h, W), lambda b, t: (b, 0, t, 0)),
                # next row-block (2-row halo); same array, shifted block index
                pl.BlockSpec((1, C, tile_h, W), lambda b, t: (b, 0, t + 1, 0)),
                pl.BlockSpec((3, W, w2), lambda b, t: (0, 0, 0)),
                pl.BlockSpec((4, 2 * tile_h, tile_h + 2),
                             lambda b, t: (0, 0, 0)),
                pl.BlockSpec(memory_space=pltpu.MemorySpace.SMEM),  # weights
                pl.BlockSpec(memory_space=pltpu.MemorySpace.SMEM),  # bias
            ],
            out_specs=pl.BlockSpec((1, C, 2 * tile_h, w2),
                                   lambda b, t: (b, 0, t, 0)),
            scratch_shapes=[pltpu.VMEM((C, tile_h + 2, W), jnp.float32)],
        ),
        compiler_params=pltpu.CompilerParams(
            dimension_semantics=("parallel", "parallel"),
            vmem_limit_bytes=32 * 1024 * 1024,
        ),
    )(x_rows, x_rows, m_cols, a_rows, wv, b_vec)

    if h_eff != H:
        out = out[:, :, : 2 * H, :]
    return out


# ----------------------------------------------------------------------------
# Module-equivalent forward (PyTorch `Upsample`)
# ----------------------------------------------------------------------------
def upsample_forward(x_nchw, w_hwio=None, bias=None, *, upsample_level=2,
                     with_conv=True):
    if not with_conv:
        x = jnp.repeat(x_nchw, upsample_level, axis=2)
        return jnp.repeat(x, upsample_level, axis=3)
    if upsample_level != 2:
        # TODO(synk): generalize the fused polyphase kernel to other integer scales.
        raise NotImplementedError("fused Pallas path implemented for scale factor 2")
    return upsample_conv2x_pallas(x_nchw, w_hwio, bias)


if __name__ == "__main__":
    key = jax.random.PRNGKey(0)
    k_x, k_w, k_b = jax.random.split(key, 3)

    B, C, H, W = 2, 4, 16, 16
    x = jax.random.normal(k_x, (B, C, H, W), dtype=jnp.float32)

    # Synthetic Conv2d(C, C, k=3) params.  PyTorch layout is (Cout, Cin, 3, 3);
    # the kernel wants HWIO = (3, 3, Cin, Cout).
    w_oihw = jax.random.normal(k_w, (C, C, 3, 3), dtype=jnp.float32) * 0.1
    w_hwio = jnp.transpose(w_oihw, (2, 3, 1, 0))
    bias = jax.random.normal(k_b, (C,), dtype=jnp.float32) * 0.1

    fwd = jax.jit(functools.partial(
        upsample_forward, upsample_level=2, with_conv=True))
    y = fwd(x, w_hwio, bias)
    jax.block_until_ready(y)

    # Pure-JAX reference: nearest x2 upsample + 'same' 3x3 conv, all in NCHW.
    x_up = jnp.repeat(jnp.repeat(x, 2, axis=2), 2, axis=3)
    y_ref = lax.conv_general_dilated(
        x_up, w_oihw,
        window_strides=(1, 1), padding="SAME",
        dimension_numbers=("NCHW", "OIHW", "NCHW"),
        precision=lax.Precision.HIGHEST,
    ) + bias[None, :, None, None]

    assert y.shape == (B, C, 2 * H, 2 * W), y.shape
    max_err = float(jnp.max(jnp.abs(y - y_ref)))
    assert jnp.allclose(y, y_ref, atol=1e-3, rtol=1e-3), max_err

    print("KERNEL_OK")
</pallas_src>

<mosaic_0001>
module attributes {stable_mosaic.version = 11 : i64} {
  func.func @_upconv2x_kernel(%arg0: i32, %arg1: i32, %arg2: memref<1x4x8x16xf32, #tpu.memory_space<vmem>>, %arg3: memref<1x4x8x16xf32, #tpu.memory_space<vmem>>, %arg4: memref<3x16x32xf32, #tpu.memory_space<vmem>>, %arg5: memref<4x16x10xf32, #tpu.memory_space<vmem>>, %arg6: memref<192xf32, #tpu.memory_space<smem>>, %arg7: memref<4xf32, #tpu.memory_space<smem>>, %arg8: memref<1x4x16x32xf32, #tpu.memory_space<vmem>>, %arg9: memref<4x10x16xf32, #tpu.memory_space<vmem>>) attributes {dimension_semantics = [#tpu.dimension_semantics<parallel>, #tpu.dimension_semantics<parallel>], iteration_bounds = array<i64: 2, 2>, scalar_prefetch = 0 : i64, scratch_operands = 1 : i64, tpu.core_type = #tpu.core_type<tc>, window_params = [{transform_indices = @transform_0, window_bounds = array<i64: 1, 4, 8, 16>}, {transform_indices = @transform_1, window_bounds = array<i64: 1, 4, 8, 16>}, {pipeline_mode = #tpu.pipeline_mode<synchronous>, transform_indices = @transform_2, window_bounds = array<i64: 3, 16, 32>}, {pipeline_mode = #tpu.pipeline_mode<synchronous>, transform_indices = @transform_3, window_bounds = array<i64: 4, 16, 10>}, {transform_indices = @transform_4, window_bounds = array<i64: 192>}, {transform_indices = @transform_5, window_bounds = array<i64: 4>}, {transform_indices = @transform_6, window_bounds = array<i64: 1, 4, 16, 32>}]} {
    %c0 = arith.constant 0 : index
    %c0_0 = arith.constant 0 : index
    %c0_1 = arith.constant 0 : index
    %c0_2 = arith.constant 0 : index
    %0 = vector.load %arg2[%c0, %c0_0, %c0_1, %c0_2] : memref<1x4x8x16xf32, #tpu.memory_space<vmem>>, vector<1x4x8x16xf32>
    %1 = vector.shape_cast %0 : vector<1x4x8x16xf32> to vector<4x8x16xf32>
    %c0_3 = arith.constant 0 : index
    %c0_4 = arith.constant 0 : index
    %c0_5 = arith.constant 0 : index
    %2 = vector.load %arg9[%c0_3, %c0_4, %c0_5] : memref<4x10x16xf32, #tpu.memory_space<vmem>>, vector<4x8x16xf32>
    tpu.vector_store %arg9[%c0_3, %c0_4, %c0_5], %1 {strides = array<i32>} : memref<4x10x16xf32, #tpu.memory_space<vmem>>, vector<4x8x16xf32>,
    %c0_6 = arith.constant 0 : index
    %c0_7 = arith.constant 0 : index
    %c0_8 = arith.constant 0 : index
    %c0_9 = arith.constant 0 : index
    %3 = vector.load %arg3[%c0_6, %c0_7, %c0_8, %c0_9] : memref<1x4x8x16xf32, #tpu.memory_space<vmem>>, vector<1x4x2x16xf32>
    %4 = vector.shape_cast %3 : vector<1x4x2x16xf32> to vector<4x2x16xf32>
    %c0_10 = arith.constant 0 : index
    %c8 = arith.constant 8 : index
    %c0_11 = arith.constant 0 : index
    %5 = vector.load %arg9[%c0_10, %c8, %c0_11] : memref<4x10x16xf32, #tpu.memory_space<vmem>>, vector<4x2x16xf32>
    tpu.vector_store %arg9[%c0_10, %c8, %c0_11], %4 {strides = array<i32>} : memref<4x10x16xf32, #tpu.memory_space<vmem>>, vector<4x2x16xf32>,
    %c0_12 = arith.constant 0 : index
    %c0_13 = arith.constant 0 : index
    %c0_14 = arith.constant 0 : index
    %6 = vector.load %arg9[%c0_12, %c0_13, %c0_14] : memref<4x10x16xf32, #tpu.memory_space<vmem>>, vector<1x10x16xf32>
    %7 = vector.shape_cast %6 : vector<1x10x16xf32> to vector<10x16xf32>
    %c0_15 = arith.constant 0 : index
    %c0_16 = arith.constant 0 : index
    %c0_17 = arith.constant 0 : index
    %8 = vector.load %arg4[%c0_15, %c0_16, %c0_17] : memref<3x16x32xf32, #tpu.memory_space<vmem>>, vector<1x16x32xf32>
    %9 = vector.shape_cast %8 : vector<1x16x32xf32> to vector<16x32xf32>
    %cst = arith.constant dense<0.000000e+00> : vector<10x32xf32>
    %10 = tpu.matmul %7, %9, %cst {dimension_numbers = #tpu.dot_dimension_numbers<[1], [0], [0], [1], [0, 0, 1, 1], [], []>} : vector<10x16xf32>, vector<16x32xf32>, vector<10x32xf32> -> vector<10x32xf32>
    %c1 = arith.constant 1 : index
    %c0_18 = arith.constant 0 : index
    %c0_19 = arith.constant 0 : index
    %11 = vector.load %arg4[%c1, %c0_18, %c0_19] : memref<3x16x32xf32, #tpu.memory_space<vmem>>, vector<1x16x32xf32>
    %12 = vector.shape_cast %11 : vector<1x16x32xf32> to vector<16x32xf32>
    %cst_20 = arith.constant dense<0.000000e+00> : vector<10x32xf32>
    %13 = tpu.matmul %7, %12, %cst_20 {dimension_numbers = #tpu.dot_dimension_numbers<[1], [0], [0], [1], [0, 0, 1, 1], [], []>} : vector<10x16xf32>, vector<16x32xf32>, vector<10x32xf32> -> vector<10x32xf32>
    %c2 = arith.constant 2 : index
    %c0_21 = arith.constant 0 : index
    %c0_22 = arith.constant 0 : index
    %14 = vector.load %arg4[%c2, %c0_21, %c0_22] : memref<3x16x32xf32, #tpu.memory_space<vmem>>, vector<1x16x32xf32>
    %15 = vector.shape_cast %14 : vector<1x16x32xf32> to vector<16x32xf32>
    %cst_23 = arith.constant dense<0.000000e+00> : vector<10x32xf32>
    %16 = tpu.matmul %7, %15, %cst_23 {dimension_numbers = #tpu.dot_dimension_numbers<[1], [0], [0], [1], [0, 0, 1, 1], [], []>} : vector<10x16xf32>, vector<16x32xf32>, vector<10x32xf32> -> vector<10x32xf32>
    %c1_24 = arith.constant 1 : index
    %c0_25 = arith.constant 0 : index
    %c0_26 = arith.constant 0 : index
    %17 = vector.load %arg9[%c1_24, %c0_25, %c0_26] : memref<4x10x16xf32, #tpu.memory_space<vmem>>, vector<1x10x16xf32>
    %18 = vector.shape_cast %17 : vector<1x10x16xf32> to vector<10x16xf32>
    %c0_27 = arith.constant 0 : index
    %c0_28 = arith.constant 0 : index
    %c0_29 = arith.constant 0 : index
    %19 = vector.load %arg4[%c0_27, %c0_28, %c0_29] : memref<3x16x32xf32, #tpu.memory_space<vmem>>, vector<1x16x32xf32>
    %20 = vector.shape_cast %19 : vector<1x16x32xf32> to vector<16x32xf32>
    %cst_30 = arith.constant dense<0.000000e+00> : vector<10x32xf32>
    %21 = tpu.matmul %18, %20, %cst_30 {dimension_numbers = #tpu.dot_dimension_numbers<[1], [0], [0], [1], [0, 0, 1, 1], [], []>} : vector<10x16xf32>, vector<16x32xf32>, vector<10x32xf32> -> vector<10x32xf32>
    %c1_31 = arith.constant 1 : index
    %c0_32 = arith.constant 0 : index
    %c0_33 = arith.constant 0 : index
    %22 = vector.load %arg4[%c1_31, %c0_32, %c0_33] : memref<3x16x32xf32, #tpu.memory_space<vmem>>, vector<1x16x32xf32>
    %23 = vector.shape_cast %22 : vector<1x16x32xf32> to vector<16x32xf32>
    %cst_34 = arith.constant dense<0.000000e+00> : vector<10x32xf32>
    %24 = tpu.matmul %18, %23, %cst_34 {dimension_numbers = #tpu.dot_dimension_numbers<[1], [0], [0], [1], [0, 0, 1, 1], [], []>} : vector<10x16xf32>, vector<16x32xf32>, vector<10x32xf32> -> vector<10x32xf32>
    %c2_35 = arith.constant 2 : index
    %c0_36 = arith.constant 0 : index
    %c0_37 = arith.constant 0 : index
    %25 = vector.load %arg4[%c2_35, %c0_36, %c0_37] : memref<3x16x32xf32, #tpu.memory_space<vmem>>, vector<1x16x32xf32>
    %26 = vector.shape_cast %25 : vector<1x16x32xf32> to vector<16x32xf32>
    %cst_38 = arith.constant dense<0.000000e+00> : vector<10x32xf32>
    %27 = tpu.matmul %18, %26, %cst_38 {dimension_numbers = #tpu.dot_dimension_numbers<[1], [0], [0], [1], [0, 0, 1, 1], [], []>} : vector<10x16xf32>, vector<16x32xf32>, vector<10x32xf32> -> vector<10x32xf32>
    %c2_39 = arith.constant 2 : index
    %c0_40 = arith.constant 0 : index
    %c0_41 = arith.constant 0 : index
    %28 = vector.load %arg9[%c2_39, %c0_40, %c0_41] : memref<4x10x16xf32, #tpu.memory_space<vmem>>, vector<1x10x16xf32>
    %29 = vector.shape_cast %28 : vector<1x10x16xf32> to vector<10x16xf32>
    %c0_42 = arith.constant 0 : index
    %c0_43 = arith.constant 0 : index
    %c0_44 = arith.constant 0 : index
    %30 = vector.load %arg4[%c0_42, %c0_43, %c0_44] : memref<3x16x32xf32, #tpu.memory_space<vmem>>, vector<1x16x32xf32>
    %31 = vector.shape_cast %30 : vector<1x16x32xf32> to vector<16x32xf32>
    %cst_45 = arith.constant dense<0.000000e+00> : vector<10x32xf32>
    %32 = tpu.matmul %29, %31, %cst_45 {dimension_numbers = #tpu.dot_dimension_numbers<[1], [0], [0], [1], [0, 0, 1, 1], [], []>} : vector<10x16xf32>, vector<16x32xf32>, vector<10x32xf32> -> vector<10x32xf32>
    %c1_46 = arith.constant 1 : index
    %c0_47 = arith.constant 0 : index
    %c0_48 = arith.constant 0 : index
    %33 = vector.load %arg4[%c1_46, %c0_47, %c0_48] : memref<3x16x32xf32, #tpu.memory_space<vmem>>, vector<1x16x32xf32>
    %34 = vector.shape_cast %33 : vector<1x16x32xf32> to vector<16x32xf32>
    %cst_49 = arith.constant dense<0.000000e+00> : vector<10x32xf32>
    %35 = tpu.matmul %29, %34, %cst_49 {dimension_numbers = #tpu.dot_dimension_numbers<[1], [0], [0], [1], [0, 0, 1, 1], [], []>} : vector<10x16xf32>, vector<16x32xf32>, vector<10x32xf32> -> vector<10x32xf32>
    %c2_50 = arith.constant 2 : index
    %c0_51 = arith.constant 0 : index
    %c0_52 = arith.constant 0 : index
    %36 = vector.load %arg4[%c2_50, %c0_51, %c0_52] : memref<3x16x32xf32, #tpu.memory_space<vmem>>, vector<1x16x32xf32>
    %37 = vector.shape_cast %36 : vector<1x16x32xf32> to vector<16x32xf32>
    %cst_53 = arith.constant dense<0.000000e+00> : vector<10x32xf32>
    %38 = tpu.matmul %29, %37, %cst_53 {dimension_numbers = #tpu.dot_dimension_numbers<[1], [0], [0], [1], [0, 0, 1, 1], [], []>} : vector<10x16xf32>, vector<16x32xf32>, vector<10x32xf32> -> vector<10x32xf32>
    %c3 = arith.constant 3 : index
    %c0_54 = arith.constant 0 : index
    %c0_55 = arith.constant 0 : index
    %39 = vector.load %arg9[%c3, %c0_54, %c0_55] : memref<4x10x16xf32, #tpu.memory_space<vmem>>, vector<1x10x16xf32>
    %40 = vector.shape_cast %39 : vector<1x10x16xf32> to vector<10x16xf32>
    %c0_56 = arith.constant 0 : index
    %c0_57 = arith.constant 0 : index
    %c0_58 = arith.constant 0 : index
    %41 = vector.load %arg4[%c0_56, %c0_57, %c0_58] : memref<3x16x32xf32, #tpu.memory_space<vmem>>, vector<1x16x32xf32>
    %42 = vector.shape_cast %41 : vector<1x16x32xf32> to vector<16x32xf32>
    %cst_59 = arith.constant dense<0.000000e+00> : vector<10x32xf32>
    %43 = tpu.matmul %40, %42, %cst_59 {dimension_numbers = #tpu.dot_dimension_numbers<[1], [0], [0], [1], [0, 0, 1, 1], [], []>} : vector<10x16xf32>, vector<16x32xf32>, vector<10x32xf32> -> vector<10x32xf32>
    %c1_60 = arith.constant 1 : index
    %c0_61 = arith.constant 0 : index
    %c0_62 = arith.constant 0 : index
    %44 = vector.load %arg4[%c1_60, %c0_61, %c0_62] : memref<3x16x32xf32, #tpu.memory_space<vmem>>, vector<1x16x32xf32>
    %45 = vector.shape_cast %44 : vector<1x16x32xf32> to vector<16x32xf32>
    %cst_63 = arith.constant dense<0.000000e+00> : vector<10x32xf32>
    %46 = tpu.matmul %40, %45, %cst_63 {dimension_numbers = #tpu.dot_dimension_numbers<[1], [0], [0], [1], [0, 0, 1, 1], [], []>} : vector<10x16xf32>, vector<16x32xf32>, vector<10x32xf32> -> vector<10x32xf32>
    %c2_64 = arith.constant 2 : index
    %c0_65 = arith.constant 0 : index
    %c0_66 = arith.constant 0 : index
    %47 = vector.load %arg4[%c2_64, %c0_65, %c0_66] : memref<3x16x32xf32, #tpu.memory_space<vmem>>, vector<1x16x32xf32>
    %48 = vector.shape_cast %47 : vector<1x16x32xf32> to vector<16x32xf32>
    %cst_67 = arith.constant dense<0.000000e+00> : vector<10x32xf32>
    %49 = tpu.matmul %40, %48, %cst_67 {dimension_numbers = #tpu.dot_dimension_numbers<[1], [0], [0], [1], [0, 0, 1, 1], [], []>} : vector<10x16xf32>, vector<16x32xf32>, vector<10x32xf32> -> vector<10x32xf32>
    %c0_68 = arith.constant 0 : index
    %50 = memref.load %arg6[%c0_68] : memref<192xf32, #tpu.memory_space<smem>>
    %51 = vector.broadcast %50 : f32 to vector<10x32xf32>
    %52 = arith.mulf %51, %10 : vector<10x32xf32>
    %c4 = arith.constant 4 : index
    %53 = memref.load %arg6[%c4] : memref<192xf32, #tpu.memory_space<smem>>
    %54 = vector.broadcast %53 : f32 to vector<10x32xf32>
    %55 = arith.mulf %54, %21 : vector<10x32xf32>
    %56 = arith.addf %52, %55 : vector<10x32xf32>
    %c8_69 = arith.constant 8 : index
    %57 = memref.load %arg6[%c8_69] : memref<192xf32, #tpu.memory_space<smem>>
    %58 = vector.broadcast %57 : f32 to vector<10x32xf32>
    %59 = arith.mulf %58, %32 : vector<10x32xf32>
    %60 = arith.addf %56, %59 : vector<10x32xf32>
    %c12 = arith.constant 12 : index
    %61 = memref.load %arg6[%c12] : memref<192xf32, #tpu.memory_space<smem>>
    %62 = vector.broadcast %61 : f32 to vector<10x32xf32>
    %63 = arith.mulf %62, %43 : vector<10x32xf32>
    %64 = arith.addf %60, %63 : vector<10x32xf32>
    %c16 = arith.constant 16 : index
    %65 = memref.load %arg6[%c16] : memref<192xf32, #tpu.memory_space<smem>>
    %66 = vector.broadcast %65 : f32 to vector<10x32xf32>
    %67 = arith.mulf %66, %13 : vector<10x32xf32>
    %68 = arith.addf %64, %67 : vector<10x32xf32>
    %c20 = arith.constant 20 : index
    %69 = memref.load %arg6[%c20] : memref<192xf32, #tpu.memory_space<smem>>
    %70 = vector.broadcast %69 : f32 to vector<10x32xf32>
    %71 = arith.mulf %70, %24 : vector<10x32xf32>
    %72 = arith.addf %68, %71 : vector<10x32xf32>
    %c24 = arith.constant 24 : index
    %73 = memref.load %arg6[%c24] : memref<192xf32, #tpu.memory_space<smem>>
    %74 = vector.broadcast %73 : f32 to vector<10x32xf32>
    %75 = arith.mulf %74, %35 : vector<10x32xf32>
    %76 = arith.addf %72, %75 : vector<10x32xf32>
    %c28 = arith.constant 28 : index
    %77 = memref.load %arg6[%c28] : memref<192xf32, #tpu.memory_space<smem>>
    %78 = vector.broadcast %77 : f32 to vector<10x32xf32>
    %79 = arith.mulf %78, %46 : vector<10x32xf32>
    %80 = arith.addf %76, %79 : vector<10x32xf32>
    %c32 = arith.constant 32 : index
    %81 = memref.load %arg6[%c32] : memref<192xf32, #tpu.memory_space<smem>>
    %82 = vector.broadcast %81 : f32 to vector<10x32xf32>
    %83 = arith.mulf %82, %16 : vector<10x32xf32>
    %84 = arith.addf %80, %83 : vector<10x32xf32>
    %c36 = arith.constant 36 : index
    %85 = memref.load %arg6[%c36] : memref<192xf32, #tpu.memory_space<smem>>
    %86 = vector.broadcast %85 : f32 to vector<10x32xf32>
    %87 = arith.mulf %86, %27 : vector<10x32xf32>
    %88 = arith.addf %84, %87 : vector<10x32xf32>
    %c40 = arith.constant 40 : index
    %89 = memref.load %arg6[%c40] : memref<192xf32, #tpu.memory_space<smem>>
    %90 = vector.broadcast %89 : f32 to vector<10x32xf32>
    %91 = arith.mulf %90, %38 : vector<10x32xf32>
    %92 = arith.addf %88, %91 : vector<10x32xf32>
    %c44 = arith.constant 44 : index
    %93 = memref.load %arg6[%c44] : memref<192xf32, #tpu.memory_space<smem>>
    %94 = vector.broadcast %93 : f32 to vector<10x32xf32>
    %95 = arith.mulf %94, %49 : vector<10x32xf32>
    %96 = arith.addf %92, %95 : vector<10x32xf32>
    %c0_70 = arith.constant 0 : index
    %c0_71 = arith.constant 0 : index
    %c0_72 = arith.constant 0 : index
    %97 = vector.load %arg5[%c0_70, %c0_71, %c0_72] : memref<4x16x10xf32, #tpu.memory_space<vmem>>, vector<1x16x10xf32>
    %98 = vector.shape_cast %97 : vector<1x16x10xf32> to vector<16x10xf32>
    %cst_73 = arith.constant dense<0.000000e+00> : vector<16x32xf32>
    %99 = tpu.matmul %98, %96, %cst_73 {dimension_numbers = #tpu.dot_dimension_numbers<[1], [0], [0], [1], [0, 0, 1, 1], [], []>} : vector<16x10xf32>, vector<10x32xf32>, vector<16x32xf32> -> vector<16x32xf32>
    %c48 = arith.constant 48 : index
    %100 = memref.load %arg6[%c48] : memref<192xf32, #tpu.memory_space<smem>>
    %101 = vector.broadcast %100 : f32 to vector<10x32xf32>
    %102 = arith.mulf %101, %10 : vector<10x32xf32>
    %c52 = arith.constant 52 : index
    %103 = memref.load %arg6[%c52] : memref<192xf32, #tpu.memory_space<smem>>
    %104 = vector.broadcast %103 : f32 to vector<10x32xf32>
    %105 = arith.mulf %104, %21 : vector<10x32xf32>
    %106 = arith.addf %102, %105 : vector<10x32xf32>
    %c56 = arith.constant 56 : index
    %107 = memref.load %arg6[%c56] : memref<192xf32, #tpu.memory_space<smem>>
    %108 = vector.broadcast %107 : f32 to vector<10x32xf32>
    %109 = arith.mulf %108, %32 : vector<10x32xf32>
    %110 = arith.addf %106, %109 : vector<10x32xf32>
    %c60 = arith.constant 60 : index
    %111 = memref.load %arg6[%c60] : memref<192xf32, #tpu.memory_space<smem>>
    %112 = vector.broadcast %111 : f32 to vector<10x32xf32>
    %113 = arith.mulf %112, %43 : vector<10x32xf32>
    %114 = arith.addf %110, %113 : vector<10x32xf32>
    %c64 = arith.constant 64 : index
    %115 = memref.load %arg6[%c64] : memref<192xf32, #tpu.memory_space<smem>>
    %116 = vector.broadcast %115 : f32 to vector<10x32xf32>
    %117 = arith.mulf %116, %13 : vector<10x32xf32>
    %118 = arith.addf %114, %117 : vector<10x32xf32>
    %c68 = arith.constant 68 : index
    %119 = memref.load %arg6[%c68] : memref<192xf32, #tpu.memory_space<smem>>
    %120 = vector.broadcast %119 : f32 to vector<10x32xf32>
    %121 = arith.mulf %120, %24 : vector<10x32xf32>
    %122 = arith.addf %118, %121 : vector<10x32xf32>
    %c72 = arith.constant 72 : index
    %123 = memref.load %arg6[%c72] : memref<192xf32, #tpu.memory_space<smem>>
    %124 = vector.broadcast %123 : f32 to vector<10x32xf32>
    %125 = arith.mulf %124, %35 : vector<10x32xf32>
    %126 = arith.addf %122, %125 : vector<10x32xf32>
    %c76 = arith.constant 76 : index
    %127 = memref.load %arg6[%c76] : memref<192xf32, #tpu.memory_space<smem>>
    %128 = vector.broadcast %127 : f32 to vector<10x32xf32>
    %129 = arith.mulf %128, %46 : vector<10x32xf32>
    %130 = arith.addf %126, %129 : vector<10x32xf32>
    %c80 = arith.constant 80 : index
    %131 = memref.load %arg6[%c80] : memref<192xf32, #tpu.memory_space<smem>>
    %132 = vector.broadcast %131 : f32 to vector<10x32xf32>
    %133 = arith.mulf %132, %16 : vector<10x32xf32>
    %134 = arith.addf %130, %133 : vector<10x32xf32>
    %c84 = arith.constant 84 : index
    %135 = memref.load %arg6[%c84] : memref<192xf32, #tpu.memory_space<smem>>
    %136 = vector.broadcast %135 : f32 to vector<10x32xf32>
    %137 = arith.mulf %136, %27 : vector<10x32xf32>
    %138 = arith.addf %134, %137 : vector<10x32xf32>
    %c88 = arith.constant 88 : index
    %139 = memref.load %arg6[%c88] : memref<192xf32, #tpu.memory_space<smem>>
    %140 = vector.broadcast %139 : f32 to vector<10x32xf32>
    %141 = arith.mulf %140, %38 : vector<10x32xf32>
    %142 = arith.addf %138, %141 : vector<10x32xf32>
    %c92 = arith.constant 92 : index
    %143 = memref.load %arg6[%c92] : memref<192xf32, #tpu.memory_space<smem>>
    %144 = vector.broadcast %143 : f32 to vector<10x32xf32>
    %145 = arith.mulf %144, %49 : vector<10x32xf32>
    %146 = arith.addf %142, %145 : vector<10x32xf32>
    %c1_74 = arith.constant 1 : index
    %c0_75 = arith.constant 0 : index
    %c0_76 = arith.constant 0 : index
    %147 = vector.load %arg5[%c1_74, %c0_75, %c0_76] : memref<4x16x10xf32, #tpu.memory_space<vmem>>, vector<1x16x10xf32>
    %148 = vector.shape_cast %147 : vector<1x16x10xf32> to vector<16x10xf32>
    %cst_77 = arith.constant dense<0.000000e+00> : vector<16x32xf32>
    %149 = tpu.matmul %148, %146, %cst_77 {dimension_numbers = #tpu.dot_dimension_numbers<[1], [0], [0], [1], [0, 0, 1, 1], [], []>} : vector<16x10xf32>, vector<10x32xf32>, vector<16x32xf32> -> vector<16x32xf32>
    %150 = arith.addf %99, %149 : vector<16x32xf32>
    %c96 = arith.constant 96 : index
    %151 = memref.load %arg6[%c96] : memref<192xf32, #tpu.memory_space<smem>>
    %152 = vector.broadcast %151 : f32 to vector<10x32xf32>
    %153 = arith.mulf %152, %10 : vector<10x32xf32>
    %c100 = arith.constant 100 : index
    %154 = memref.load %arg6[%c100] : memref<192xf32, #tpu.memory_space<smem>>
    %155 = vector.broadcast %154 : f32 to vector<10x32xf32>
    %156 = arith.mulf %155, %21 : vector<10x32xf32>
    %157 = arith.addf %153, %156 : vector<10x32xf32>
    %c104 = arith.constant 104 : index
    %158 = memref.load %arg6[%c104] : memref<192xf32, #tpu.memory_space<smem>>
    %159 = vector.broadcast %158 : f32 to vector<10x32xf32>
    %160 = arith.mulf %159, %32 : vector<10x32xf32>
    %161 = arith.addf %157, %160 : vector<10x32xf32>
    %c108 = arith.constant 108 : index
    %162 = memref.load %arg6[%c108] : memref<192xf32, #tpu.memory_space<smem>>
    %163 = vector.broadcast %162 : f32 to vector<10x32xf32>
    %164 = arith.mulf %163, %43 : vector<10x32xf32>
    %165 = arith.addf %161, %164 : vector<10x32xf32>
    %c112 = arith.constant 112 : index
    %166 = memref.load %arg6[%c112] : memref<192xf32, #tpu.memory_space<smem>>
    %167 = vector.broadcast %166 : f32 to vector<10x32xf32>
    %168 = arith.mulf %167, %13 : vector<10x32xf32>
    %169 = arith.addf %165, %168 : vector<10x32xf32>
    %c116 = arith.constant 116 : index
    %170 = memref.load %arg6[%c116] : memref<192xf32, #tpu.memory_space<smem>>
    %171 = vector.broadcast %170 : f32 to vector<10x32xf32>
    %172 = arith.mulf %171, %24 : vector<10x32xf32>
    %173 = arith.addf %169, %172 : vector<10x32xf32>
    %c120 = arith.constant 120 : index
    %174 = memref.load %arg6[%c120] : memref<192xf32, #tpu.memory_space<smem>>
    %175 = vector.broadcast %174 : f32 to vector<10x32xf32>
    %176 = arith.mulf %175, %35 : vector<10x32xf32>
    %177 = arith.addf %173, %176 : vector<10x32xf32>
    %c124 = arith.constant 124 : index
    %178 = memref.load %arg6[%c124] : memref<192xf32, #tpu.memory_space<smem>>
    %179 = vector.broadcast %178 : f32 to vector<10x32xf32>
    %180 = arith.mulf %179, %46 : vector<10x32xf32>
    %181 = arith.addf %177, %180 : vector<10x32xf32>
    %c128 = arith.constant 128 : index
    %182 = memref.load %arg6[%c128] : memref<192xf32, #tpu.memory_space<smem>>
    %183 = vector.broadcast %182 : f32 to vector<10x32xf32>
    %184 = arith.mulf %183, %16 : vector<10x32xf32>
    %185 = arith.addf %181, %184 : vector<10x32xf32>
    %c132 = arith.constant 132 : index
    %186 = memref.load %arg6[%c132] : memref<192xf32, #tpu.memory_space<smem>>
    %187 = vector.broadcast %186 : f32 to vector<10x32xf32>
    %188 = arith.mulf %187, %27 : vector<10x32xf32>
    %189 = arith.addf %185, %188 : vector<10x32xf32>
    %c136 = arith.constant 136 : index
    %190 = memref.load %arg6[%c136] : memref<192xf32, #tpu.memory_space<smem>>
    %191 = vector.broadcast %190 : f32 to vector<10x32xf32>
    %192 = arith.mulf %191, %38 : vector<10x32xf32>
    %193 = arith.addf %189, %192 : vector<10x32xf32>
    %c140 = arith.constant 140 : index
    %194 = memref.load %arg6[%c140] : memref<192xf32, #tpu.memory_space<smem>>
    %195 = vector.broadcast %194 : f32 to vector<10x32xf32>
    %196 = arith.mulf %195, %49 : vector<10x32xf32>
    %197 = arith.addf %193, %196 : vector<10x32xf32>
    %c2_78 = arith.constant 2 : index
    %c0_79 = arith.constant 0 : index
    %c0_80 = arith.constant 0 : index
    %198 = vector.load %arg5[%c2_78, %c0_79, %c0_80] : memref<4x16x10xf32, #tpu.memory_space<vmem>>, vector<1x16x10xf32>
    %199 = vector.shape_cast %198 : vector<1x16x10xf32> to vector<16x10xf32>
    %cst_81 = arith.constant dense<0.000000e+00> : vector<16x32xf32>
    %200 = tpu.matmul %199, %197, %cst_81 {dimension_numbers = #tpu.dot_dimension_numbers<[1], [0], [0], [1], [0, 0, 1, 1], [], []>} : vector<16x10xf32>, vector<10x32xf32>, vector<16x32xf32> -> vector<16x32xf32>
    %201 = arith.addf %150, %200 : vector<16x32xf32>
    %c144 = arith.constant 144 : index
    %202 = memref.load %arg6[%c144] : memref<192xf32, #tpu.memory_space<smem>>
    %203 = vector.broadcast %202 : f32 to vector<10x32xf32>
    %204 = arith.mulf %203, %10 : vector<10x32xf32>
    %c148 = arith.constant 148 : index
    %205 = memref.load %arg6[%c148] : memref<192xf32, #tpu.memory_space<smem>>
    %206 = vector.broadcast %205 : f32 to vector<10x32xf32>
    %207 = arith.mulf %206, %21 : vector<10x32xf32>
    %208 = arith.addf %204, %207 : vector<10x32xf32>
    %c152 = arith.constant 152 : index
    %209 = memref.load %arg6[%c152] : memref<192xf32, #tpu.memory_space<smem>>
    %210 = vector.broadcast %209 : f32 to vector<10x32xf32>
    %211 = arith.mulf %210, %32 : vector<10x32xf32>
    %212 = arith.addf %208, %211 : vector<10x32xf32>
    %c156 = arith.constant 156 : index
    %213 = memref.load %arg6[%c156] : memref<192xf32, #tpu.memory_space<smem>>
    %214 = vector.broadcast %213 : f32 to vector<10x32xf32>
    %215 = arith.mulf %214, %43 : vector<10x32xf32>
    %216 = arith.addf %212, %215 : vector<10x32xf32>
    %c160 = arith.constant 160 : index
    %217 = memref.load %arg6[%c160] : memref<192xf32, #tpu.memory_space<smem>>
    %218 = vector.broadcast %217 : f32 to vector<10x32xf32>
    %219 = arith.mulf %218, %13 : vector<10x32xf32>
    %220 = arith.addf %216, %219 : vector<10x32xf32>
    %c164 = arith.constant 164 : index
    %221 = memref.load %arg6[%c164] : memref<192xf32, #tpu.memory_space<smem>>
    %222 = vector.broadcast %221 : f32 to vector<10x32xf32>
    %223 = arith.mulf %222, %24 : vector<10x32xf32>
    %224 = arith.addf %220, %223 : vector<10x32xf32>
    %c168 = arith.constant 168 : index
    %225 = memref.load %arg6[%c168] : memref<192xf32, #tpu.memory_space<smem>>
    %226 = vector.broadcast %225 : f32 to vector<10x32xf32>
    %227 = arith.mulf %226, %35 : vector<10x32xf32>
    %228 = arith.addf %224, %227 : vector<10x32xf32>
    %c172 = arith.constant 172 : index
    %229 = memref.load %arg6[%c172] : memref<192xf32, #tpu.memory_space<smem>>
    %230 = vector.broadcast %229 : f32 to vector<10x32xf32>
    %231 = arith.mulf %230, %46 : vector<10x32xf32>
    %232 = arith.addf %228, %231 : vector<10x32xf32>
    %c176 = arith.constant 176 : index
    %233 = memref.load %arg6[%c176] : memref<192xf32, #tpu.memory_space<smem>>
    %234 = vector.broadcast %233 : f32 to vector<10x32xf32>
    %235 = arith.mulf %234, %16 : vector<10x32xf32>
    %236 = arith.addf %232, %235 : vector<10x32xf32>
    %c180 = arith.constant 180 : index
    %237 = memref.load %arg6[%c180] : memref<192xf32, #tpu.memory_space<smem>>
    %238 = vector.broadcast %237 : f32 to vector<10x32xf32>
    %239 = arith.mulf %238, %27 : vector<10x32xf32>
    %240 = arith.addf %236, %239 : vector<10x32xf32>
    %c184 = arith.constant 184 : index
    %241 = memref.load %arg6[%c184] : memref<192xf32, #tpu.memory_space<smem>>
    %242 = vector.broadcast %241 : f32 to vector<10x32xf32>
    %243 = arith.mulf %242, %38 : vector<10x32xf32>
    %244 = arith.addf %240, %243 : vector<10x32xf32>
    %c188 = arith.constant 188 : index
    %245 = memref.load %arg6[%c188] : memref<192xf32, #tpu.memory_space<smem>>
    %246 = vector.broadcast %245 : f32 to vector<10x32xf32>
    %247 = arith.mulf %246, %49 : vector<10x32xf32>
    %248 = arith.addf %244, %247 : vector<10x32xf32>
    %c3_82 = arith.constant 3 : index
    %c0_83 = arith.constant 0 : index
    %c0_84 = arith.constant 0 : index
    %249 = vector.load %arg5[%c3_82, %c0_83, %c0_84] : memref<4x16x10xf32, #tpu.memory_space<vmem>>, vector<1x16x10xf32>
    %250 = vector.shape_cast %249 : vector<1x16x10xf32> to vector<16x10xf32>
    %cst_85 = arith.constant dense<0.000000e+00> : vector<16x32xf32>
    %251 = tpu.matmul %250, %248, %cst_85 {dimension_numbers = #tpu.dot_dimension_numbers<[1], [0], [0], [1], [0, 0, 1, 1], [], []>} : vector<16x10xf32>, vector<10x32xf32>, vector<16x32xf32> -> vector<16x32xf32>
    %252 = arith.addf %201, %251 : vector<16x32xf32>
    %c0_86 = arith.constant 0 : index
    %253 = memref.load %arg7[%c0_86] : memref<4xf32, #tpu.memory_space<smem>>
    %254 = vector.broadcast %253 : f32 to vector<16x32xf32>
    %255 = arith.addf %252, %254 : vector<16x32xf32>
    %c0_87 = arith.constant 0 : index
    %c0_88 = arith.constant 0 : index
    %c0_89 = arith.constant 0 : index
    %c0_90 = arith.constant 0 : index
    %256 = vector.load %arg8[%c0_87, %c0_88, %c0_89, %c0_90] : memref<1x4x16x32xf32, #tpu.memory_space<vmem>>, vector<1x1x16x32xf32>
    %257 = vector.shape_cast %256 : vector<1x1x16x32xf32> to vector<16x32xf32>
    %258 = vector.shape_cast %255 : vector<16x32xf32> to vector<1x1x16x32xf32>
    tpu.vector_store %arg8[%c0_87, %c0_88, %c0_89, %c0_90], %258 {strides = array<i32>} : memref<1x4x16x32xf32, #tpu.memory_space<vmem>>, vector<1x1x16x32xf32>,
    %c1_91 = arith.constant 1 : index
    %259 = memref.load %arg6[%c1_91] : memref<192xf32, #tpu.memory_space<smem>>
    %260 = vector.broadcast %259 : f32 to vector<10x32xf32>
    %261 = arith.mulf %260, %10 : vector<10x32xf32>
    %c5 = arith.constant 5 : index
    %262 = memref.load %arg6[%c5] : memref<192xf32, #tpu.memory_space<smem>>
    %263 = vector.broadcast %262 : f32 to vector<10x32xf32>
    %264 = arith.mulf %263, %21 : vector<10x32xf32>
    %265 = arith.addf %261, %264 : vector<10x32xf32>
    %c9 = arith.constant 9 : index
    %266 = memref.load %arg6[%c9] : memref<192xf32, #tpu.memory_space<smem>>
    %267 = vector.broadcast %266 : f32 to vector<10x32xf32>
    %268 = arith.mulf %267, %32 : vector<10x32xf32>
    %269 = arith.addf %265, %268 : vector<10x32xf32>
    %c13 = arith.constant 13 : index
    %270 = memref.load %arg6[%c13] : memref<192xf32, #tpu.memory_space<smem>>
    %271 = vector.broadcast %270 : f32 to vector<10x32xf32>
    %272 = arith.mulf %271, %43 : vector<10x32xf32>
    %273 = arith.addf %269, %272 : vector<10x32xf32>
    %c17 = arith.constant 17 : index
    %274 = memref.load %arg6[%c17] : memref<192xf32, #tpu.memory_space<smem>>
    %275 = vector.broadcast %274 : f32 to vector<10x32xf32>
    %276 = arith.mulf %275, %13 : vector<10x32xf32>
    %277 = arith.addf %273, %276 : vector<10x32xf32>
    %c21 = arith.constant 21 : index
    %278 = memref.load %arg6[%c21] : memref<192xf32, #tpu.memory_space<smem>>
    %279 = vector.broadcast %278 : f32 to vector<10x32xf32>
    %280 = arith.mulf %279, %24 : vector<10x32xf32>
    %281 = arith.addf %277, %280 : vector<10x32xf32>
    %c25 = arith.constant 25 : index
    %282 = memref.load %arg6[%c25] : memref<192xf32, #tpu.memory_space<smem>>
    %283 = vector.broadcast %282 : f32 to vector<10x32xf32>
    %284 = arith.mulf %283, %35 : vector<10x32xf32>
    %285 = arith.addf %281, %284 : vector<10x32xf32>
    %c29 = arith.constant 29 : index
    %286 = memref.load %arg6[%c29] : memref<192xf32, #tpu.memory_space<smem>>
    %287 = vector.broadcast %286 : f32 to vector<10x32xf32>
    %288 = arith.mulf %287, %46 : vector<10x32xf32>
    %289 = arith.addf %285, %288 : vector<10x32xf32>
    %c33 = arith.constant 33 : index
    %290 = memref.load %arg6[%c33] : memref<192xf32, #tpu.memory_space<smem>>
    %291 = vector.broadcast %290 : f32 to vector<10x32xf32>
    %292 = arith.mulf %291, %16 : vector<10x32xf32>
    %293 = arith.addf %289, %292 : vector<10x32xf32>
    %c37 = arith.constant 37 : index
    %294 = memref.load %arg6[%c37] : memref<192xf32, #tpu.memory_space<smem>>
    %295 = vector.broadcast %294 : f32 to vector<10x32xf32>
    %296 = arith.mulf %295, %27 : vector<10x32xf32>
    %297 = arith.addf %293, %296 : vector<10x32xf32>
    %c41 = arith.constant 41 : index
    %298 = memref.load %arg6[%c41] : memref<192xf32, #tpu.memory_space<smem>>
    %299 = vector.broadcast %298 : f32 to vector<10x32xf32>
    %300 = arith.mulf %299, %38 : vector<10x32xf32>
    %301 = arith.addf %297, %300 : vector<10x32xf32>
    %c45 = arith.constant 45 : index
    %302 = memref.load %arg6[%c45] : memref<192xf32, #tpu.memory_space<smem>>
    %303 = vector.broadcast %302 : f32 to vector<10x32xf32>
    %304 = arith.mulf %303, %49 : vector<10x32xf32>
    %305 = arith.addf %301, %304 : vector<10x32xf32>
    %c0_92 = arith.constant 0 : index
    %c0_93 = arith.constant 0 : index
    %c0_94 = arith.constant 0 : index
    %306 = vector.load %arg5[%c0_92, %c0_93, %c0_94] : memref<4x16x10xf32, #tpu.memory_space<vmem>>, vector<1x16x10xf32>
    %307 = vector.shape_cast %306 : vector<1x16x10xf32> to vector<16x10xf32>
    %cst_95 = arith.constant dense<0.000000e+00> : vector<16x32xf32>
    %308 = tpu.matmul %307, %305, %cst_95 {dimension_numbers = #tpu.dot_dimension_numbers<[1], [0], [0], [1], [0, 0, 1, 1], [], []>} : vector<16x10xf32>, vector<10x32xf32>, vector<16x32xf32> -> vector<16x32xf32>
    %c49 = arith.constant 49 : index
    %309 = memref.load %arg6[%c49] : memref<192xf32, #tpu.memory_space<smem>>
    %310 = vector.broadcast %309 : f32 to vector<10x32xf32>
    %311 = arith.mulf %310, %10 : vector<10x32xf32>
    %c53 = arith.constant 53 : index
    %312 = memref.load %arg6[%c53] : memref<192xf32, #tpu.memory_space<smem>>
    %313 = vector.broadcast %312 : f32 to vector<10x32xf32>
    %314 = arith.mulf %313, %21 : vector<10x32xf32>
    %315 = arith.addf %311, %314 : vector<10x32xf32>
    %c57 = arith.constant 57 : index
    %316 = memref.load %arg6[%c57] : memref<192xf32, #tpu.memory_space<smem>>
    %317 = vector.broadcast %316 : f32 to vector<10x32xf32>
    %318 = arith.mulf %317, %32 : vector<10x32xf32>
    %319 = arith.addf %315, %318 : vector<10x32xf32>
    %c61 = arith.constant 61 : index
    %320 = memref.load %arg6[%c61] : memref<192xf32, #tpu.memory_space<smem>>
    %321 = vector.broadcast %320 : f32 to vector<10x32xf32>
    %322 = arith.mulf %321, %43 : vector<10x32xf32>
    %323 = arith.addf %319, %322 : vector<10x32xf32>
    %c65 = arith.constant 65 : index
    %324 = memref.load %arg6[%c65] : memref<192xf32, #tpu.memory_space<smem>>
    %325 = vector.broadcast %324 : f32 to vector<10x32xf32>
    %326 = arith.mulf %325, %13 : vector<10x32xf32>
    %327 = arith.addf %323, %326 : vector<10x32xf32>
    %c69 = arith.constant 69 : index
    %328 = memref.load %arg6[%c69] : memref<192xf32, #tpu.memory_space<smem>>
    %329 = vector.broadcast %328 : f32 to vector<10x32xf32>
    %330 = arith.mulf %329, %24 : vector<10x32xf32>
    %331 = arith.addf %327, %330 : vector<10x32xf32>
    %c73 = arith.constant 73 : index
    %332 = memref.load %arg6[%c73] : memref<192xf32, #tpu.memory_space<smem>>
    %333 = vector.broadcast %332 : f32 to vector<10x32xf32>
    %334 = arith.mulf %333, %35 : vector<10x32xf32>
    %335 = arith.addf %331, %334 : vector<10x32xf32>
    %c77 = arith.constant 77 : index
    %336 = memref.load %arg6[%c77] : memref<192xf32, #tpu.memory_space<smem>>
    %337 = vector.broadcast %336 : f32 to vector<10x32xf32>
    %338 = arith.mulf %337, %46 : vector<10x32xf32>
    %339 = arith.addf %335, %338 : vector<10x32xf32>
    %c81 = arith.constant 81 : index
    %340 = memref.load %arg6[%c81] : memref<192xf32, #tpu.memory_space<smem>>
    %341 = vector.broadcast %340 : f32 to vector<10x32xf32>
    %342 = arith.mulf %341, %16 : vector<10x32xf32>
    %343 = arith.addf %339, %342 : vector<10x32xf32>
    %c85 = arith.constant 85 : index
    %344 = memref.load %arg6[%c85] : memref<192xf32, #tpu.memory_space<smem>>
    %345 = vector.broadcast %344 : f32 to vector<10x32xf32>
    %346 = arith.mulf %345, %27 : vector<10x32xf32>
    %347 = arith.addf %343, %346 : vector<10x32xf32>
    %c89 = arith.constant 89 : index
    %348 = memref.load %arg6[%c89] : memref<192xf32, #tpu.memory_space<smem>>
    %349 = vector.broadcast %348 : f32 to vector<10x32xf32>
    %350 = arith.mulf %349, %38 : vector<10x32xf32>
    %351 = arith.addf %347, %350 : vector<10x32xf32>
    %c93 = arith.constant 93 : index
    %352 = memref.load %arg6[%c93] : memref<192xf32, #tpu.memory_space<smem>>
    %353 = vector.broadcast %352 : f32 to vector<10x32xf32>
    %354 = arith.mulf %353, %49 : vector<10x32xf32>
    %355 = arith.addf %351, %354 : vector<10x32xf32>
    %c1_96 = arith.constant 1 : index
    %c0_97 = arith.constant 0 : index
    %c0_98 = arith.constant 0 : index
    %356 = vector.load %arg5[%c1_96, %c0_97, %c0_98] : memref<4x16x10xf32, #tpu.memory_space<vmem>>, vector<1x16x10xf32>
    %357 = vector.shape_cast %356 : vector<1x16x10xf32> to vector<16x10xf32>
    %cst_99 = arith.constant dense<0.000000e+00> : vector<16x32xf32>
    %358 = tpu.matmul %357, %355, %cst_99 {dimension_numbers = #tpu.dot_dimension_numbers<[1], [0], [0], [1], [0, 0, 1, 1], [], []>} : vector<16x10xf32>, vector<10x32xf32>, vector<16x32xf32> -> vector<16x32xf32>
    %359 = arith.addf %308, %358 : vector<16x32xf32>
    %c97 = arith.constant 97 : index
    %360 = memref.load %arg6[%c97] : memref<192xf32, #tpu.memory_space<smem>>
    %361 = vector.broadcast %360 : f32 to vector<10x32xf32>
    %362 = arith.mulf %361, %10 : vector<10x32xf32>
    %c101 = arith.constant 101 : index
    %363 = memref.load %arg6[%c101] : memref<192xf32, #tpu.memory_space<smem>>
    %364 = vector.broadcast %363 : f32 to vector<10x32xf32>
    %365 = arith.mulf %364, %21 : vector<10x32xf32>
    %366 = arith.addf %362, %365 : vector<10x32xf32>
    %c105 = arith.constant 105 : index
    %367 = memref.load %arg6[%c105] : memref<192xf32, #tpu.memory_space<smem>>
    %368 = vector.broadcast %367 : f32 to vector<10x32xf32>
    %369 = arith.mulf %368, %32 : vector<10x32xf32>
    %370 = arith.addf %366, %369 : vector<10x32xf32>
    %c109 = arith.constant 109 : index
    %371 = memref.load %arg6[%c109] : memref<192xf32, #tpu.memory_space<smem>>
    %372 = vector.broadcast %371 : f32 to vector<10x32xf32>
    %373 = arith.mulf %372, %43 : vector<10x32xf32>
    %374 = arith.addf %370, %373 : vector<10x32xf32>
    %c113 = arith.constant 113 : index
    %375 = memref.load %arg6[%c113] : memref<192xf32, #tpu.memory_space<smem>>
    %376 = vector.broadcast %375 : f32 to vector<10x32xf32>
    %377 = arith.mulf %376, %13 : vector<10x32xf32>
    %378 = arith.addf %374, %377 : vector<10x32xf32>
    %c117 = arith.constant 117 : index
    %379 = memref.load %arg6[%c117] : memref<192xf32, #tpu.memory_space<smem>>
    %380 = vector.broadcast %379 : f32 to vector<10x32xf32>
    %381 = arith.mulf %380, %24 : vector<10x32xf32>
    %382 = arith.addf %378, %381 : vector<10x32xf32>
    %c121 = arith.constant 121 : index
    %383 = memref.load %arg6[%c121] : memref<192xf32, #tpu.memory_space<smem>>
    %384 = vector.broadcast %383 : f32 to vector<10x32xf32>
    %385 = arith.mulf %384, %35 : vector<10x32xf32>
    %386 = arith.addf %382, %385 : vector<10x32xf32>
    %c125 = arith.constant 125 : index
    %387 = memref.load %arg6[%c125] : memref<192xf32, #tpu.memory_space<smem>>
    %388 = vector.broadcast %387 : f32 to vector<10x32xf32>
    %389 = arith.mulf %388, %46 : vector<10x32xf32>
    %390 = arith.addf %386, %389 : vector<10x32xf32>
    %c129 = arith.constant 129 : index
    %391 = memref.load %arg6[%c129] : memref<192xf32, #tpu.memory_space<smem>>
    %392 = vector.broadcast %391 : f32 to vector<10x32xf32>
    %393 = arith.mulf %392, %16 : vector<10x32xf32>
    %394 = arith.addf %390, %393 : vector<10x32xf32>
    %c133 = arith.constant 133 : index
    %395 = memref.load %arg6[%c133] : memref<192xf32, #tpu.memory_space<smem>>
    %396 = vector.broadcast %395 : f32 to vector<10x32xf32>
    %397 = arith.mulf %396, %27 : vector<10x32xf32>
    %398 = arith.addf %394, %397 : vector<10x32xf32>
    %c137 = arith.constant 137 : index
    %399 = memref.load %arg6[%c137] : memref<192xf32, #tpu.memory_space<smem>>
    %400 = vector.broadcast %399 : f32 to vector<10x32xf32>
    %401 = arith.mulf %400, %38 : vector<10x32xf32>
    %402 = arith.addf %398, %401 : vector<10x32xf32>
    %c141 = arith.constant 141 : index
    %403 = memref.load %arg6[%c141] : memref<192xf32, #tpu.memory_space<smem>>
    %404 = vector.broadcast %403 : f32 to vector<10x32xf32>
    %405 = arith.mulf %404, %49 : vector<10x32xf32>
    %406 = arith.addf %402, %405 : vector<10x32xf32>
    %c2_100 = arith.constant 2 : index
    %c0_101 = arith.constant 0 : index
    %c0_102 = arith.constant 0 : index
    %407 = vector.load %arg5[%c2_100, %c0_101, %c0_102] : memref<4x16x10xf32, #tpu.memory_space<vmem>>, vector<1x16x10xf32>
    %408 = vector.shape_cast %407 : vector<1x16x10xf32> to vector<16x10xf32>
    %cst_103 = arith.constant dense<0.000000e+00> : vector<16x32xf32>
    %409 = tpu.matmul %408, %406, %cst_103 {dimension_numbers = #tpu.dot_dimension_numbers<[1], [0], [0], [1], [0, 0, 1, 1], [], []>} : vector<16x10xf32>, vector<10x32xf32>, vector<16x32xf32> -> vector<16x32xf32>
    %410 = arith.addf %359, %409 : vector<16x32xf32>
    %c145 = arith.constant 145 : index
    %411 = memref.load %arg6[%c145] : memref<192xf32, #tpu.memory_space<smem>>
    %412 = vector.broadcast %411 : f32 to vector<10x32xf32>
    %413 = arith.mulf %412, %10 : vector<10x32xf32>
    %c149 = arith.constant 149 : index
    %414 = memref.load %arg6[%c149] : memref<192xf32, #tpu.memory_space<smem>>
    %415 = vector.broadcast %414 : f32 to vector<10x32xf32>
    %416 = arith.mulf %415, %21 : vector<10x32xf32>
    %417 = arith.addf %413, %416 : vector<10x32xf32>
    %c153 = arith.constant 153 : index
    %418 = memref.load %arg6[%c153] : memref<192xf32, #tpu.memory_space<smem>>
    %419 = vector.broadcast %418 : f32 to vector<10x32xf32>
    %420 = arith.mulf %419, %32 : vector<10x32xf32>
    %421 = arith.addf %417, %420 : vector<10x32xf32>
    %c157 = arith.constant 157 : index
    %422 = memref.load %arg6[%c157] : memref<192xf32, #tpu.memory_space<smem>>
    %423 = vector.broadcast %422 : f32 to vector<10x32xf32>
    %424 = arith.mulf %423, %43 : vector<10x32xf32>
    %425 = arith.addf %421, %424 : vector<10x32xf32>
    %c161 = arith.constant 161 : index
    %426 = memref.load %arg6[%c161] : memref<192xf32, #tpu.memory_space<smem>>
    %427 = vector.broadcast %426 : f32 to vector<10x32xf32>
    %428 = arith.mulf %427, %13 : vector<10x32xf32>
    %429 = arith.addf %425, %428 : vector<10x32xf32>
    %c165 = arith.constant 165 : index
    %430 = memref.load %arg6[%c165] : memref<192xf32, #tpu.memory_space<smem>>
    %431 = vector.broadcast %430 : f32 to vector<10x32xf32>
    %432 = arith.mulf %431, %24 : vector<10x32xf32>
    %433 = arith.addf %429, %432 : vector<10x32xf32>
    %c169 = arith.constant 169 : index
    %434 = memref.load %arg6[%c169] : memref<192xf32, #tpu.memory_space<smem>>
    %435 = vector.broadcast %434 : f32 to vector<10x32xf32>
    %436 = arith.mulf %435, %35 : vector<10x32xf32>
    %437 = arith.addf %433, %436 : vector<10x32xf32>
    %c173 = arith.constant 173 : index
    %438 = memref.load %arg6[%c173] : memref<192xf32, #tpu.memory_space<smem>>
    %439 = vector.broadcast %438 : f32 to vector<10x32xf32>
    %440 = arith.mulf %439, %46 : vector<10x32xf32>
    %441 = arith.addf %437, %440 : vector<10x32xf32>
    %c177 = arith.constant 177 : index
    %442 = memref.load %arg6[%c177] : memref<192xf32, #tpu.memory_space<smem>>
    %443 = vector.broadcast %442 : f32 to vector<10x32xf32>
    %444 = arith.mulf %443, %16 : vector<10x32xf32>
    %445 = arith.addf %441, %444 : vector<10x32xf32>
    %c181 = arith.constant 181 : index
    %446 = memref.load %arg6[%c181] : memref<192xf32, #tpu.memory_space<smem>>
    %447 = vector.broadcast %446 : f32 to vector<10x32xf32>
    %448 = arith.mulf %447, %27 : vector<10x32xf32>
    %449 = arith.addf %445, %448 : vector<10x32xf32>
    %c185 = arith.constant 185 : index
    %450 = memref.load %arg6[%c185] : memref<192xf32, #tpu.memory_space<smem>>
    %451 = vector.broadcast %450 : f32 to vector<10x32xf32>
    %452 = arith.mulf %451, %38 : vector<10x32xf32>
    %453 = arith.addf %449, %452 : vector<10x32xf32>
    %c189 = arith.constant 189 : index
    %454 = memref.load %arg6[%c189] : memref<192xf32, #tpu.memory_space<smem>>
    %455 = vector.broadcast %454 : f32 to vector<10x32xf32>
    %456 = arith.mulf %455, %49 : vector<10x32xf32>
    %457 = arith.addf %453, %456 : vector<10x32xf32>
    %c3_104 = arith.constant 3 : index
    %c0_105 = arith.constant 0 : index
    %c0_106 = arith.constant 0 : index
    %458 = vector.load %arg5[%c3_104, %c0_105, %c0_106] : memref<4x16x10xf32, #tpu.memory_space<vmem>>, vector<1x16x10xf32>
    %459 = vector.shape_cast %458 : vector<1x16x10xf32> to vector<16x10xf32>
    %cst_107 = arith.constant dense<0.000000e+00> : vector<16x32xf32>
    %460 = tpu.matmul %459, %457, %cst_107 {dimension_numbers = #tpu.dot_dimension_numbers<[1], [0], [0], [1], [0, 0, 1, 1], [], []>} : vector<16x10xf32>, vector<10x32xf32>, vector<16x32xf32> -> vector<16x32xf32>
    %461 = arith.addf %410, %460 : vector<16x32xf32>
    %c1_108 = arith.constant 1 : index
    %462 = memref.load %arg7[%c1_108] : memref<4xf32, #tpu.memory_space<smem>>
    %463 = vector.broadcast %462 : f32 to vector<16x32xf32>
    %464 = arith.addf %461, %463 : vector<16x32xf32>
    %c0_109 = arith.constant 0 : index
    %c1_110 = arith.constant 1 : index
    %c0_111 = arith.constant 0 : index
    %c0_112 = arith.constant 0 : index
    %465 = vector.load %arg8[%c0_109, %c1_110, %c0_111, %c0_112] : memref<1x4x16x32xf32, #tpu.memory_space<vmem>>, vector<1x1x16x32xf32>
    %466 = vector.shape_cast %465 : vector<1x1x16x32xf32> to vector<16x32xf32>
    %467 = vector.shape_cast %464 : vector<16x32xf32> to vector<1x1x16x32xf32>
    tpu.vector_store %arg8[%c0_109, %c1_110, %c0_111, %c0_112], %467 {strides = array<i32>} : memref<1x4x16x32xf32, #tpu.memory_space<vmem>>, vector<1x1x16x32xf32>,
    %c2_113 = arith.constant 2 : index
    %468 = memref.load %arg6[%c2_113] : memref<192xf32, #tpu.memory_space<smem>>
    %469 = vector.broadcast %468 : f32 to vector<10x32xf32>
    %470 = arith.mulf %469, %10 : vector<10x32xf32>
    %c6 = arith.constant 6 : index
    %471 = memref.load %arg6[%c6] : memref<192xf32, #tpu.memory_space<smem>>
    %472 = vector.broadcast %471 : f32 to vector<10x32xf32>
    %473 = arith.mulf %472, %21 : vector<10x32xf32>
    %474 = arith.addf %470, %473 : vector<10x32xf32>
    %c10 = arith.constant 10 : index
    %475 = memref.load %arg6[%c10] : memref<192xf32, #tpu.memory_space<smem>>
    %476 = vector.broadcast %475 : f32 to vector<10x32xf32>
    %477 = arith.mulf %476, %32 : vector<10x32xf32>
    %478 = arith.addf %474, %477 : vector<10x32xf32>
    %c14 = arith.constant 14 : index
    %479 = memref.load %arg6[%c14] : memref<192xf32, #tpu.memory_space<smem>>
    %480 = vector.broadcast %479 : f32 to vector<10x32xf32>
    %481 = arith.mulf %480, %43 : vector<10x32xf32>
    %482 = arith.addf %478, %481 : vector<10x32xf32>
    %c18 = arith.constant 18 : index
    %483 = memref.load %arg6[%c18] : memref<192xf32, #tpu.memory_space<smem>>
    %484 = vector.broadcast %483 : f32 to vector<10x32xf32>
    %485 = arith.mulf %484, %13 : vector<10x32xf32>
    %486 = arith.addf %482, %485 : vector<10x32xf32>
    %c22 = arith.constant 22 : index
    %487 = memref.load %arg6[%c22] : memref<192xf32, #tpu.memory_space<smem>>
    %488 = vector.broadcast %487 : f32 to vector<10x32xf32>
    %489 = arith.mulf %488, %24 : vector<10x32xf32>
    %490 = arith.addf %486, %489 : vector<10x32xf32>
    %c26 = arith.constant 26 : index
    %491 = memref.load %arg6[%c26] : memref<192xf32, #tpu.memory_space<smem>>
    %492 = vector.broadcast %491 : f32 to vector<10x32xf32>
    %493 = arith.mulf %492, %35 : vector<10x32xf32>
    %494 = arith.addf %490, %493 : vector<10x32xf32>
    %c30 = arith.constant 30 : index
    %495 = memref.load %arg6[%c30] : memref<192xf32, #tpu.memory_space<smem>>
    %496 = vector.broadcast %495 : f32 to vector<10x32xf32>
    %497 = arith.mulf %496, %46 : vector<10x32xf32>
    %498 = arith.addf %494, %497 : vector<10x32xf32>
    %c34 = arith.constant 34 : index
    %499 = memref.load %arg6[%c34] : memref<192xf32, #tpu.memory_space<smem>>
    %500 = vector.broadcast %499 : f32 to vector<10x32xf32>
    %501 = arith.mulf %500, %16 : vector<10x32xf32>
    %502 = arith.addf %498, %501 : vector<10x32xf32>
    %c38 = arith.constant 38 : index
    %503 = memref.load %arg6[%c38] : memref<192xf32, #tpu.memory_space<smem>>
    %504 = vector.broadcast %503 : f32 to vector<10x32xf32>
    %505 = arith.mulf %504, %27 : vector<10x32xf32>
    %506 = arith.addf %502, %505 : vector<10x32xf32>
    %c42 = arith.constant 42 : index
    %507 = memref.load %arg6[%c42] : memref<192xf32, #tpu.memory_space<smem>>
    %508 = vector.broadcast %507 : f32 to vector<10x32xf32>
    %509 = arith.mulf %508, %38 : vector<10x32xf32>
    %510 = arith.addf %506, %509 : vector<10x32xf32>
    %c46 = arith.constant 46 : index
    %511 = memref.load %arg6[%c46] : memref<192xf32, #tpu.memory_space<smem>>
    %512 = vector.broadcast %511 : f32 to vector<10x32xf32>
    %513 = arith.mulf %512, %49 : vector<10x32xf32>
    %514 = arith.addf %510, %513 : vector<10x32xf32>
    %c0_114 = arith.constant 0 : index
    %c0_115 = arith.constant 0 : index
    %c0_116 = arith.constant 0 : index
    %515 = vector.load %arg5[%c0_114, %c0_115, %c0_116] : memref<4x16x10xf32, #tpu.memory_space<vmem>>, vector<1x16x10xf32>
    %516 = vector.shape_cast %515 : vector<1x16x10xf32> to vector<16x10xf32>
    %cst_117 = arith.constant dense<0.000000e+00> : vector<16x32xf32>
    %517 = tpu.matmul %516, %514, %cst_117 {dimension_numbers = #tpu.dot_dimension_numbers<[1], [0], [0], [1], [0, 0, 1, 1], [], []>} : vector<16x10xf32>, vector<10x32xf32>, vector<16x32xf32> -> vector<16x32xf32>
    %c50 = arith.constant 50 : index
    %518 = memref.load %arg6[%c50] : memref<192xf32, #tpu.memory_space<smem>>
    %519 = vector.broadcast %518 : f32 to vector<10x32xf32>
    %520 = arith.mulf %519, %10 : vector<10x32xf32>
    %c54 = arith.constant 54 : index
    %521 = memref.load %arg6[%c54] : memref<192xf32, #tpu.memory_space<smem>>
    %522 = vector.broadcast %521 : f32 to vector<10x32xf32>
    %523 = arith.mulf %522, %21 : vector<10x32xf32>
    %524 = arith.addf %520, %523 : vector<10x32xf32>
    %c58 = arith.constant 58 : index
    %525 = memref.load %arg6[%c58] : memref<192xf32, #tpu.memory_space<smem>>
    %526 = vector.broadcast %525 : f32 to vector<10x32xf32>
    %527 = arith.mulf %526, %32 : vector<10x32xf32>
    %528 = arith.addf %524, %527 : vector<10x32xf32>
    %c62 = arith.constant 62 : index
    %529 = memref.load %arg6[%c62] : memref<192xf32, #tpu.memory_space<smem>>
    %530 = vector.broadcast %529 : f32 to vector<10x32xf32>
    %531 = arith.mulf %530, %43 : vector<10x32xf32>
    %532 = arith.addf %528, %531 : vector<10x32xf32>
    %c66 = arith.constant 66 : index
    %533 = memref.load %arg6[%c66] : memref<192xf32, #tpu.memory_space<smem>>
    %534 = vector.broadcast %533 : f32 to vector<10x32xf32>
    %535 = arith.mulf %534, %13 : vector<10x32xf32>
    %536 = arith.addf %532, %535 : vector<10x32xf32>
    %c70 = arith.constant 70 : index
    %537 = memref.load %arg6[%c70] : memref<192xf32, #tpu.memory_space<smem>>
    %538 = vector.broadcast %537 : f32 to vector<10x32xf32>
    %539 = arith.mulf %538, %24 : vector<10x32xf32>
    %540 = arith.addf %536, %539 : vector<10x32xf32>
    %c74 = arith.constant 74 : index
    %541 = memref.load %arg6[%c74] : memref<192xf32, #tpu.memory_space<smem>>
    %542 = vector.broadcast %541 : f32 to vector<10x32xf32>
    %543 = arith.mulf %542, %35 : vector<10x32xf32>
    %544 = arith.addf %540, %543 : vector<10x32xf32>
    %c78 = arith.constant 78 : index
    %545 = memref.load %arg6[%c78] : memref<192xf32, #tpu.memory_space<smem>>
    %546 = vector.broadcast %545 : f32 to vector<10x32xf32>
    %547 = arith.mulf %546, %46 : vector<10x32xf32>
    %548 = arith.addf %544, %547 : vector<10x32xf32>
    %c82 = arith.constant 82 : index
    %549 = memref.load %arg6[%c82] : memref<192xf32, #tpu.memory_space<smem>>
    %550 = vector.broadcast %549 : f32 to vector<10x32xf32>
    %551 = arith.mulf %550, %16 : vector<10x32xf32>
    %552 = arith.addf %548, %551 : vector<10x32xf32>
    %c86 = arith.constant 86 : index
    %553 = memref.load %arg6[%c86] : memref<192xf32, #tpu.memory_space<smem>>
    %554 = vector.broadcast %553 : f32 to vector<10x32xf32>
    %555 = arith.mulf %554, %27 : vector<10x32xf32>
    %556 = arith.addf %552, %555 : vector<10x32xf32>
    %c90 = arith.constant 90 : index
    %557 = memref.load %arg6[%c90] : memref<192xf32, #tpu.memory_space<smem>>
    %558 = vector.broadcast %557 : f32 to vector<10x32xf32>
    %559 = arith.mulf %558, %38 : vector<10x32xf32>
    %560 = arith.addf %556, %559 : vector<10x32xf32>
    %c94 = arith.constant 94 : index
    %561 = memref.load %arg6[%c94] : memref<192xf32, #tpu.memory_space<smem>>
    %562 = vector.broadcast %561 : f32 to vector<10x32xf32>
    %563 = arith.mulf %562, %49 : vector<10x32xf32>
    %564 = arith.addf %560, %563 : vector<10x32xf32>
    %c1_118 = arith.constant 1 : index
    %c0_119 = arith.constant 0 : index
    %c0_120 = arith.constant 0 : index
    %565 = vector.load %arg5[%c1_118, %c0_119, %c0_120] : memref<4x16x10xf32, #tpu.memory_space<vmem>>, vector<1x16x10xf32>
    %566 = vector.shape_cast %565 : vector<1x16x10xf32> to vector<16x10xf32>
    %cst_121 = arith.constant dense<0.000000e+00> : vector<16x32xf32>
    %567 = tpu.matmul %566, %564, %cst_121 {dimension_numbers = #tpu.dot_dimension_numbers<[1], [0], [0], [1], [0, 0, 1, 1], [], []>} : vector<16x10xf32>, vector<10x32xf32>, vector<16x32xf32> -> vector<16x32xf32>
    %568 = arith.addf %517, %567 : vector<16x32xf32>
    %c98 = arith.constant 98 : index
    %569 = memref.load %arg6[%c98] : memref<192xf32, #tpu.memory_space<smem>>
    %570 = vector.broadcast %569 : f32 to vector<10x32xf32>
    %571 = arith.mulf %570, %10 : vector<10x32xf32>
    %c102 = arith.constant 102 : index
    %572 = memref.load %arg6[%c102] : memref<192xf32, #tpu.memory_space<smem>>
    %573 = vector.broadcast %572 : f32 to vector<10x32xf32>
    %574 = arith.mulf %573, %21 : vector<10x32xf32>
    %575 = arith.addf %571, %574 : vector<10x32xf32>
    %c106 = arith.constant 106 : index
    %576 = memref.load %arg6[%c106] : memref<192xf32, #tpu.memory_space<smem>>
    %577 = vector.broadcast %576 : f32 to vector<10x32xf32>
    %578 = arith.mulf %577, %32 : vector<10x32xf32>
    %579 = arith.addf %575, %578 : vector<10x32xf32>
    %c110 = arith.constant 110 : index
    %580 = memref.load %arg6[%c110] : memref<192xf32, #tpu.memory_space<smem>>
    %581 = vector.broadcast %580 : f32 to vector<10x32xf32>
    %582 = arith.mulf %581, %43 : vector<10x32xf32>
    %583 = arith.addf %579, %582 : vector<10x32xf32>
    %c114 = arith.constant 114 : index
    %584 = memref.load %arg6[%c114] : memref<192xf32, #tpu.memory_space<smem>>
    %585 = vector.broadcast %584 : f32 to vector<10x32xf32>
    %586 = arith.mulf %585, %13 : vector<10x32xf32>
    %587 = arith.addf %583, %586 : vector<10x32xf32>
    %c118 = arith.constant 118 : index
    %588 = memref.load %arg6[%c118] : memref<192xf32, #tpu.memory_space<smem>>
    %589 = vector.broadcast %588 : f32 to vector<10x32xf32>
    %590 = arith.mulf %589, %24 : vector<10x32xf32>
    %591 = arith.addf %587, %590 : vector<10x32xf32>
    %c122 = arith.constant 122 : index
    %592 = memref.load %arg6[%c122] : memref<192xf32, #tpu.memory_space<smem>>
    %593 = vector.broadcast %592 : f32 to vector<10x32xf32>
    %594 = arith.mulf %593, %35 : vector<10x32xf32>
    %595 = arith.addf %591, %594 : vector<10x32xf32>
    %c126 = arith.constant 126 : index
    %596 = memref.load %arg6[%c126] : memref<192xf32, #tpu.memory_space<smem>>
    %597 = vector.broadcast %596 : f32 to vector<10x32xf32>
    %598 = arith.mulf %597, %46 : vector<10x32xf32>
    %599 = arith.addf %595, %598 : vector<10x32xf32>
    %c130 = arith.constant 130 : index
    %600 = memref.load %arg6[%c130] : memref<192xf32, #tpu.memory_space<smem>>
    %601 = vector.broadcast %600 : f32 to vector<10x32xf32>
    %602 = arith.mulf %601, %16 : vector<10x32xf32>
    %603 = arith.addf %599, %602 : vector<10x32xf32>
    %c134 = arith.constant 134 : index
    %604 = memref.load %arg6[%c134] : memref<192xf32, #tpu.memory_space<smem>>
    %605 = vector.broadcast %604 : f32 to vector<10x32xf32>
    %606 = arith.mulf %605, %27 : vector<10x32xf32>
    %607 = arith.addf %603, %606 : vector<10x32xf32>
    %c138 = arith.constant 138 : index
    %608 = memref.load %arg6[%c138] : memref<192xf32, #tpu.memory_space<smem>>
    %609 = vector.broadcast %608 : f32 to vector<10x32xf32>
    %610 = arith.mulf %609, %38 : vector<10x32xf32>
    %611 = arith.addf %607, %610 : vector<10x32xf32>
    %c142 = arith.constant 142 : index
    %612 = memref.load %arg6[%c142] : memref<192xf32, #tpu.memory_space<smem>>
    %613 = vector.broadcast %612 : f32 to vector<10x32xf32>
    %614 = arith.mulf %613, %49 : vector<10x32xf32>
    %615 = arith.addf %611, %614 : vector<10x32xf32>
    %c2_122 = arith.constant 2 : index
    %c0_123 = arith.constant 0 : index
    %c0_124 = arith.constant 0 : index
    %616 = vector.load %arg5[%c2_122, %c0_123, %c0_124] : memref<4x16x10xf32, #tpu.memory_space<vmem>>, vector<1x16x10xf32>
    %617 = vector.shape_cast %616 : vector<1x16x10xf32> to vector<16x10xf32>
    %cst_125 = arith.constant dense<0.000000e+00> : vector<16x32xf32>
    %618 = tpu.matmul %617, %615, %cst_125 {dimension_numbers = #tpu.dot_dimension_numbers<[1], [0], [0], [1], [0, 0, 1, 1], [], []>} : vector<16x10xf32>, vector<10x32xf32>, vector<16x32xf32> -> vector<16x32xf32>
    %619 = arith.addf %568, %618 : vector<16x32xf32>
    %c146 = arith.constant 146 : index
    %620 = memref.load %arg6[%c146] : memref<192xf32, #tpu.memory_space<smem>>
    %621 = vector.broadcast %620 : f32 to vector<10x32xf32>
    %622 = arith.mulf %621, %10 : vector<10x32xf32>
    %c150 = arith.constant 150 : index
    %623 = memref.load %arg6[%c150] : memref<192xf32, #tpu.memory_space<smem>>
    %624 = vector.broadcast %623 : f32 to vector<10x32xf32>
    %625 = arith.mulf %624, %21 : vector<10x32xf32>
    %626 = arith.addf %622, %625 : vector<10x32xf32>
    %c154 = arith.constant 154 : index
    %627 = memref.load %arg6[%c154] : memref<192xf32, #tpu.memory_space<smem>>
    %628 = vector.broadcast %627 : f32 to vector<10x32xf32>
    %629 = arith.mulf %628, %32 : vector<10x32xf32>
    %630 = arith.addf %626, %629 : vector<10x32xf32>
    %c158 = arith.constant 158 : index
    %631 = memref.load %arg6[%c158] : memref<192xf32, #tpu.memory_space<smem>>
    %632 = vector.broadcast %631 : f32 to vector<10x32xf32>
    %633 = arith.mulf %632, %43 : vector<10x32xf32>
    %634 = arith.addf %630, %633 : vector<10x32xf32>
    %c162 = arith.constant 162 : index
    %635 = memref.load %arg6[%c162] : memref<192xf32, #tpu.memory_space<smem>>
    %636 = vector.broadcast %635 : f32 to vector<10x32xf32>
    %637 = arith.mulf %636, %13 : vector<10x32xf32>
    %638 = arith.addf %634, %637 : vector<10x32xf32>
    %c166 = arith.constant 166 : index
    %639 = memref.load %arg6[%c166] : memref<192xf32, #tpu.memory_space<smem>>
    %640 = vector.broadcast %639 : f32 to vector<10x32xf32>
    %641 = arith.mulf %640, %24 : vector<10x32xf32>
    %642 = arith.addf %638, %641 : vector<10x32xf32>
    %c170 = arith.constant 170 : index
    %643 = memref.load %arg6[%c170] : memref<192xf32, #tpu.memory_space<smem>>
    %644 = vector.broadcast %643 : f32 to vector<10x32xf32>
    %645 = arith.mulf %644, %35 : vector<10x32xf32>
    %646 = arith.addf %642, %645 : vector<10x32xf32>
    %c174 = arith.constant 174 : index
    %647 = memref.load %arg6[%c174] : memref<192xf32, #tpu.memory_space<smem>>
    %648 = vector.broadcast %647 : f32 to vector<10x32xf32>
    %649 = arith.mulf %648, %46 : vector<10x32xf32>
    %650 = arith.addf %646, %649 : vector<10x32xf32>
    %c178 = arith.constant 178 : index
    %651 = memref.load %arg6[%c178] : memref<192xf32, #tpu.memory_space<smem>>
    %652 = vector.broadcast %651 : f32 to vector<10x32xf32>
    %653 = arith.mulf %652, %16 : vector<10x32xf32>
    %654 = arith.addf %650, %653 : vector<10x32xf32>
    %c182 = arith.constant 182 : index
    %655 = memref.load %arg6[%c182] : memref<192xf32, #tpu.memory_space<smem>>
    %656 = vector.broadcast %655 : f32 to vector<10x32xf32>
    %657 = arith.mulf %656, %27 : vector<10x32xf32>
    %658 = arith.addf %654, %657 : vector<10x32xf32>
    %c186 = arith.constant 186 : index
    %659 = memref.load %arg6[%c186] : memref<192xf32, #tpu.memory_space<smem>>
    %660 = vector.broadcast %659 : f32 to vector<10x32xf32>
    %661 = arith.mulf %660, %38 : vector<10x32xf32>
    %662 = arith.addf %658, %661 : vector<10x32xf32>
    %c190 = arith.constant 190 : index
    %663 = memref.load %arg6[%c190] : memref<192xf32, #tpu.memory_space<smem>>
    %664 = vector.broadcast %663 : f32 to vector<10x32xf32>
    %665 = arith.mulf %664, %49 : vector<10x32xf32>
    %666 = arith.addf %662, %665 : vector<10x32xf32>
    %c3_126 = arith.constant 3 : index
    %c0_127 = arith.constant 0 : index
    %c0_128 = arith.constant 0 : index
    %667 = vector.load %arg5[%c3_126, %c0_127, %c0_128] : memref<4x16x10xf32, #tpu.memory_space<vmem>>, vector<1x16x10xf32>
    %668 = vector.shape_cast %667 : vector<1x16x10xf32> to vector<16x10xf32>
    %cst_129 = arith.constant dense<0.000000e+00> : vector<16x32xf32>
    %669 = tpu.matmul %668, %666, %cst_129 {dimension_numbers = #tpu.dot_dimension_numbers<[1], [0], [0], [1], [0, 0, 1, 1], [], []>} : vector<16x10xf32>, vector<10x32xf32>, vector<16x32xf32> -> vector<16x32xf32>
    %670 = arith.addf %619, %669 : vector<16x32xf32>
    %c2_130 = arith.constant 2 : index
    %671 = memref.load %arg7[%c2_130] : memref<4xf32, #tpu.memory_space<smem>>
    %672 = vector.broadcast %671 : f32 to vector<16x32xf32>
    %673 = arith.addf %670, %672 : vector<16x32xf32>
    %c0_131 = arith.constant 0 : index
    %c2_132 = arith.constant 2 : index
    %c0_133 = arith.constant 0 : index
    %c0_134 = arith.constant 0 : index
    %674 = vector.load %arg8[%c0_131, %c2_132, %c0_133, %c0_134] : memref<1x4x16x32xf32, #tpu.memory_space<vmem>>, vector<1x1x16x32xf32>
    %675 = vector.shape_cast %674 : vector<1x1x16x32xf32> to vector<16x32xf32>
    %676 = vector.shape_cast %673 : vector<16x32xf32> to vector<1x1x16x32xf32>
    tpu.vector_store %arg8[%c0_131, %c2_132, %c0_133, %c0_134], %676 {strides = array<i32>} : memref<1x4x16x32xf32, #tpu.memory_space<vmem>>, vector<1x1x16x32xf32>,
    %c3_135 = arith.constant 3 : index
    %677 = memref.load %arg6[%c3_135] : memref<192xf32, #tpu.memory_space<smem>>
    %678 = vector.broadcast %677 : f32 to vector<10x32xf32>
    %679 = arith.mulf %678, %10 : vector<10x32xf32>
    %c7 = arith.constant 7 : index
    %680 = memref.load %arg6[%c7] : memref<192xf32, #tpu.memory_space<smem>>
    %681 = vector.broadcast %680 : f32 to vector<10x32xf32>
    %682 = arith.mulf %681, %21 : vector<10x32xf32>
    %683 = arith.addf %679, %682 : vector<10x32xf32>
    %c11 = arith.constant 11 : index
    %684 = memref.load %arg6[%c11] : memref<192xf32, #tpu.memory_space<smem>>
    %685 = vector.broadcast %684 : f32 to vector<10x32xf32>
    %686 = arith.mulf %685, %32 : vector<10x32xf32>
    %687 = arith.addf %683, %686 : vector<10x32xf32>
    %c15 = arith.constant 15 : index
    %688 = memref.load %arg6[%c15] : memref<192xf32, #tpu.memory_space<smem>>
    %689 = vector.broadcast %688 : f32 to vector<10x32xf32>
    %690 = arith.mulf %689, %43 : vector<10x32xf32>
    %691 = arith.addf %687, %690 : vector<10x32xf32>
    %c19 = arith.constant 19 : index
    %692 = memref.load %arg6[%c19] : memref<192xf32, #tpu.memory_space<smem>>
    %693 = vector.broadcast %692 : f32 to vector<10x32xf32>
    %694 = arith.mulf %693, %13 : vector<10x32xf32>
    %695 = arith.addf %691, %694 : vector<10x32xf32>
    %c23 = arith.constant 23 : index
    %696 = memref.load %arg6[%c23] : memref<192xf32, #tpu.memory_space<smem>>
    %697 = vector.broadcast %696 : f32 to vector<10x32xf32>
    %698 = arith.mulf %697, %24 : vector<10x32xf32>
    %699 = arith.addf %695, %698 : vector<10x32xf32>
    %c27 = arith.constant 27 : index
    %700 = memref.load %arg6[%c27] : memref<192xf32, #tpu.memory_space<smem>>
    %701 = vector.broadcast %700 : f32 to vector<10x32xf32>
    %702 = arith.mulf %701, %35 : vector<10x32xf32>
    %703 = arith.addf %699, %702 : vector<10x32xf32>
    %c31 = arith.constant 31 : index
    %704 = memref.load %arg6[%c31] : memref<192xf32, #tpu.memory_space<smem>>
    %705 = vector.broadcast %704 : f32 to vector<10x32xf32>
    %706 = arith.mulf %705, %46 : vector<10x32xf32>
    %707 = arith.addf %703, %706 : vector<10x32xf32>
    %c35 = arith.constant 35 : index
    %708 = memref.load %arg6[%c35] : memref<192xf32, #tpu.memory_space<smem>>
    %709 = vector.broadcast %708 : f32 to vector<10x32xf32>
    %710 = arith.mulf %709, %16 : vector<10x32xf32>
    %711 = arith.addf %707, %710 : vector<10x32xf32>
    %c39 = arith.constant 39 : index
    %712 = memref.load %arg6[%c39] : memref<192xf32, #tpu.memory_space<smem>>
    %713 = vector.broadcast %712 : f32 to vector<10x32xf32>
    %714 = arith.mulf %713, %27 : vector<10x32xf32>
    %715 = arith.addf %711, %714 : vector<10x32xf32>
    %c43 = arith.constant 43 : index
    %716 = memref.load %arg6[%c43] : memref<192xf32, #tpu.memory_space<smem>>
    %717 = vector.broadcast %716 : f32 to vector<10x32xf32>
    %718 = arith.mulf %717, %38 : vector<10x32xf32>
    %719 = arith.addf %715, %718 : vector<10x32xf32>
    %c47 = arith.constant 47 : index
    %720 = memref.load %arg6[%c47] : memref<192xf32, #tpu.memory_space<smem>>
    %721 = vector.broadcast %720 : f32 to vector<10x32xf32>
    %722 = arith.mulf %721, %49 : vector<10x32xf32>
    %723 = arith.addf %719, %722 : vector<10x32xf32>
    %c0_136 = arith.constant 0 : index
    %c0_137 = arith.constant 0 : index
    %c0_138 = arith.constant 0 : index
    %724 = vector.load %arg5[%c0_136, %c0_137, %c0_138] : memref<4x16x10xf32, #tpu.memory_space<vmem>>, vector<1x16x10xf32>
    %725 = vector.shape_cast %724 : vector<1x16x10xf32> to vector<16x10xf32>
    %cst_139 = arith.constant dense<0.000000e+00> : vector<16x32xf32>
    %726 = tpu.matmul %725, %723, %cst_139 {dimension_numbers = #tpu.dot_dimension_numbers<[1], [0], [0], [1], [0, 0, 1, 1], [], []>} : vector<16x10xf32>, vector<10x32xf32>, vector<16x32xf32> -> vector<16x32xf32>
    %c51 = arith.constant 51 : index
    %727 = memref.load %arg6[%c51] : memref<192xf32, #tpu.memory_space<smem>>
    %728 = vector.broadcast %727 : f32 to vector<10x32xf32>
    %729 = arith.mulf %728, %10 : vector<10x32xf32>
    %c55 = arith.constant 55 : index
    %730 = memref.load %arg6[%c55] : memref<192xf32, #tpu.memory_space<smem>>
    %731 = vector.broadcast %730 : f32 to vector<10x32xf32>
    %732 = arith.mulf %731, %21 : vector<10x32xf32>
    %733 = arith.addf %729, %732 : vector<10x32xf32>
    %c59 = arith.constant 59 : index
    %734 = memref.load %arg6[%c59] : memref<192xf32, #tpu.memory_space<smem>>
    %735 = vector.broadcast %734 : f32 to vector<10x32xf32>
    %736 = arith.mulf %735, %32 : vector<10x32xf32>
    %737 = arith.addf %733, %736 : vector<10x32xf32>
    %c63 = arith.constant 63 : index
    %738 = memref.load %arg6[%c63] : memref<192xf32, #tpu.memory_space<smem>>
    %739 = vector.broadcast %738 : f32 to vector<10x32xf32>
    %740 = arith.mulf %739, %43 : vector<10x32xf32>
    %741 = arith.addf %737, %740 : vector<10x32xf32>
    %c67 = arith.constant 67 : index
    %742 = memref.load %arg6[%c67] : memref<192xf32, #tpu.memory_space<smem>>
    %743 = vector.broadcast %742 : f32 to vector<10x32xf32>
    %744 = arith.mulf %743, %13 : vector<10x32xf32>
    %745 = arith.addf %741, %744 : vector<10x32xf32>
    %c71 = arith.constant 71 : index
    %746 = memref.load %arg6[%c71] : memref<192xf32, #tpu.memory_space<smem>>
    %747 = vector.broadcast %746 : f32 to vector<10x32xf32>
    %748 = arith.mulf %747, %24 : vector<10x32xf32>
    %749 = arith.addf %745, %748 : vector<10x32xf32>
    %c75 = arith.constant 75 : index
    %750 = memref.load %arg6[%c75] : memref<192xf32, #tpu.memory_space<smem>>
    %751 = vector.broadcast %750 : f32 to vector<10x32xf32>
    %752 = arith.mulf %751, %35 : vector<10x32xf32>
    %753 = arith.addf %749, %752 : vector<10x32xf32>
    %c79 = arith.constant 79 : index
    %754 = memref.load %arg6[%c79] : memref<192xf32, #tpu.memory_space<smem>>
    %755 = vector.broadcast %754 : f32 to vector<10x32xf32>
    %756 = arith.mulf %755, %46 : vector<10x32xf32>
    %757 = arith.addf %753, %756 : vector<10x32xf32>
    %c83 = arith.constant 83 : index
    %758 = memref.load %arg6[%c83] : memref<192xf32, #tpu.memory_space<smem>>
    %759 = vector.broadcast %758 : f32 to vector<10x32xf32>
    %760 = arith.mulf %759, %16 : vector<10x32xf32>
    %761 = arith.addf %757, %760 : vector<10x32xf32>
    %c87 = arith.constant 87 : index
    %762 = memref.load %arg6[%c87] : memref<192xf32, #tpu.memory_space<smem>>
    %763 = vector.broadcast %762 : f32 to vector<10x32xf32>
    %764 = arith.mulf %763, %27 : vector<10x32xf32>
    %765 = arith.addf %761, %764 : vector<10x32xf32>
    %c91 = arith.constant 91 : index
    %766 = memref.load %arg6[%c91] : memref<192xf32, #tpu.memory_space<smem>>
    %767 = vector.broadcast %766 : f32 to vector<10x32xf32>
    %768 = arith.mulf %767, %38 : vector<10x32xf32>
    %769 = arith.addf %765, %768 : vector<10x32xf32>
    %c95 = arith.constant 95 : index
    %770 = memref.load %arg6[%c95] : memref<192xf32, #tpu.memory_space<smem>>
    %771 = vector.broadcast %770 : f32 to vector<10x32xf32>
    %772 = arith.mulf %771, %49 : vector<10x32xf32>
    %773 = arith.addf %769, %772 : vector<10x32xf32>
    %c1_140 = arith.constant 1 : index
    %c0_141 = arith.constant 0 : index
    %c0_142 = arith.constant 0 : index
    %774 = vector.load %arg5[%c1_140, %c0_141, %c0_142] : memref<4x16x10xf32, #tpu.memory_space<vmem>>, vector<1x16x10xf32>
    %775 = vector.shape_cast %774 : vector<1x16x10xf32> to vector<16x10xf32>
    %cst_143 = arith.constant dense<0.000000e+00> : vector<16x32xf32>
    %776 = tpu.matmul %775, %773, %cst_143 {dimension_numbers = #tpu.dot_dimension_numbers<[1], [0], [0], [1], [0, 0, 1, 1], [], []>} : vector<16x10xf32>, vector<10x32xf32>, vector<16x32xf32> -> vector<16x32xf32>
    %777 = arith.addf %726, %776 : vector<16x32xf32>
    %c99 = arith.constant 99 : index
    %778 = memref.load %arg6[%c99] : memref<192xf32, #tpu.memory_space<smem>>
    %779 = vector.broadcast %778 : f32 to vector<10x32xf32>
    %780 = arith.mulf %779, %10 : vector<10x32xf32>
    %c103 = arith.constant 103 : index
    %781 = memref.load %arg6[%c103] : memref<192xf32, #tpu.memory_space<smem>>
    %782 = vector.broadcast %781 : f32 to vector<10x32xf32>
    %783 = arith.mulf %782, %21 : vector<10x32xf32>
    %784 = arith.addf %780, %783 : vector<10x32xf32>
    %c107 = arith.constant 107 : index
    %785 = memref.load %arg6[%c107] : memref<192xf32, #tpu.memory_space<smem>>
    %786 = vector.broadcast %785 : f32 to vector<10x32xf32>
    %787 = arith.mulf %786, %32 : vector<10x32xf32>
    %788 = arith.addf %784, %787 : vector<10x32xf32>
    %c111 = arith.constant 111 : index
    %789 = memref.load %arg6[%c111] : memref<192xf32, #tpu.memory_space<smem>>
    %790 = vector.broadcast %789 : f32 to vector<10x32xf32>
    %791 = arith.mulf %790, %43 : vector<10x32xf32>
    %792 = arith.addf %788, %791 : vector<10x32xf32>
    %c115 = arith.constant 115 : index
    %793 = memref.load %arg6[%c115] : memref<192xf32, #tpu.memory_space<smem>>
    %794 = vector.broadcast %793 : f32 to vector<10x32xf32>
    %795 = arith.mulf %794, %13 : vector<10x32xf32>
    %796 = arith.addf %792, %795 : vector<10x32xf32>
    %c119 = arith.constant 119 : index
    %797 = memref.load %arg6[%c119] : memref<192xf32, #tpu.memory_space<smem>>
    %798 = vector.broadcast %797 : f32 to vector<10x32xf32>
    %799 = arith.mulf %798, %24 : vector<10x32xf32>
    %800 = arith.addf %796, %799 : vector<10x32xf32>
    %c123 = arith.constant 123 : index
    %801 = memref.load %arg6[%c123] : memref<192xf32, #tpu.memory_space<smem>>
    %802 = vector.broadcast %801 : f32 to vector<10x32xf32>
    %803 = arith.mulf %802, %35 : vector<10x32xf32>
    %804 = arith.addf %800, %803 : vector<10x32xf32>
    %c127 = arith.constant 127 : index
    %805 = memref.load %arg6[%c127] : memref<192xf32, #tpu.memory_space<smem>>
    %806 = vector.broadcast %805 : f32 to vector<10x32xf32>
    %807 = arith.mulf %806, %46 : vector<10x32xf32>
    %808 = arith.addf %804, %807 : vector<10x32xf32>
    %c131 = arith.constant 131 : index
    %809 = memref.load %arg6[%c131] : memref<192xf32, #tpu.memory_space<smem>>
    %810 = vector.broadcast %809 : f32 to vector<10x32xf32>
    %811 = arith.mulf %810, %16 : vector<10x32xf32>
    %812 = arith.addf %808, %811 : vector<10x32xf32>
    %c135 = arith.constant 135 : index
    %813 = memref.load %arg6[%c135] : memref<192xf32, #tpu.memory_space<smem>>
    %814 = vector.broadcast %813 : f32 to vector<10x32xf32>
    %815 = arith.mulf %814, %27 : vector<10x32xf32>
    %816 = arith.addf %812, %815 : vector<10x32xf32>
    %c139 = arith.constant 139 : index
    %817 = memref.load %arg6[%c139] : memref<192xf32, #tpu.memory_space<smem>>
    %818 = vector.broadcast %817 : f32 to vector<10x32xf32>
    %819 = arith.mulf %818, %38 : vector<10x32xf32>
    %820 = arith.addf %816, %819 : vector<10x32xf32>
    %c143 = arith.constant 143 : index
    %821 = memref.load %arg6[%c143] : memref<192xf32, #tpu.memory_space<smem>>
    %822 = vector.broadcast %821 : f32 to vector<10x32xf32>
    %823 = arith.mulf %822, %49 : vector<10x32xf32>
    %824 = arith.addf %820, %823 : vector<10x32xf32>
    %c2_144 = arith.constant 2 : index
    %c0_145 = arith.constant 0 : index
    %c0_146 = arith.constant 0 : index
    %825 = vector.load %arg5[%c2_144, %c0_145, %c0_146] : memref<4x16x10xf32, #tpu.memory_space<vmem>>, vector<1x16x10xf32>
    %826 = vector.shape_cast %825 : vector<1x16x10xf32> to vector<16x10xf32>
    %cst_147 = arith.constant dense<0.000000e+00> : vector<16x32xf32>
    %827 = tpu.matmul %826, %824, %cst_147 {dimension_numbers = #tpu.dot_dimension_numbers<[1], [0], [0], [1], [0, 0, 1, 1], [], []>} : vector<16x10xf32>, vector<10x32xf32>, vector<16x32xf32> -> vector<16x32xf32>
    %828 = arith.addf %777, %827 : vector<16x32xf32>
    %c147 = arith.constant 147 : index
    %829 = memref.load %arg6[%c147] : memref<192xf32, #tpu.memory_space<smem>>
    %830 = vector.broadcast %829 : f32 to vector<10x32xf32>
    %831 = arith.mulf %830, %10 : vector<10x32xf32>
    %c151 = arith.constant 151 : index
    %832 = memref.load %arg6[%c151] : memref<192xf32, #tpu.memory_space<smem>>
    %833 = vector.broadcast %832 : f32 to vector<10x32xf32>
    %834 = arith.mulf %833, %21 : vector<10x32xf32>
    %835 = arith.addf %831, %834 : vector<10x32xf32>
    %c155 = arith.constant 155 : index
    %836 = memref.load %arg6[%c155] : memref<192xf32, #tpu.memory_space<smem>>
    %837 = vector.broadcast %836 : f32 to vector<10x32xf32>
    %838 = arith.mulf %837, %32 : vector<10x32xf32>
    %839 = arith.addf %835, %838 : vector<10x32xf32>
    %c159 = arith.constant 159 : index
    %840 = memref.load %arg6[%c159] : memref<192xf32, #tpu.memory_space<smem>>
    %841 = vector.broadcast %840 : f32 to vector<10x32xf32>
    %842 = arith.mulf %841, %43 : vector<10x32xf32>
    %843 = arith.addf %839, %842 : vector<10x32xf32>
    %c163 = arith.constant 163 : index
    %844 = memref.load %arg6[%c163] : memref<192xf32, #tpu.memory_space<smem>>
    %845 = vector.broadcast %844 : f32 to vector<10x32xf32>
    %846 = arith.mulf %845, %13 : vector<10x32xf32>
    %847 = arith.addf %843, %846 : vector<10x32xf32>
    %c167 = arith.constant 167 : index
    %848 = memref.load %arg6[%c167] : memref<192xf32, #tpu.memory_space<smem>>
    %849 = vector.broadcast %848 : f32 to vector<10x32xf32>
    %850 = arith.mulf %849, %24 : vector<10x32xf32>
    %851 = arith.addf %847, %850 : vector<10x32xf32>
    %c171 = arith.constant 171 : index
    %852 = memref.load %arg6[%c171] : memref<192xf32, #tpu.memory_space<smem>>
    %853 = vector.broadcast %852 : f32 to vector<10x32xf32>
    %854 = arith.mulf %853, %35 : vector<10x32xf32>
    %855 = arith.addf %851, %854 : vector<10x32xf32>
    %c175 = arith.constant 175 : index
    %856 = memref.load %arg6[%c175] : memref<192xf32, #tpu.memory_space<smem>>
    %857 = vector.broadcast %856 : f32 to vector<10x32xf32>
    %858 = arith.mulf %857, %46 : vector<10x32xf32>
    %859 = arith.addf %855, %858 : vector<10x32xf32>
    %c179 = arith.constant 179 : index
    %860 = memref.load %arg6[%c179] : memref<192xf32, #tpu.memory_space<smem>>
    %861 = vector.broadcast %860 : f32 to vector<10x32xf32>
    %862 = arith.mulf %861, %16 : vector<10x32xf32>
    %863 = arith.addf %859, %862 : vector<10x32xf32>
    %c183 = arith.constant 183 : index
    %864 = memref.load %arg6[%c183] : memref<192xf32, #tpu.memory_space<smem>>
    %865 = vector.broadcast %864 : f32 to vector<10x32xf32>
    %866 = arith.mulf %865, %27 : vector<10x32xf32>
    %867 = arith.addf %863, %866 : vector<10x32xf32>
    %c187 = arith.constant 187 : index
    %868 = memref.load %arg6[%c187] : memref<192xf32, #tpu.memory_space<smem>>
    %869 = vector.broadcast %868 : f32 to vector<10x32xf32>
    %870 = arith.mulf %869, %38 : vector<10x32xf32>
    %871 = arith.addf %867, %870 : vector<10x32xf32>
    %c191 = arith.constant 191 : index
    %872 = memref.load %arg6[%c191] : memref<192xf32, #tpu.memory_space<smem>>
    %873 = vector.broadcast %872 : f32 to vector<10x32xf32>
    %874 = arith.mulf %873, %49 : vector<10x32xf32>
    %875 = arith.addf %871, %874 : vector<10x32xf32>
    %c3_148 = arith.constant 3 : index
    %c0_149 = arith.constant 0 : index
    %c0_150 = arith.constant 0 : index
    %876 = vector.load %arg5[%c3_148, %c0_149, %c0_150] : memref<4x16x10xf32, #tpu.memory_space<vmem>>, vector<1x16x10xf32>
    %877 = vector.shape_cast %876 : vector<1x16x10xf32> to vector<16x10xf32>
    %cst_151 = arith.constant dense<0.000000e+00> : vector<16x32xf32>
    %878 = tpu.matmul %877, %875, %cst_151 {dimension_numbers = #tpu.dot_dimension_numbers<[1], [0], [0], [1], [0, 0, 1, 1], [], []>} : vector<16x10xf32>, vector<10x32xf32>, vector<16x32xf32> -> vector<16x32xf32>
    %879 = arith.addf %828, %878 : vector<16x32xf32>
    %c3_152 = arith.constant 3 : index
    %880 = memref.load %arg7[%c3_152] : memref<4xf32, #tpu.memory_space<smem>>
    %881 = vector.broadcast %880 : f32 to vector<16x32xf32>
    %882 = arith.addf %879, %881 : vector<16x32xf32>
    %c0_153 = arith.constant 0 : index
    %c3_154 = arith.constant 3 : index
    %c0_155 = arith.constant 0 : index
    %c0_156 = arith.constant 0 : index
    %883 = vector.load %arg8[%c0_153, %c3_154, %c0_155, %c0_156] : memref<1x4x16x32xf32, #tpu.memory_space<vmem>>, vector<1x1x16x32xf32>
    %884 = vector.shape_cast %883 : vector<1x1x16x32xf32> to vector<16x32xf32>
    %885 = vector.shape_cast %882 : vector<16x32xf32> to vector<1x1x16x32xf32>
    tpu.vector_store %arg8[%c0_153, %c3_154, %c0_155, %c0_156], %885 {strides = array<i32>} : memref<1x4x16x32xf32, #tpu.memory_space<vmem>>, vector<1x1x16x32xf32>,
    return
  }
  func.func @transform_0(%arg0: i32, %arg1: i32) -> (i32, i32, i32, i32) {
    %c0_i32 = arith.constant 0 : i32
    %c0_i32_0 = arith.constant 0 : i32
    %c0_i32_1 = arith.constant 0 : i32
    return %arg0, %c0_i32, %arg1, %c0_i32_0 : i32, i32, i32, i32
  }
  func.func @transform_1(%arg0: i32, %arg1: i32) -> (i32, i32, i32, i32) {
    %c1_i32 = arith.constant 1 : i32
    %0 = arith.addi %arg1, %c1_i32 : i32
    %c0_i32 = arith.constant 0 : i32
    %c0_i32_0 = arith.constant 0 : i32
    %c0_i32_1 = arith.constant 0 : i32
    return %arg0, %c0_i32, %0, %c0_i32_0 : i32, i32, i32, i32
  }
  func.func @transform_2(%arg0: i32, %arg1: i32) -> (i32, i32, i32) {
    %c0_i32 = arith.constant 0 : i32
    %c0_i32_0 = arith.constant 0 : i32
    %c0_i32_1 = arith.constant 0 : i32
    %c0_i32_2 = arith.constant 0 : i32
    return %c0_i32, %c0_i32_0, %c0_i32_1 : i32, i32, i32
  }
  func.func @transform_3(%arg0: i32, %arg1: i32) -> (i32, i32, i32) {
    %c0_i32 = arith.constant 0 : i32
    %c0_i32_0 = arith.constant 0 : i32
    %c0_i32_1 = arith.constant 0 : i32
    %c0_i32_2 = arith.constant 0 : i32
    return %c0_i32, %c0_i32_0, %c0_i32_1 : i32, i32, i32
  }
  func.func @transform_4(%arg0: i32, %arg1: i32) -> i32 {
    %c0_i32 = arith.constant 0 : i32
    %c0_i32_0 = arith.constant 0 : i32
    return %c0_i32 : i32
  }
  func.func @transform_5(%arg0: i32, %arg1: i32) -> i32 {
    %c0_i32 = arith.constant 0 : i32
    %c0_i32_0 = arith.constant 0 : i32
    return %c0_i32 : i32
  }
  func.func @transform_6(%arg0: i32, %arg1: i32) -> (i32, i32, i32, i32) {
    %c0_i32 = arith.constant 0 : i32
    %c0_i32_0 = arith.constant 0 : i32
    %c0_i32_1 = arith.constant 0 : i32
    return %arg0, %c0_i32, %arg1, %c0_i32_0 : i32, i32, i32, i32
  }
}

</mosaic_0001>

<llo_original>
// kernel: upsample_forward.1
$region0: #{upsample_forward.1}
  #allocation0 [shape = 'u32[]', space=smem, size = 0x4, offset = 0x4, fixed_abs, tag = 'smem constant byte address 0x4 - core index']
  #allocation1 [shape = 'u32[144,128]{1,0:T(1,128)}', space=vmem, size = 0x12000, scoped, tag = 'internal scratch']
  #allocation2 [shape = 'f32[4,10,16]{2,1,0:T(8,128)}', space=vmem, size = 0x8000, scoped, tag = 'scratch operand']
  #allocation11 [shape = 's32[]', space=sflag, size = 0x4, offset = 0, fixed_abs, tag = 'sflag constant byte address 0x0 - dummy sync flag']
  %s0 = inlined_call_operand.vmem [shape: f32[2,4,24,16], index: 0, kind: input, shape index: {}, may-alias: {0,1}]
  %s1 = inlined_call_operand.vmem [shape: f32[2,4,24,16], index: 1, kind: input, shape index: {}, may-alias: {0,1}]
  %s2 = inlined_call_operand.vmem [shape: f32[3,16,32], index: 2, kind: input, shape index: {}]
  %s3 = inlined_call_operand.vmem [shape: f32[4,16,10], index: 3, kind: input, shape index: {}]
  %s4 = inlined_call_operand.vmem [shape: f32[192], index: 4, kind: input, shape index: {}]
  %s5 = inlined_call_operand.vmem [shape: f32[4], index: 5, kind: input, shape index: {}]
  %s6 = inlined_call_operand.hbm [shape: f32[2,4,32,32], index: 6, kind: output, shape index: {}]
  %s7 = sld [smem:[#allocation0]]
  $region141: #{upsample_forward.1} parent=0
    _
  %s9 = ssub.s32 1, %s7
  %s10 = scalar_select 0, %s9, %s7
  $region1: #{upsample_forward.1} parent=0
    #allocation3 [shape = 'u8[32768]{0}', space=vmem, size = 0x8000, scoped, tag = 'input window, operand 0']
    #allocation4 [shape = 'u8[32768]{0}', space=vmem, size = 0x8000, scoped, tag = 'input window, operand 1']
    #allocation5 [shape = 'u8[1024]{0}', space=smem, size = 0x400, scoped, tag = 'input window, operand 4, single buffered']
    #allocation6 [shape = 's32[2]{0}', space=sflag, size = 0x8, scoped, tag = 'scoped memory for upsample_forward.1']
    #allocation7 [shape = 's32[2]{0}', space=sflag, size = 0x8, scoped, tag = 'scoped memory for upsample_forward.1']
    #allocation8 [shape = 'u8[512]{0}', space=smem, size = 0x200, scoped, tag = 'input window, operand 5, single buffered']
    #allocation9 [shape = 's32[1]{0}', space=sflag, size = 0x4, scoped, tag = 'scoped memory for upsample_forward.1']
    #allocation10 [shape = 'u8[65536]{0}', space=vmem, size = 0x10000, scoped, tag = 'output window, operand 0']
    %11 = vsyncpa [#allocation7], 0
    %12 = vsyncpa [#allocation9], 0
    %13 = vsyncpa [#allocation6], 0
    %s14 = scalar_lea.sflag [#allocation6], 1
    %15 = vsyncpa %s14, 0
    loop: start=0, step=1, limit=6
    $region2: #{upsample_forward.1} parent=1 // loop_pre_header
      _
    $region3: #{upsample_forward.1} parent=1 // loop_header
      %s17 = sphi 0, %s21
      %p18 = scmp.ge.s32.totalorder %s17, 6
      %s24 = sphi 0, %s36
      %s25 = sphi 0, %s32
      %s26 = sphi 0, %s24
      %s27 = sphi 0, %s25
      %s28 = sphi 0, %s26
      %s29 = sphi 0, %s27
      %s41 = sphi 0, %s43
      %s44 = sphi 0, %s41
      %s45 = sphi 0, %s44
      %s61 = sphi 0, %s45
      %s71 = sphi 0, %s73
      %s74 = sphi 0, %s71
      %s75 = sphi 0, %s74
      %s91 = sphi 0, %s75
      %s95 = sphi 0, %s95
      %s97 = sphi 0, %s95
      %s98 = sphi 0, %s97
      %s112 = sphi 0, %s98
      %s116 = sphi 0, %s116
      %s118 = sphi 0, %s116
      %s119 = sphi 0, %s118
      %s133 = sphi 0, %s119
      %s137 = sphi 0, %s137
      %s139 = sphi 0, %s137
      %s140 = sphi 0, %s139
      %s154 = sphi 0, %s140
      %s158 = sphi 0, %s158
      %s160 = sphi 0, %s158
      %s161 = sphi 0, %s160
      %s175 = sphi 0, %s161
      %s183 = sphi 0, %s185
      %s186 = sphi 0, %s183
      %s187 = sphi 0, %s186
      %s203 = sphi 0, %s187
    $region4: #{upsample_forward.1} parent=1 // loop_header_branch
      %20 = sbr.rel (%p18) target = $region8
    $region5: #{upsample_forward.1} parent=1 // loop_body
      %s22 = ssub.s32 %s17, 1
      %s23 = ssub.s32 %s17, 2
      %s30 = sadd.s32 1, %s25
      %p31 = scmp.ge.s32.totalorder %s30, 2
      %s32 = scalar_select %p31, 0, %s30
      %s33 = sadd.s32 1, %s24
      %s34 = scalar_select %p31, %s33, %s24
      %p35 = scmp.ge.s32.totalorder %s34, 2
      %s36 = scalar_select %p35, 0, %s34
      %s37 = ssub.s32 %s24, %s36
      %s38 = ssub.s32 %s25, %s32
      %s39 = sor.u32 %s37, %s38
      %p40 = scmp.eq.s32.totalorder %s39, 0
      %s42 = sadd.s32 %s41, 1
      %s43 = scalar_select %p40, %s41, %s42
      %p46 = pneg %p40
      %p47 = scmp.eq.s32.totalorder %s17, 3
      %p48 = por %p46, %p47
      %p49 = scmp.ne.s32.totalorder %s41, %s44
      %p50 = scmp.eq.s32.totalorder %s17, 0
      %p51 = por %p49, %p50
      %p52 = scmp.ne.s32.totalorder %s41, %s44
      %p53 = scmp.eq.s32.totalorder %s22, 3
      %p54 = por %p52, %p53
      %p55 = scmp.ne.s32.totalorder %s44, %s45
      %p56 = scmp.eq.s32.totalorder %s22, 0
      %p57 = por %p55, %p56
      %p58 = scmp.ne.s32.totalorder %s44, %s45
      %p59 = scmp.eq.s32.totalorder %s23, 3
      %p60 = por %p58, %p59
      %p62 = scmp.ne.s32.totalorder %s45, %s61
      %p63 = scmp.eq.s32.totalorder %s23, 0
      %p64 = por %p62, %p63
      %s65 = sadd.s32 %s25, 1
      %s66 = sadd.s32 %s32, 1
      %s67 = ssub.s32 %s24, %s36
      %s68 = ssub.s32 %s65, %s66
      %s69 = sor.u32 %s67, %s68
      %p70 = scmp.eq.s32.totalorder %s69, 0
      %s72 = sadd.s32 %s71, 1
      %s73 = scalar_select %p70, %s71, %s72
      %p76 = pneg %p70
      %p77 = scmp.eq.s32.totalorder %s17, 3
      %p78 = por %p76, %p77
      %p79 = scmp.ne.s32.totalorder %s71, %s74
      %p80 = scmp.eq.s32.totalorder %s17, 0
      %p81 = por %p79, %p80
      %p82 = scmp.ne.s32.totalorder %s71, %s74
      %p83 = scmp.eq.s32.totalorder %s22, 3
      %p84 = por %p82, %p83
      %p85 = scmp.ne.s32.totalorder %s74, %s75
      %p86 = scmp.eq.s32.totalorder %s22, 0
      %p87 = por %p85, %p86
      %p88 = scmp.ne.s32.totalorder %s74, %s75
      %p89 = scmp.eq.s32.totalorder %s23, 3
      %p90 = por %p88, %p89
      %p92 = scmp.ne.s32.totalorder %s75, %s91
      %p93 = scmp.eq.s32.totalorder %s23, 0
      %p94 = por %p92, %p93
      %s96 = sadd.s32 %s95, 1
      %p99 = scmp.eq.s32.totalorder %s17, 3
      %p100 = scmp.ne.s32.totalorder %s95, %s97
      %p101 = scmp.eq.s32.totalorder %s17, 0
      %p102 = por %p100, %p101
      %p103 = scmp.ne.s32.totalorder %s95, %s97
      %p104 = scmp.eq.s32.totalorder %s22, 3
      %p105 = por %p103, %p104
      %p106 = scmp.ne.s32.totalorder %s97, %s98
      %p107 = scmp.eq.s32.totalorder %s22, 0
      %p108 = por %p106, %p107
      %p109 = scmp.ne.s32.totalorder %s97, %s98
      %p110 = scmp.eq.s32.totalorder %s23, 3
      %p111 = por %p109, %p110
      %p113 = scmp.ne.s32.totalorder %s98, %s112
      %p114 = scmp.eq.s32.totalorder %s23, 0
      %p115 = por %p113, %p114
      %s117 = sadd.s32 %s116, 1
      %p120 = scmp.eq.s32.totalorder %s17, 3
      %p121 = scmp.ne.s32.totalorder %s116, %s118
      %p122 = scmp.eq.s32.totalorder %s17, 0
      %p123 = por %p121, %p122
      %p124 = scmp.ne.s32.totalorder %s116, %s118
      %p125 = scmp.eq.s32.totalorder %s22, 3
      %p126 = por %p124, %p125
      %p127 = scmp.ne.s32.totalorder %s118, %s119
      %p128 = scmp.eq.s32.totalorder %s22, 0
      %p129 = por %p127, %p128
      %p130 = scmp.ne.s32.totalorder %s118, %s119
      %p131 = scmp.eq.s32.totalorder %s23, 3
      %p132 = por %p130, %p131
      %p134 = scmp.ne.s32.totalorder %s119, %s133
      %p135 = scmp.eq.s32.totalorder %s23, 0
      %p136 = por %p134, %p135
      %s138 = sadd.s32 %s137, 1
      %p141 = scmp.eq.s32.totalorder %s17, 3
      %p142 = scmp.ne.s32.totalorder %s137, %s139
      %p143 = scmp.eq.s32.totalorder %s17, 0
      %p144 = por %p142, %p143
      %p145 = scmp.ne.s32.totalorder %s137, %s139
      %p146 = scmp.eq.s32.totalorder %s22, 3
      %p147 = por %p145, %p146
      %p148 = scmp.ne.s32.totalorder %s139, %s140
      %p149 = scmp.eq.s32.totalorder %s22, 0
      %p150 = por %p148, %p149
      %p151 = scmp.ne.s32.totalorder %s139, %s140
      %p152 = scmp.eq.s32.totalorder %s23, 3
      %p153 = por %p151, %p152
      %p155 = scmp.ne.s32.totalorder %s140, %s154
      %p156 = scmp.eq.s32.totalorder %s23, 0
      %p157 = por %p155, %p156
      %s159 = sadd.s32 %s158, 1
      %p162 = scmp.eq.s32.totalorder %s17, 3
      %p163 = scmp.ne.s32.totalorder %s158, %s160
      %p164 = scmp.eq.s32.totalorder %s17, 0
      %p165 = por %p163, %p164
      %p166 = scmp.ne.s32.totalorder %s158, %s160
      %p167 = scmp.eq.s32.totalorder %s22, 3
      %p168 = por %p166, %p167
      %p169 = scmp.ne.s32.totalorder %s160, %s161
      %p170 = scmp.eq.s32.totalorder %s22, 0
      %p171 = por %p169, %p170
      %p172 = scmp.ne.s32.totalorder %s160, %s161
      %p173 = scmp.eq.s32.totalorder %s23, 3
      %p174 = por %p172, %p173
      %p176 = scmp.ne.s32.totalorder %s161, %s175
      %p177 = scmp.eq.s32.totalorder %s23, 0
      %p178 = por %p176, %p177
      %s179 = ssub.s32 %s24, %s36
      %s180 = ssub.s32 %s25, %s32
      %s181 = sor.u32 %s179, %s180
      %p182 = scmp.eq.s32.totalorder %s181, 0
      %s184 = sadd.s32 %s183, 1
      %s185 = scalar_select %p182, %s183, %s184
      %p188 = pneg %p182
      %p189 = scmp.eq.s32.totalorder %s17, 3
      %p190 = por %p188, %p189
      %p191 = scmp.ne.s32.totalorder %s183, %s186
      %p192 = scmp.eq.s32.totalorder %s17, 0
      %p193 = por %p191, %p192
      %p194 = scmp.ne.s32.totalorder %s183, %s186
      %p195 = scmp.eq.s32.totalorder %s22, 3
      %p196 = por %p194, %p195
      %p197 = scmp.ne.s32.totalorder %s186, %s187
      %p198 = scmp.eq.s32.totalorder %s22, 0
      %p199 = por %p197, %p198
      %p200 = scmp.ne.s32.totalorder %s186, %s187
      %p201 = scmp.eq.s32.totalorder %s23, 3
      %p202 = por %p200, %p201
      %p204 = scmp.ne.s32.totalorder %s187, %s203
      %p205 = scmp.eq.s32.totalorder %s23, 0
      %p206 = por %p204, %p205
      %p207 = scmp.le.s32.totalorder 1, %s17
      %p208 = scmp.lt.s32.totalorder %s17, 5
      %p209 = pnand %p207, %p208
      %p210 = pneg %p209
      // Predicated region
      $region9: #{upsample_forward.1} parent=5 // pred_check
        _
      $region10: #{upsample_forward.1} parent=5 // pred_check_branch
        %212 = sbr.rel (%p209) target = $region12
      $region11: #{upsample_forward.1} parent=5 // pred_region
        %s213 = ssub.s32 %s17, 1
        // Predicated region
        $region13: #{upsample_forward.1} parent=11 // pred_check
          %p214 = pneg %p108
        $region14: #{upsample_forward.1} parent=11 // pred_check_branch
          %216 = sbr.rel (%p214) target = $region16
        $region15: #{upsample_forward.1} parent=11 // pred_region
          _
        $region16: #{upsample_forward.1} parent=11 // pred_fallthru
          _
        // Predicated region
        $region17: #{upsample_forward.1} parent=11 // pred_check
          %p217 = pneg %p129
        $region18: #{upsample_forward.1} parent=11 // pred_check_branch
          %219 = sbr.rel (%p217) target = $region20
        $region19: #{upsample_forward.1} parent=11 // pred_region
          _
        $region20: #{upsample_forward.1} parent=11 // pred_fallthru
          _
        // Predicated region
        $region21: #{upsample_forward.1} parent=11 // pred_check
          %p220 = pneg %p150
        $region22: #{upsample_forward.1} parent=11 // pred_check_branch
          %222 = sbr.rel (%p220) target = $region24
        $region23: #{upsample_forward.1} parent=11 // pred_region
          %s224 = ssub.s32 32, 32
          %225 = vsyncadd [#allocation7], %s224
          %s227 = sshll.u32 %s4, 4
          %s228 = int_to_ptr.vmem [resolvable:$true] %s227
          %230 = dma.vmem_to_smem %s228, 32, [#allocation5], [#allocation7]
        $region24: #{upsample_forward.1} parent=11 // pred_fallthru
          _
        // Predicated region
        $region25: #{upsample_forward.1} parent=11 // pred_check
          %p231 = pneg %p171
        $region26: #{upsample_forward.1} parent=11 // pred_check_branch
          %233 = sbr.rel (%p231) target = $region28
        $region27: #{upsample_forward.1} parent=11 // pred_region
          %s235 = ssub.s32 16, 16
          %236 = vsyncadd [#allocation9], %s235
          %s238 = sshll.u32 %s5, 4
          %s239 = int_to_ptr.vmem [resolvable:$true] %s238
          %241 = dma.vmem_to_smem %s239, 16, [#allocation8], [#allocation9]
        $region28: #{upsample_forward.1} parent=11 // pred_fallthru
          _
      $region12: #{upsample_forward.1} parent=5 // pred_fallthru
        _
      %p242 = scmp.lt.s32.totalorder %s17, 4
      // Predicated region
      $region29: #{upsample_forward.1} parent=5 // pred_check
        %p243 = pneg %p242
      $region30: #{upsample_forward.1} parent=5 // pred_check_branch
        %245 = sbr.rel (%p243) target = $region32
      $region31: #{upsample_forward.1} parent=5 // pred_region
        // Predicated region
        $region33: #{upsample_forward.1} parent=31 // pred_check
          %p246 = pneg %p51
        $region34: #{upsample_forward.1} parent=31 // pred_check_branch
          %248 = sbr.rel (%p246) target = $region36
        $region35: #{upsample_forward.1} parent=31 // pred_region
          %s249 = sand.u32 %s41, 1
          %s250 = sand.u32 %s41, 1
          %s251 = smul.addr %s250, 32
          %s252 = scalar_lea.vmem [#allocation3], %s251
          %s253 = smul.addr %s24, 12
          %s254 = sadd.s32 %s25, %s253
          %s255 = smul.addr %s254, 8
          %s256 = scalar_lea.vmem %s0, %s255
          // Predicated region
          $region37: #{upsample_forward.1} parent=35 // pred_check
            _
          $region38: #{upsample_forward.1} parent=35 // pred_check_branch
            %258 = sbr.rel (0) target = $region40
          $region39: #{upsample_forward.1} parent=35 // pred_region
            // Predicated region
            $region41: #{upsample_forward.1} parent=39 // pred_check
              _
            $region42: #{upsample_forward.1} parent=39 // pred_check_branch
              %260 = sbr.rel (0) target = $region44
            $region43: #{upsample_forward.1} parent=39 // pred_region
              // Predicated region
              $region56: #{upsample_forward.1} parent=43 // pred_check
                _
              $region57: #{upsample_forward.1} parent=43 // pred_check_branch
                %281 = sbr.rel (0) target = $region59
              $region58: #{upsample_forward.1} parent=43 // pred_region
                loop: start=0, step=1, limit=1
                $region60: #{upsample_forward.1} parent=58 // loop_pre_header
                  _
                $region61: #{upsample_forward.1} parent=58 // loop_header
                  %s283 = sphi 0, %s287
                  %p284 = scmp.ge.s32.totalorder %s283, 1
                  %s288 = sphi %s256, %s256
                  %s289 = sphi %s252, %s252
                $region62: #{upsample_forward.1} parent=58 // loop_header_branch
                  %286 = sbr.rel (%p284) target = $region66
                $region63: #{upsample_forward.1} parent=58 // loop_body
                  %v290 = vld [vmem:[%s288] sm:$0xff]
                  %291 = vst [vmem:[%s289] sm:$0xff] %v290
                  %v292 = vld [vmem:[%s288 + $0x18] sm:$0xff]
                  %293 = vst [vmem:[%s289 + $0x8] sm:$0xff] %v292
                  %v294 = vld [vmem:[%s288 + $0x30] sm:$0xff]
                  %295 = vst [vmem:[%s289 + $0x10] sm:$0xff] %v294
                  %v296 = vld [vmem:[%s288 + $0x48] sm:$0xff]
                  %297 = vst [vmem:[%s289 + $0x18] sm:$0xff] %v296
                $region64: #{upsample_forward.1} parent=58 // loop_footer
                  %s287 = sadd.s32 1, %s283
                $region65: #{upsample_forward.1} parent=58 // loop_footer_branch
                  %282 = sbr.rel target = $region61
                $region66: #{upsample_forward.1} parent=58 // loop_exit
                  _
              $region59: #{upsample_forward.1} parent=43 // pred_fallthru
                _
              // Predicated region
              $region67: #{upsample_forward.1} parent=43 // pred_check
                _
              $region68: #{upsample_forward.1} parent=43 // pred_check_branch
                %299 = sbr.rel target = $region70
              $region69: #{upsample_forward.1} parent=43 // pred_region
                _
              $region70: #{upsample_forward.1} parent=43 // pred_fallthru
                _
            $region44: #{upsample_forward.1} parent=39 // pred_fallthru
              _
            // Predicated region
            $region45: #{upsample_forward.1} parent=39 // pred_check
              _
            $region46: #{upsample_forward.1} parent=39 // pred_check_branch
              %262 = sbr.rel target = $region48
            $region47: #{upsample_forward.1} parent=39 // pred_region
              loop: start=0, step=1, limit=1
              $region49: #{upsample_forward.1} parent=47 // loop_pre_header
                _
              $region50: #{upsample_forward.1} parent=47 // loop_header
                %s265 = sphi 0, %s269
                %p266 = scmp.ge.s32.totalorder %s265, 1
                %s270 = sphi %s256, %s256
                %s271 = sphi %s252, %s252
              $region51: #{upsample_forward.1} parent=47 // loop_header_branch
                %268 = sbr.rel (%p266) target = $region55
              $region52: #{upsample_forward.1} parent=47 // loop_body
                %v272 = vld [vmem:[%s270] sm:$0xff]
                %273 = vst [vmem:[%s271] sm:$0xff] %v272
                %v274 = vld [vmem:[%s270 + $0x18] sm:$0xff]
                %275 = vst [vmem:[%s271 + $0x8] sm:$0xff] %v274
                %v276 = vld [vmem:[%s270 + $0x30] sm:$0xff]
                %277 = vst [vmem:[%s271 + $0x10] sm:$0xff] %v276
                %v278 = vld [vmem:[%s270 + $0x48] sm:$0xff]
                %279 = vst [vmem:[%s271 + $0x18] sm:$0xff] %v278
              $region53: #{upsample_forward.1} parent=47 // loop_footer
                %s269 = sadd.s32 1, %s265
              $region54: #{upsample_forward.1} parent=47 // loop_footer_branch
                %264 = sbr.rel target = $region50
              $region55: #{upsample_forward.1} parent=47 // loop_exit
                _
            $region48: #{upsample_forward.1} parent=39 // pred_fallthru
              _
          $region40: #{upsample_forward.1} parent=35 // pred_fallthru
            _
          %300 = vnop
        $region36: #{upsample_forward.1} parent=31 // pred_fallthru
          _
        // Predicated region
        $region71: #{upsample_forward.1} parent=31 // pred_check
          %p301 = pneg %p81
        $region72: #{upsample_forward.1} parent=31 // pred_check_branch
          %303 = sbr.rel (%p301) target = $region74
        $region73: #{upsample_forward.1} parent=31 // pred_region
          %s304 = sand.u32 %s71, 1
          %s305 = sand.u32 %s71, 1
          %s306 = smul.addr %s305, 32
          %s307 = scalar_lea.vmem [#allocation4], %s306
          %s308 = sadd.s32 %s25, 1
          %s309 = smul.addr %s24, 12
          %s310 = sadd.s32 %s308, %s309
          %s311 = smul.addr %s310, 8
          %s312 = scalar_lea.vmem %s1, %s311
          // Predicated region
          $region75: #{upsample_forward.1} parent=73 // pred_check
            _
          $region76: #{upsample_forward.1} parent=73 // pred_check_branch
            %314 = sbr.rel (0) target = $region78
          $region77: #{upsample_forward.1} parent=73 // pred_region
            // Predicated region
            $region79: #{upsample_forward.1} parent=77 // pred_check
              _
            $region80: #{upsample_forward.1} parent=77 // pred_check_branch
              %316 = sbr.rel (0) target = $region82
            $region81: #{upsample_forward.1} parent=77 // pred_region
              // Predicated region
              $region94: #{upsample_forward.1} parent=81 // pred_check
                _
              $region95: #{upsample_forward.1} parent=81 // pred_check_branch
                %337 = sbr.rel (0) target = $region97
              $region96: #{upsample_forward.1} parent=81 // pred_region
                loop: start=0, step=1, limit=1
                $region98: #{upsample_forward.1} parent=96 // loop_pre_header
                  _
                $region99: #{upsample_forward.1} parent=96 // loop_header
                  %s339 = sphi 0, %s343
                  %p340 = scmp.ge.s32.totalorder %s339, 1
                  %s344 = sphi %s312, %s312
                  %s345 = sphi %s307, %s307
                $region100: #{upsample_forward.1} parent=96 // loop_header_branch
                  %342 = sbr.rel (%p340) target = $region104
                $region101: #{upsample_forward.1} parent=96 // loop_body
                  %v346 = vld [vmem:[%s344] sm:$0xff]
                  %347 = vst [vmem:[%s345] sm:$0xff] %v346
                  %v348 = vld [vmem:[%s344 + $0x18] sm:$0xff]
                  %349 = vst [vmem:[%s345 + $0x8] sm:$0xff] %v348
                  %v350 = vld [vmem:[%s344 + $0x30] sm:$0xff]
                  %351 = vst [vmem:[%s345 + $0x10] sm:$0xff] %v350
                  %v352 = vld [vmem:[%s344 + $0x48] sm:$0xff]
                  %353 = vst [vmem:[%s345 + $0x18] sm:$0xff] %v352
                $region102: #{upsample_forward.1} parent=96 // loop_footer
                  %s343 = sadd.s32 1, %s339
                $region103: #{upsample_forward.1} parent=96 // loop_footer_branch
                  %338 = sbr.rel target = $region99
                $region104: #{upsample_forward.1} parent=96 // loop_exit
                  _
              $region97: #{upsample_forward.1} parent=81 // pred_fallthru
                _
              // Predicated region
              $region105: #{upsample_forward.1} parent=81 // pred_check
                _
              $region106: #{upsample_forward.1} parent=81 // pred_check_branch
                %355 = sbr.rel target = $region108
              $region107: #{upsample_forward.1} parent=81 // pred_region
                _
              $region108: #{upsample_forward.1} parent=81 // pred_fallthru
                _
            $region82: #{upsample_forward.1} parent=77 // pred_fallthru
              _
            // Predicated region
            $region83: #{upsample_forward.1} parent=77 // pred_check
              _
            $region84: #{upsample_forward.1} parent=77 // pred_check_branch
              %318 = sbr.rel target = $region86
            $region85: #{upsample_forward.1} parent=77 // pred_region
              loop: start=0, step=1, limit=1
              $region87: #{upsample_forward.1} parent=85 // loop_pre_header
                _
              $region88: #{upsample_forward.1} parent=85 // loop_header
                %s321 = sphi 0, %s325
                %p322 = scmp.ge.s32.totalorder %s321, 1
                %s326 = sphi %s312, %s312
                %s327 = sphi %s307, %s307
              $region89: #{upsample_forward.1} parent=85 // loop_header_branch
                %324 = sbr.rel (%p322) target = $region93
              $region90: #{upsample_forward.1} parent=85 // loop_body
                %v328 = vld [vmem:[%s326] sm:$0xff]
                %329 = vst [vmem:[%s327] sm:$0xff] %v328
                %v330 = vld [vmem:[%s326 + $0x18] sm:$0xff]
                %331 = vst [vmem:[%s327 + $0x8] sm:$0xff] %v330
                %v332 = vld [vmem:[%s326 + $0x30] sm:$0xff]
                %333 = vst [vmem:[%s327 + $0x10] sm:$0xff] %v332
                %v334 = vld [vmem:[%s326 + $0x48] sm:$0xff]
                %335 = vst [vmem:[%s327 + $0x18] sm:$0xff] %v334
              $region91: #{upsample_forward.1} parent=85 // loop_footer
                %s325 = sadd.s32 1, %s321
              $region92: #{upsample_forward.1} parent=85 // loop_footer_branch
                %320 = sbr.rel target = $region88
              $region93: #{upsample_forward.1} parent=85 // loop_exit
                _
            $region86: #{upsample_forward.1} parent=77 // pred_fallthru
              _
          $region78: #{upsample_forward.1} parent=73 // pred_fallthru
            _
          %356 = vnop
        $region74: #{upsample_forward.1} parent=31 // pred_fallthru
          _
      $region32: #{upsample_forward.1} parent=5 // pred_fallthru
        _
      %p357 = scmp.le.s32.totalorder 1, %s17
      %p358 = scmp.lt.s32.totalorder %s17, 5
      %p359 = pnand %p357, %p358
      %p360 = pneg %p359
      // Predicated region
      $region109: #{upsample_forward.1} parent=5 // pred_check
        _
      $region110: #{upsample_forward.1} parent=5 // pred_check_branch
        %362 = sbr.rel (%p359) target = $region112
      $region111: #{upsample_forward.1} parent=5 // pred_region
        %s363 = ssub.s32 %s17, 1
        %s364 = sand.u32 %s44, 1
        %s365 = sand.u32 %s44, 1
        %s366 = smul.addr %s365, 32
        %s367 = scalar_lea.vmem [#allocation3], %s366
        // Predicated region
        $region113: #{upsample_forward.1} parent=111 // pred_check
          %p368 = pneg %p57
        $region114: #{upsample_forward.1} parent=111 // pred_check_branch
          %370 = sbr.rel (%p368) target = $region116
        $region115: #{upsample_forward.1} parent=111 // pred_region
          _
        $region116: #{upsample_forward.1} parent=111 // pred_fallthru
          _
        %s371 = sand.u32 %s74, 1
        %s372 = sand.u32 %s74, 1
        %s373 = smul.addr %s372, 32
        %s374 = scalar_lea.vmem [#allocation4], %s373
        // Predicated region
        $region117: #{upsample_forward.1} parent=111 // pred_check
          %p375 = pneg %p87
        $region118: #{upsample_forward.1} parent=111 // pred_check_branch
          %377 = sbr.rel (%p375) target = $region120
        $region119: #{upsample_forward.1} parent=111 // pred_region
          _
        $region120: #{upsample_forward.1} parent=111 // pred_fallthru
          _
        // Predicated region
        $region121: #{upsample_forward.1} parent=111 // pred_check
          %p378 = pneg %p150
        $region122: #{upsample_forward.1} parent=111 // pred_check_branch
          %380 = sbr.rel (%p378) target = $region124
        $region123: #{upsample_forward.1} parent=111 // pred_region
          %381 = dma.done [#allocation7], 32
        $region124: #{upsample_forward.1} parent=111 // pred_fallthru
          _
        // Predicated region
        $region125: #{upsample_forward.1} parent=111 // pred_check
          %p382 = pneg %p171
        $region126: #{upsample_forward.1} parent=111 // pred_check_branch
          %384 = sbr.rel (%p382) target = $region128
        $region127: #{upsample_forward.1} parent=111 // pred_region
          %385 = dma.done [#allocation9], 16
        $region128: #{upsample_forward.1} parent=111 // pred_fallthru
          _
        %386 = sfence
        %s387 = sand.u32 %s44, 1
        %s388 = sand.u32 %s44, 1
        %s389 = smul.addr %s388, 32
        %s390 = scalar_lea.vmem [#allocation3], %s389
        %p391 = pneg %p57
        %p392 = pneg %p54
        %s393 = sand.u32 %s74, 1
        %s394 = sand.u32 %s74, 1
        %s395 = smul.addr %s394, 32
        %s396 = scalar_lea.vmem [#allocation4], %s395
        %p397 = pneg %p87
        %p398 = pneg %p84
        %p399 = pneg %p108
        %p400 = pneg %p105
        %p401 = pneg %p129
        %p402 = pneg %p126
        %p403 = pneg %p150
        %p404 = pneg %p147
        %p405 = pneg %p171
        %p406 = pneg %p168
        %p407 = pneg %p199
        %p408 = pneg %p196
        %s409 = sand.u32 %s186, 1
        %s410 = scalar_lea.sflag [#allocation6], %s409
        %s411 = sand.u32 %s186, 1
        %s412 = smul.addr %s411, 64
        %s413 = scalar_lea.vmem [#allocation10], %s412
        %s414 = sadd.s32 %s27, 1
        %s415 = smul.u32 2, %s27
        %v416 = vld [vmem:[%s367] sm:$0xff]
        %v417 = vld [vmem:[%s367 + $0x8] sm:$0xff]
        %v418 = vld [vmem:[%s367 + $0x10] sm:$0xff]
        %v419 = vld [vmem:[%s367 + $0x18] sm:$0xff]
        %vm420 = vcmask 130048
        %421 = vst.msk [vmem:[#allocation2] sm:$0xff] %vm420, %v416
        %422 = vst.msk [vmem:[#allocation2 + $0x10] sm:$0xff] %vm420, %v417
        %423 = vst.msk [vmem:[#allocation2 + $0x20] sm:$0xff] %vm420, %v418
        %424 = vst.msk [vmem:[#allocation2 + $0x30] sm:$0xff] %vm420, %v419
        %v425 = vld [vmem:[%s374] sm:$0x3]
        %v426 = vld [vmem:[%s374 + $0x8] sm:$0x3]
        %v427 = vld [vmem:[%s374 + $0x10] sm:$0x3]
        %v428 = vld [vmem:[%s374 + $0x18] sm:$0x3]
        %vm429 = vcmask 123904
        %430 = vst.msk [vmem:[#allocation2 + $0x8] sm:$0x3] %vm429, %v425
        %431 = vst.msk [vmem:[#allocation2 + $0x18] sm:$0x3] %vm429, %v426
        %432 = vst.msk [vmem:[#allocation2 + $0x28] sm:$0x3] %vm429, %v427
        %433 = vst.msk [vmem:[#allocation2 + $0x38] sm:$0x3] %vm429, %v428
        %v434 = vld [vmem:[#allocation2] sm:$0xff]
        %v435 = vld [vmem:[#allocation2 + $0x8] sm:$0x3]
        %v436 = vld [vmem:[%s2] sm:$0xff]
        %v437 = vld [vmem:[%s2 + $0x8] sm:$0xff]
        %v439 = vsel %vm420, %v434, 0
        %v442 = vsel %vm420, %v435, 0
        %444 = vmatprep.subr.mxu0 0.0
        %445 = vmatpush1.msra.mxu0 %v436
        %446 = vmatprep.subr.mxu0 0.0
        %447 = vmatpush1.msra.mxu0 %v437
        %448 = vmatprep.subr.mxu0 0.0
        %449 = vmatpush1.msra.mxu0 0.0
        %450 = vmatprep.subr.mxu0 0.0
        %451 = vmatpush1.msra.mxu0 0.0
        %452 = vmatprep.subr.mxu0 0.0
        %453 = vmatpush1.msra.mxu0 0.0
        %454 = vmatprep.subr.mxu0 0.0
        %455 = vmatpush1.msra.mxu0 0.0
        %456 = vmatprep.subr.mxu0 0.0
        %457 = vmatpush1.msra.mxu0 0.0
        %458 = vmatprep.subr.mxu0 0.0
        %459 = vmatpush1.msra.mxu0 0.0
        %460 = vmatprep.subr.mxu0 0.0
        %461 = vmatpush1.msra.mxu0 0.0
        %462 = vmatprep.subr.mxu0 0.0
        %463 = vmatpush1.msra.mxu0 0.0
        %464 = vmatprep.subr.mxu0 0.0
        %465 = vmatpush1.msra.mxu0 0.0
        %466 = vmatprep.subr.mxu0 0.0
        %467 = vmatpush1.msra.mxu0 0.0
        %468 = vmatprep.subr.mxu0 0.0
        %469 = vmatpush1.msra.mxu0 0.0
        %470 = vmatprep.subr.mxu0 0.0
        %471 = vmatpush1.msra.mxu0 0.0
        %472 = vmatprep.subr.mxu0 0.0
        %473 = vmatpush1.msra.mxu0 0.0
        %474 = vmatprep.subr.mxu0 0.0
        %475 = vmatpush1.msra.mxu0 0.0
        %476 = vmatprep.subr.mxu0 0.0
        %477 = vmatpush1.msra.mxu0 0.0
        %478 = vmatprep.subr.mxu0 0.0
        %479 = vmatpush1.msra.mxu0 0.0
        %480 = vmatprep.subr.mxu0 0.0
        %481 = vmatpush1.msra.mxu0 0.0
        %482 = vmatprep.subr.mxu0 0.0
        %483 = vmatpush1.msra.mxu0 0.0
        %484 = vmatprep.subr.mxu0 0.0
        %485 = vmatpush1.msra.mxu0 0.0
        %486 = vmatprep.subr.mxu0 0.0
        %487 = vmatpush1.msra.mxu0 0.0
        %488 = vmatprep.subr.mxu0 0.0
        %489 = vmatpush1.msra.mxu0 0.0
        %490 = vmatprep.subr.mxu0 0.0
        %491 = vmatpush1.msra.mxu0 0.0
        %492 = vmatprep.subr.mxu0 0.0
        %493 = vmatpush1.msra.mxu0 0.0
        %494 = vmatprep.subr.mxu0 0.0
        %495 = vmatpush1.msra.mxu0 0.0
        %496 = vmatprep.subr.mxu0 0.0
        %497 = vmatpush1.msra.mxu0 0.0
        %498 = vmatprep.subr.mxu0 0.0
        %499 = vmatpush1.msra.mxu0 0.0
        %500 = vmatprep.subr.mxu0 0.0
        %501 = vmatpush1.msra.mxu0 0.0
        %502 = vmatprep.subr.mxu0 0.0
        %503 = vmatpush1.msra.mxu0 0.0
        %504 = vmatprep.subr.mxu0 0.0
        %505 = vmatpush1.msra.mxu0 0.0
        %506 = vmatprep.subr.mxu0 0.0
        %507 = vmatpush1.msra.mxu0 0.0
        %508 = vmatprep.mubr.f32.mxu0 0.0
        %509 = vmatmul.mubr.f32.gmra.mrb[0].mxu0 %v439
        %v510 = vpop.f32.mrb[0].mxu0
        %v511 = vadd.f32 0.0, %v510
        %v512 = vpop.f32.mrb[0].mxu0
        %513 = vmatprep.mubr.f32.mxu0 0.0
        %514 = vmatmul.mubr.f32.gmra.mrb[0].mxu0 %v442
        %v515 = vpop.f32.mrb[0].mxu0
        %v516 = vadd.f32 0.0, %v515
        %v517 = vpop.f32.mrb[0].mxu0
        %518 = vdwg.mxu0
        %s519 = scalar_lea.vmem %s2, 16
        %v520 = vld [vmem:[%s519] sm:$0xff]
        %v521 = vld [vmem:[%s519 + $0x8] sm:$0xff]
        %522 = vmatprep.subr.mxu0 0.0
        %523 = vmatpush1.msra.mxu0 %v520
        %524 = vmatprep.subr.mxu0 0.0
        %525 = vmatpush1.msra.mxu0 %v521
        %526 = vmatprep.subr.mxu0 0.0
        %527 = vmatpush1.msra.mxu0 0.0
        %528 = vmatprep.subr.mxu0 0.0
        %529 = vmatpush1.msra.mxu0 0.0
        %530 = vmatprep.subr.mxu0 0.0
        %531 = vmatpush1.msra.mxu0 0.0
        %532 = vmatprep.subr.mxu0 0.0
        %533 = vmatpush1.msra.mxu0 0.0
        %534 = vmatprep.subr.mxu0 0.0
        %535 = vmatpush1.msra.mxu0 0.0
        %536 = vmatprep.subr.mxu0 0.0
        %537 = vmatpush1.msra.mxu0 0.0
        %538 = vmatprep.subr.mxu0 0.0
        %539 = vmatpush1.msra.mxu0 0.0
        %540 = vmatprep.subr.mxu0 0.0
        %541 = vmatpush1.msra.mxu0 0.0
        %542 = vmatprep.subr.mxu0 0.0
        %543 = vmatpush1.msra.mxu0 0.0
        %544 = vmatprep.subr.mxu0 0.0
        %545 = vmatpush1.msra.mxu0 0.0
        %546 = vmatprep.subr.mxu0 0.0
        %547 = vmatpush1.msra.mxu0 0.0
        %548 = vmatprep.subr.mxu0 0.0
        %549 = vmatpush1.msra.mxu0 0.0
        %550 = vmatprep.subr.mxu0 0.0
        %551 = vmatpush1.msra.mxu0 0.0
        %552 = vmatprep.subr.mxu0 0.0
        %553 = vmatpush1.msra.mxu0 0.0
        %554 = vmatprep.subr.mxu0 0.0
        %555 = vmatpush1.msra.mxu0 0.0
        %556 = vmatprep.subr.mxu0 0.0
        %557 = vmatpush1.msra.mxu0 0.0
        %558 = vmatprep.subr.mxu0 0.0
        %559 = vmatpush1.msra.mxu0 0.0
        %560 = vmatprep.subr.mxu0 0.0
        %561 = vmatpush1.msra.mxu0 0.0
        %562 = vmatprep.subr.mxu0 0.0
        %563 = vmatpush1.msra.mxu0 0.0
        %564 = vmatprep.subr.mxu0 0.0
        %565 = vmatpush1.msra.mxu0 0.0
        %566 = vmatprep.subr.mxu0 0.0
        %567 = vmatpush1.msra.mxu0 0.0
        %568 = vmatprep.subr.mxu0 0.0
        %569 = vmatpush1.msra.mxu0 0.0
        %570 = vmatprep.subr.mxu0 0.0
        %571 = vmatpush1.msra.mxu0 0.0
        %572 = vmatprep.subr.mxu0 0.0
        %573 = vmatpush1.msra.mxu0 0.0
        %574 = vmatprep.subr.mxu0 0.0
        %575 = vmatpush1.msra.mxu0 0.0
        %576 = vmatprep.subr.mxu0 0.0
        %577 = vmatpush1.msra.mxu0 0.0
        %578 = vmatprep.subr.mxu0 0.0
        %579 = vmatpush1.msra.mxu0 0.0
        %580 = vmatprep.subr.mxu0 0.0
        %581 = vmatpush1.msra.mxu0 0.0
        %582 = vmatprep.subr.mxu0 0.0
        %583 = vmatpush1.msra.mxu0 0.0
        %584 = vmatprep.subr.mxu0 0.0
        %585 = vmatpush1.msra.mxu0 0.0
        %586 = vmatprep.mubr.f32.mxu0 0.0
        %587 = vmatmul.mubr.f32.gmra.mrb[0].mxu0 %v439
        %v588 = vpop.f32.mrb[0].mxu0
        %v589 = vadd.f32 0.0, %v588
        %v590 = vpop.f32.mrb[0].mxu0
        %591 = vmatprep.mubr.f32.mxu0 0.0
        %592 = vmatmul.mubr.f32.gmra.mrb[0].mxu0 %v442
        %v593 = vpop.f32.mrb[0].mxu0
        %v594 = vadd.f32 0.0, %v593
        %v595 = vpop.f32.mrb[0].mxu0
        %596 = vdwg.mxu0
        %s597 = scalar_lea.vmem %s2, 32
        %v598 = vld [vmem:[%s597] sm:$0xff]
        %v599 = vld [vmem:[%s597 + $0x8] sm:$0xff]
        %600 = vmatprep.subr.mxu0 0.0
        %601 = vmatpush1.msra.mxu0 %v598
        %602 = vmatprep.subr.mxu0 0.0
        %603 = vmatpush1.msra.mxu0 %v599
        %604 = vmatprep.subr.mxu0 0.0
        %605 = vmatpush1.msra.mxu0 0.0
        %606 = vmatprep.subr.mxu0 0.0
        %607 = vmatpush1.msra.mxu0 0.0
        %608 = vmatprep.subr.mxu0 0.0
        %609 = vmatpush1.msra.mxu0 0.0
        %610 = vmatprep.subr.mxu0 0.0
        %611 = vmatpush1.msra.mxu0 0.0
        %612 = vmatprep.subr.mxu0 0.0
        %613 = vmatpush1.msra.mxu0 0.0
        %614 = vmatprep.subr.mxu0 0.0
        %615 = vmatpush1.msra.mxu0 0.0
        %616 = vmatprep.subr.mxu0 0.0
        %617 = vmatpush1.msra.mxu0 0.0
        %618 = vmatprep.subr.mxu0 0.0
        %619 = vmatpush1.msra.mxu0 0.0
        %620 = vmatprep.subr.mxu0 0.0
        %621 = vmatpush1.msra.mxu0 0.0
        %622 = vmatprep.subr.mxu0 0.0
        %623 = vmatpush1.msra.mxu0 0.0
        %624 = vmatprep.subr.mxu0 0.0
        %625 = vmatpush1.msra.mxu0 0.0
        %626 = vmatprep.subr.mxu0 0.0
        %627 = vmatpush1.msra.mxu0 0.0
        %628 = vmatprep.subr.mxu0 0.0
        %629 = vmatpush1.msra.mxu0 0.0
        %630 = vmatprep.subr.mxu0 0.0
        %631 = vmatpush1.msra.mxu0 0.0
        %632 = vmatprep.subr.mxu0 0.0
        %633 = vmatpush1.msra.mxu0 0.0
        %634 = vmatprep.subr.mxu0 0.0
        %635 = vmatpush1.msra.mxu0 0.0
        %636 = vmatprep.subr.mxu0 0.0
        %637 = vmatpush1.msra.mxu0 0.0
        %638 = vmatprep.subr.mxu0 0.0
        %639 = vmatpush1.msra.mxu0 0.0
        %640 = vmatprep.subr.mxu0 0.0
        %641 = vmatpush1.msra.mxu0 0.0
        %642 = vmatprep.subr.mxu0 0.0
        %643 = vmatpush1.msra.mxu0 0.0
        %644 = vmatprep.subr.mxu0 0.0
        %645 = vmatpush1.msra.mxu0 0.0
        %646 = vmatprep.subr.mxu0 0.0
        %647 = vmatpush1.msra.mxu0 0.0
        %648 = vmatprep.subr.mxu0 0.0
        %649 = vmatpush1.msra.mxu0 0.0
        %650 = vmatprep.subr.mxu0 0.0
        %651 = vmatpush1.msra.mxu0 0.0
        %652 = vmatprep.subr.mxu0 0.0
        %653 = vmatpush1.msra.mxu0 0.0
        %654 = vmatprep.subr.mxu0 0.0
        %655 = vmatpush1.msra.mxu0 0.0
        %656 = vmatprep.subr.mxu0 0.0
        %657 = vmatpush1.msra.mxu0 0.0
        %658 = vmatprep.subr.mxu0 0.0
        %659 = vmatpush1.msra.mxu0 0.0
        %660 = vmatprep.subr.mxu0 0.0
        %661 = vmatpush1.msra.mxu0 0.0
        %662 = vmatprep.subr.mxu0 0.0
        %663 = vmatpush1.msra.mxu0 0.0
        %664 = vmatprep.mubr.f32.mxu0 0.0
        %665 = vmatmul.mubr.f32.gmra.mrb[0].mxu0 %v439
        %v666 = vpop.f32.mrb[0].mxu0
        %v667 = vadd.f32 0.0, %v666
        %v668 = vpop.f32.mrb[0].mxu0
        %669 = vmatprep.mubr.f32.mxu0 0.0
        %670 = vmatmul.mubr.f32.gmra.mrb[0].mxu0 %v442
        %v671 = vpop.f32.mrb[0].mxu0
        %v672 = vadd.f32 0.0, %v671
        %v673 = vpop.f32.mrb[0].mxu0
        %674 = vdwg.mxu0
        %s675 = scalar_lea.vmem [#allocation2], 16
        %v676 = vld [vmem:[%s675] sm:$0xff]
        %v677 = vld [vmem:[%s675 + $0x8] sm:$0x3]
        %v679 = vsel %vm420, %v676, 0
        %v682 = vsel %vm420, %v677, 0
        %684 = vmatprep.subr.mxu0 0.0
        %685 = vmatpush1.msra.mxu0 %v436
        %686 = vmatprep.subr.mxu0 0.0
        %687 = vmatpush1.msra.mxu0 %v437
        %688 = vmatprep.subr.mxu0 0.0
        %689 = vmatpush1.msra.mxu0 0.0
        %690 = vmatprep.subr.mxu0 0.0
        %691 = vmatpush1.msra.mxu0 0.0
        %692 = vmatprep.subr.mxu0 0.0
        %693 = vmatpush1.msra.mxu0 0.0
        %694 = vmatprep.subr.mxu0 0.0
        %695 = vmatpush1.msra.mxu0 0.0
        %696 = vmatprep.subr.mxu0 0.0
        %697 = vmatpush1.msra.mxu0 0.0
        %698 = vmatprep.subr.mxu0 0.0
        %699 = vmatpush1.msra.mxu0 0.0
        %700 = vmatprep.subr.mxu0 0.0
        %701 = vmatpush1.msra.mxu0 0.0
        %702 = vmatprep.subr.mxu0 0.0
        %703 = vmatpush1.msra.mxu0 0.0
        %704 = vmatprep.subr.mxu0 0.0
        %705 = vmatpush1.msra.mxu0 0.0
        %706 = vmatprep.subr.mxu0 0.0
        %707 = vmatpush1.msra.mxu0 0.0
        %708 = vmatprep.subr.mxu0 0.0
        %709 = vmatpush1.msra.mxu0 0.0
        %710 = vmatprep.subr.mxu0 0.0
        %711 = vmatpush1.msra.mxu0 0.0
        %712 = vmatprep.subr.mxu0 0.0
        %713 = vmatpush1.msra.mxu0 0.0
        %714 = vmatprep.subr.mxu0 0.0
        %715 = vmatpush1.msra.mxu0 0.0
        %716 = vmatprep.subr.mxu0 0.0
        %717 = vmatpush1.msra.mxu0 0.0
        %718 = vmatprep.subr.mxu0 0.0
        %719 = vmatpush1.msra.mxu0 0.0
        %720 = vmatprep.subr.mxu0 0.0
        %721 = vmatpush1.msra.mxu0 0.0
        %722 = vmatprep.subr.mxu0 0.0
        %723 = vmatpush1.msra.mxu0 0.0
        %724 = vmatprep.subr.mxu0 0.0
        %725 = vmatpush1.msra.mxu0 0.0
        %726 = vmatprep.subr.mxu0 0.0
        %727 = vmatpush1.msra.mxu0 0.0
        %728 = vmatprep.subr.mxu0 0.0
        %729 = vmatpush1.msra.mxu0 0.0
        %730 = vmatprep.subr.mxu0 0.0
        %731 = vmatpush1.msra.mxu0 0.0
        %732 = vmatprep.subr.mxu0 0.0
        %733 = vmatpush1.msra.mxu0 0.0
        %734 = vmatprep.subr.mxu0 0.0
        %735 = vmatpush1.msra.mxu0 0.0
        %736 = vmatprep.subr.mxu0 0.0
        %737 = vmatpush1.msra.mxu0 0.0
        %738 = vmatprep.subr.mxu0 0.0
        %739 = vmatpush1.msra.mxu0 0.0
        %740 = vmatprep.subr.mxu0 0.0
        %741 = vmatpush1.msra.mxu0 0.0
        %742 = vmatprep.subr.mxu0 0.0
        %743 = vmatpush1.msra.mxu0 0.0
        %744 = vmatprep.subr.mxu0 0.0
        %745 = vmatpush1.msra.mxu0 0.0
        %746 = vmatprep.subr.mxu0 0.0
        %747 = vmatpush1.msra.mxu0 0.0
        %748 = vmatprep.mubr.f32.mxu0 0.0
        %749 = vmatmul.mubr.f32.gmra.mrb[0].mxu0 %v679
        %v750 = vpop.f32.mrb[0].mxu0
        %v751 = vadd.f32 0.0, %v750
        %v752 = vpop.f32.mrb[0].mxu0
        %753 = vmatprep.mubr.f32.mxu0 0.0
        %754 = vmatmul.mubr.f32.gmra.mrb[0].mxu0 %v682
        %v755 = vpop.f32.mrb[0].mxu0
        %v756 = vadd.f32 0.0, %v755
        %v757 = vpop.f32.mrb[0].mxu0
        %758 = vdwg.mxu0
        %759 = vmatprep.subr.mxu0 0.0
        %760 = vmatpush1.msra.mxu0 %v520
        %761 = vmatprep.subr.mxu0 0.0
        %762 = vmatpush1.msra.mxu0 %v521
        %763 = vmatprep.subr.mxu0 0.0
        %764 = vmatpush1.msra.mxu0 0.0
        %765 = vmatprep.subr.mxu0 0.0
        %766 = vmatpush1.msra.mxu0 0.0
        %767 = vmatprep.subr.mxu0 0.0
        %768 = vmatpush1.msra.mxu0 0.0
        %769 = vmatprep.subr.mxu0 0.0
        %770 = vmatpush1.msra.mxu0 0.0
        %771 = vmatprep.subr.mxu0 0.0
        %772 = vmatpush1.msra.mxu0 0.0
        %773 = vmatprep.subr.mxu0 0.0
        %774 = vmatpush1.msra.mxu0 0.0
        %775 = vmatprep.subr.mxu0 0.0
        %776 = vmatpush1.msra.mxu0 0.0
        %777 = vmatprep.subr.mxu0 0.0
        %778 = vmatpush1.msra.mxu0 0.0
        %779 = vmatprep.subr.mxu0 0.0
        %780 = vmatpush1.msra.mxu0 0.0
        %781 = vmatprep.subr.mxu0 0.0
        %782 = vmatpush1.msra.mxu0 0.0
        %783 = vmatprep.subr.mxu0 0.0
        %784 = vmatpush1.msra.mxu0 0.0
        %785 = vmatprep.subr.mxu0 0.0
        %786 = vmatpush1.msra.mxu0 0.0
        %787 = vmatprep.subr.mxu0 0.0
        %788 = vmatpush1.msra.mxu0 0.0
        %789 = vmatprep.subr.mxu0 0.0
        %790 = vmatpush1.msra.mxu0 0.0
        %791 = vmatprep.subr.mxu0 0.0
        %792 = vmatpush1.msra.mxu0 0.0
        %793 = vmatprep.subr.mxu0 0.0
        %794 = vmatpush1.msra.mxu0 0.0
        %795 = vmatprep.subr.mxu0 0.0
        %796 = vmatpush1.msra.mxu0 0.0
        %797 = vmatprep.subr.mxu0 0.0
        %798 = vmatpush1.msra.mxu0 0.0
        %799 = vmatprep.subr.mxu0 0.0
        %800 = vmatpush1.msra.mxu0 0.0
        %801 = vmatprep.subr.mxu0 0.0
        %802 = vmatpush1.msra.mxu0 0.0
        %803 = vmatprep.subr.mxu0 0.0
        %804 = vmatpush1.msra.mxu0 0.0
        %805 = vmatprep.subr.mxu0 0.0
        %806 = vmatpush1.msra.mxu0 0.0
        %807 = vmatprep.subr.mxu0 0.0
        %808 = vmatpush1.msra.mxu0 0.0
        %809 = vmatprep.subr.mxu0 0.0
        %810 = vmatpush1.msra.mxu0 0.0
        %811 = vmatprep.subr.mxu0 0.0
        %812 = vmatpush1.msra.mxu0 0.0
        %813 = vmatprep.subr.mxu0 0.0
        %814 = vmatpush1.msra.mxu0 0.0
        %815 = vmatprep.subr.mxu0 0.0
        %816 = vmatpush1.msra.mxu0 0.0
        %817 = vmatprep.subr.mxu0 0.0
        %818 = vmatpush1.msra.mxu0 0.0
        %819 = vmatprep.subr.mxu0 0.0
        %820 = vmatpush1.msra.mxu0 0.0
        %821 = vmatprep.subr.mxu0 0.0
        %822 = vmatpush1.msra.mxu0 0.0
        %823 = vmatprep.mubr.f32.mxu0 0.0
        %824 = vmatmul.mubr.f32.gmra.mrb[0].mxu0 %v679
        %v825 = vpop.f32.mrb[0].mxu0
        %v826 = vadd.f32 0.0, %v825
        %v827 = vpop.f32.mrb[0].mxu0
        %828 = vmatprep.mubr.f32.mxu0 0.0
        %829 = vmatmul.mubr.f32.gmra.mrb[0].mxu0 %v682
        %v830 = vpop.f32.mrb[0].mxu0
        %v831 = vadd.f32 0.0, %v830
        %v832 = vpop.f32.mrb[0].mxu0
        %833 = vdwg.mxu0
        %834 = vmatprep.subr.mxu0 0.0
        %835 = vmatpush1.msra.mxu0 %v598
        %836 = vmatprep.subr.mxu0 0.0
        %837 = vmatpush1.msra.mxu0 %v599
        %838 = vmatprep.subr.mxu0 0.0
        %839 = vmatpush1.msra.mxu0 0.0
        %840 = vmatprep.subr.mxu0 0.0
        %841 = vmatpush1.msra.mxu0 0.0
        %842 = vmatprep.subr.mxu0 0.0
        %843 = vmatpush1.msra.mxu0 0.0
        %844 = vmatprep.subr.mxu0 0.0
        %845 = vmatpush1.msra.mxu0 0.0
        %846 = vmatprep.subr.mxu0 0.0
        %847 = vmatpush1.msra.mxu0 0.0
        %848 = vmatprep.subr.mxu0 0.0
        %849 = vmatpush1.msra.mxu0 0.0
        %850 = vmatprep.subr.mxu0 0.0
        %851 = vmatpush1.msra.mxu0 0.0
        %852 = vmatprep.subr.mxu0 0.0
        %853 = vmatpush1.msra.mxu0 0.0
        %854 = vmatprep.subr.mxu0 0.0
        %855 = vmatpush1.msra.mxu0 0.0
        %856 = vmatprep.subr.mxu0 0.0
        %857 = vmatpush1.msra.mxu0 0.0
        %858 = vmatprep.subr.mxu0 0.0
        %859 = vmatpush1.msra.mxu0 0.0
        %860 = vmatprep.subr.mxu0 0.0
        %861 = vmatpush1.msra.mxu0 0.0
        %862 = vmatprep.subr.mxu0 0.0
        %863 = vmatpush1.msra.mxu0 0.0
        %864 = vmatprep.subr.mxu0 0.0
        %865 = vmatpush1.msra.mxu0 0.0
        %866 = vmatprep.subr.mxu0 0.0
        %867 = vmatpush1.msra.mxu0 0.0
        %868 = vmatprep.subr.mxu0 0.0
        %869 = vmatpush1.msra.mxu0 0.0
        %870 = vmatprep.subr.mxu0 0.0
        %871 = vmatpush1.msra.mxu0 0.0
        %872 = vmatprep.subr.mxu0 0.0
        %873 = vmatpush1.msra.mxu0 0.0
        %874 = vmatprep.subr.mxu0 0.0
        %875 = vmatpush1.msra.mxu0 0.0
        %876 = vmatprep.subr.mxu0 0.0
        %877 = vmatpush1.msra.mxu0 0.0
        %878 = vmatprep.subr.mxu0 0.0
        %879 = vmatpush1.msra.mxu0 0.0
        %880 = vmatprep.subr.mxu0 0.0
        %881 = vmatpush1.msra.mxu0 0.0
        %882 = vmatprep.subr.mxu0 0.0
        %883 = vmatpush1.msra.mxu0 0.0
        %884 = vmatprep.subr.mxu0 0.0
        %885 = vmatpush1.msra.mxu0 0.0
        %886 = vmatprep.subr.mxu0 0.0
        %887 = vmatpush1.msra.mxu0 0.0
        %888 = vmatprep.subr.mxu0 0.0
        %889 = vmatpush1.msra.mxu0 0.0
        %890 = vmatprep.subr.mxu0 0.0
        %891 = vmatpush1.msra.mxu0 0.0
        %892 = vmatprep.subr.mxu0 0.0
        %893 = vmatpush1.msra.mxu0 0.0
        %894 = vmatprep.subr.mxu0 0.0
        %895 = vmatpush1.msra.mxu0 0.0
        %896 = vmatprep.subr.mxu0 0.0
        %897 = vmatpush1.msra.mxu0 0.0
        %898 = vmatprep.mubr.f32.mxu0 0.0
        %899 = vmatmul.mubr.f32.gmra.mrb[0].mxu0 %v679
        %v900 = vpop.f32.mrb[0].mxu0
        %v901 = vadd.f32 0.0, %v900
        %v902 = vpop.f32.mrb[0].mxu0
        %903 = vmatprep.mubr.f32.mxu0 0.0
        %904 = vmatmul.mubr.f32.gmra.mrb[0].mxu0 %v682
        %v905 = vpop.f32.mrb[0].mxu0
        %v906 = vadd.f32 0.0, %v905
        %v907 = vpop.f32.mrb[0].mxu0
        %908 = vdwg.mxu0
        %s909 = scalar_lea.vmem [#allocation2], 32
        %v910 = vld [vmem:[%s909] sm:$0xff]
        %v911 = vld [vmem:[%s909 + $0x8] sm:$0x3]
        %v913 = vsel %vm420, %v910, 0
        %v916 = vsel %vm420, %v911, 0
        %918 = vmatprep.subr.mxu0 0.0
        %919 = vmatpush1.msra.mxu0 %v436
        %920 = vmatprep.subr.mxu0 0.0
        %921 = vmatpush1.msra.mxu0 %v437
        %922 = vmatprep.subr.mxu0 0.0
        %923 = vmatpush1.msra.mxu0 0.0
        %924 = vmatprep.subr.mxu0 0.0
        %925 = vmatpush1.msra.mxu0 0.0
        %926 = vmatprep.subr.mxu0 0.0
        %927 = vmatpush1.msra.mxu0 0.0
        %928 = vmatprep.subr.mxu0 0.0
        %929 = vmatpush1.msra.mxu0 0.0
        %930 = vmatprep.subr.mxu0 0.0
        %931 = vmatpush1.msra.mxu0 0.0
        %932 = vmatprep.subr.mxu0 0.0
        %933 = vmatpush1.msra.mxu0 0.0
        %934 = vmatprep.subr.mxu0 0.0
        %935 = vmatpush1.msra.mxu0 0.0
        %936 = vmatprep.subr.mxu0 0.0
        %937 = vmatpush1.msra.mxu0 0.0
        %938 = vmatprep.subr.mxu0 0.0
        %939 = vmatpush1.msra.mxu0 0.0
        %940 = vmatprep.subr.mxu0 0.0
        %941 = vmatpush1.msra.mxu0 0.0
        %942 = vmatprep.subr.mxu0 0.0
        %943 = vmatpush1.msra.mxu0 0.0
        %944 = vmatprep.subr.mxu0 0.0
        %945 = vmatpush1.msra.mxu0 0.0
        %946 = vmatprep.subr.mxu0 0.0
        %947 = vmatpush1.msra.mxu0 0.0
        %948 = vmatprep.subr.mxu0 0.0
        %949 = vmatpush1.msra.mxu0 0.0
        %950 = vmatprep.subr.mxu0 0.0
        %951 = vmatpush1.msra.mxu0 0.0
        %952 = vmatprep.subr.mxu0 0.0
        %953 = vmatpush1.msra.mxu0 0.0
        %954 = vmatprep.subr.mxu0 0.0
        %955 = vmatpush1.msra.mxu0 0.0
        %956 = vmatprep.subr.mxu0 0.0
        %957 = vmatpush1.msra.mxu0 0.0
        %958 = vmatprep.subr.mxu0 0.0
        %959 = vmatpush1.msra.mxu0 0.0
        %960 = vmatprep.subr.mxu0 0.0
        %961 = vmatpush1.msra.mxu0 0.0
        %962 = vmatprep.subr.mxu0 0.0
        %963 = vmatpush1.msra.mxu0 0.0
        %964 = vmatprep.subr.mxu0 0.0
        %965 = vmatpush1.msra.mxu0 0.0
        %966 = vmatprep.subr.mxu0 0.0
        %967 = vmatpush1.msra.mxu0 0.0
        %968 = vmatprep.subr.mxu0 0.0
        %969 = vmatpush1.msra.mxu0 0.0
        %970 = vmatprep.subr.mxu0 0.0
        %971 = vmatpush1.msra.mxu0 0.0
        %972 = vmatprep.subr.mxu0 0.0
        %973 = vmatpush1.msra.mxu0 0.0
        %974 = vmatprep.subr.mxu0 0.0
        %975 = vmatpush1.msra.mxu0 0.0
        %976 = vmatprep.subr.mxu0 0.0
        %977 = vmatpush1.msra.mxu0 0.0
        %978 = vmatprep.subr.mxu0 0.0
        %979 = vmatpush1.msra.mxu0 0.0
        %980 = vmatprep.subr.mxu0 0.0
        %981 = vmatpush1.msra.mxu0 0.0
        %982 = vmatprep.mubr.f32.mxu0 0.0
        %983 = vmatmul.mubr.f32.gmra.mrb[0].mxu0 %v913
        %v984 = vpop.f32.mrb[0].mxu0
        %v985 = vadd.f32 0.0, %v984
        %v986 = vpop.f32.mrb[0].mxu0
        %987 = vmatprep.mubr.f32.mxu0 0.0
        %988 = vmatmul.mubr.f32.gmra.mrb[0].mxu0 %v916
        %v989 = vpop.f32.mrb[0].mxu0
        %v990 = vadd.f32 0.0, %v989
        %v991 = vpop.f32.mrb[0].mxu0
        %992 = vdwg.mxu0
        %993 = vmatprep.subr.mxu0 0.0
        %994 = vmatpush1.msra.mxu0 %v520
        %995 = vmatprep.subr.mxu0 0.0
        %996 = vmatpush1.msra.mxu0 %v521
        %997 = vmatprep.subr.mxu0 0.0
        %998 = vmatpush1.msra.mxu0 0.0
        %999 = vmatprep.subr.mxu0 0.0
        %1000 = vmatpush1.msra.mxu0 0.0
        %1001 = vmatprep.subr.mxu0 0.0
        %1002 = vmatpush1.msra.mxu0 0.0
        %1003 = vmatprep.subr.mxu0 0.0
        %1004 = vmatpush1.msra.mxu0 0.0
        %1005 = vmatprep.subr.mxu0 0.0
        %1006 = vmatpush1.msra.mxu0 0.0
        %1007 = vmatprep.subr.mxu0 0.0
        %1008 = vmatpush1.msra.mxu0 0.0
        %1009 = vmatprep.subr.mxu0 0.0
        %1010 = vmatpush1.msra.mxu0 0.0
        %1011 = vmatprep.subr.mxu0 0.0
        %1012 = vmatpush1.msra.mxu0 0.0
        %1013 = vmatprep.subr.mxu0 0.0
        %1014 = vmatpush1.msra.mxu0 0.0
        %1015 = vmatprep.subr.mxu0 0.0
        %1016 = vmatpush1.msra.mxu0 0.0
        %1017 = vmatprep.subr.mxu0 0.0
        %1018 = vmatpush1.msra.mxu0 0.0
        %1019 = vmatprep.subr.mxu0 0.0
        %1020 = vmatpush1.msra.mxu0 0.0
        %1021 = vmatprep.subr.mxu0 0.0
        %1022 = vmatpush1.msra.mxu0 0.0
        %1023 = vmatprep.subr.mxu0 0.0
        %1024 = vmatpush1.msra.mxu0 0.0
        %1025 = vmatprep.subr.mxu0 0.0
        %1026 = vmatpush1.msra.mxu0 0.0
        %1027 = vmatprep.subr.mxu0 0.0
        %1028 = vmatpush1.msra.mxu0 0.0
        %1029 = vmatprep.subr.mxu0 0.0
        %1030 = vmatpush1.msra.mxu0 0.0
        %1031 = vmatprep.subr.mxu0 0.0
        %1032 = vmatpush1.msra.mxu0 0.0
        %1033 = vmatprep.subr.mxu0 0.0
        %1034 = vmatpush1.msra.mxu0 0.0
        %1035 = vmatprep.subr.mxu0 0.0
        %1036 = vmatpush1.msra.mxu0 0.0
        %1037 = vmatprep.subr.mxu0 0.0
        %1038 = vmatpush1.msra.mxu0 0.0
        %1039 = vmatprep.subr.mxu0 0.0
        %1040 = vmatpush1.msra.mxu0 0.0
        %1041 = vmatprep.subr.mxu0 0.0
        %1042 = vmatpush1.msra.mxu0 0.0
        %1043 = vmatprep.subr.mxu0 0.0
        %1044 = vmatpush1.msra.mxu0 0.0
        %1045 = vmatprep.subr.mxu0 0.0
        %1046 = vmatpush1.msra.mxu0 0.0
        %1047 = vmatprep.subr.mxu0 0.0
        %1048 = vmatpush1.msra.mxu0 0.0
        %1049 = vmatprep.subr.mxu0 0.0
        %1050 = vmatpush1.msra.mxu0 0.0
        %1051 = vmatprep.subr.mxu0 0.0
        %1052 = vmatpush1.msra.mxu0 0.0
        %1053 = vmatprep.subr.mxu0 0.0
        %1054 = vmatpush1.msra.mxu0 0.0
        %1055 = vmatprep.subr.mxu0 0.0
        %1056 = vmatpush1.msra.mxu0 0.0
        %1057 = vmatprep.mubr.f32.mxu0 0.0
        %1058 = vmatmul.mubr.f32.gmra.mrb[0].mxu0 %v913
        %v1059 = vpop.f32.mrb[0].mxu0
        %v1060 = vadd.f32 0.0, %v1059
        %v1061 = vpop.f32.mrb[0].mxu0
        %1062 = vmatprep.mubr.f32.mxu0 0.0
        %1063 = vmatmul.mubr.f32.gmra.mrb[0].mxu0 %v916
        %v1064 = vpop.f32.mrb[0].mxu0
        %v1065 = vadd.f32 0.0, %v1064
        %v1066 = vpop.f32.mrb[0].mxu0
        %1067 = vdwg.mxu0
        %1068 = vmatprep.subr.mxu0 0.0
        %1069 = vmatpush1.msra.mxu0 %v598
        %1070 = vmatprep.subr.mxu0 0.0
        %1071 = vmatpush1.msra.mxu0 %v599
        %1072 = vmatprep.subr.mxu0 0.0
        %1073 = vmatpush1.msra.mxu0 0.0
        %1074 = vmatprep.subr.mxu0 0.0
        %1075 = vmatpush1.msra.mxu0 0.0
        %1076 = vmatprep.subr.mxu0 0.0
        %1077 = vmatpush1.msra.mxu0 0.0
        %1078 = vmatprep.subr.mxu0 0.0
        %1079 = vmatpush1.msra.mxu0 0.0
        %1080 = vmatprep.subr.mxu0 0.0
        %1081 = vmatpush1.msra.mxu0 0.0
        %1082 = vmatprep.subr.mxu0 0.0
        %1083 = vmatpush1.msra.mxu0 0.0
        %1084 = vmatprep.subr.mxu0 0.0
        %1085 = vmatpush1.msra.mxu0 0.0
        %1086 = vmatprep.subr.mxu0 0.0
        %1087 = vmatpush1.msra.mxu0 0.0
        %1088 = vmatprep.subr.mxu0 0.0
        %1089 = vmatpush1.msra.mxu0 0.0
        %1090 = vmatprep.subr.mxu0 0.0
        %1091 = vmatpush1.msra.mxu0 0.0
        %1092 = vmatprep.subr.mxu0 0.0
        %1093 = vmatpush1.msra.mxu0 0.0
        %1094 = vmatprep.subr.mxu0 0.0
        %1095 = vmatpush1.msra.mxu0 0.0
        %1096 = vmatprep.subr.mxu0 0.0
        %1097 = vmatpush1.msra.mxu0 0.0
        %1098 = vmatprep.subr.mxu0 0.0
        %1099 = vmatpush1.msra.mxu0 0.0
        %1100 = vmatprep.subr.mxu0 0.0
        %1101 = vmatpush1.msra.mxu0 0.0
        %1102 = vmatprep.subr.mxu0 0.0
        %1103 = vmatpush1.msra.mxu0 0.0
        %1104 = vmatprep.subr.mxu0 0.0
        %1105 = vmatpush1.msra.mxu0 0.0
        %1106 = vmatprep.subr.mxu0 0.0
        %1107 = vmatpush1.msra.mxu0 0.0
        %1108 = vmatprep.subr.mxu0 0.0
        %1109 = vmatpush1.msra.mxu0 0.0
        %1110 = vmatprep.subr.mxu0 0.0
        %1111 = vmatpush1.msra.mxu0 0.0
        %1112 = vmatprep.subr.mxu0 0.0
        %1113 = vmatpush1.msra.mxu0 0.0
        %1114 = vmatprep.subr.mxu0 0.0
        %1115 = vmatpush1.msra.mxu0 0.0
        %1116 = vmatprep.subr.mxu0 0.0
        %1117 = vmatpush1.msra.mxu0 0.0
        %1118 = vmatprep.subr.mxu0 0.0
        %1119 = vmatpush1.msra.mxu0 0.0
        %1120 = vmatprep.subr.mxu0 0.0
        %1121 = vmatpush1.msra.mxu0 0.0
        %1122 = vmatprep.subr.mxu0 0.0
        %1123 = vmatpush1.msra.mxu0 0.0
        %1124 = vmatprep.subr.mxu0 0.0
        %1125 = vmatpush1.msra.mxu0 0.0
        %1126 = vmatprep.subr.mxu0 0.0
        %1127 = vmatpush1.msra.mxu0 0.0
        %1128 = vmatprep.subr.mxu0 0.0
        %1129 = vmatpush1.msra.mxu0 0.0
        %1130 = vmatprep.subr.mxu0 0.0
        %1131 = vmatpush1.msra.mxu0 0.0
        %1132 = vmatprep.mubr.f32.mxu0 0.0
        %1133 = vmatmul.mubr.f32.gmra.mrb[0].mxu0 %v913
        %v1134 = vpop.f32.mrb[0].mxu0
        %v1135 = vadd.f32 0.0, %v1134
        %v1136 = vpop.f32.mrb[0].mxu0
        %1137 = vmatprep.mubr.f32.mxu0 0.0
        %1138 = vmatmul.mubr.f32.gmra.mrb[0].mxu0 %v916
        %v1139 = vpop.f32.mrb[0].mxu0
        %v1140 = vadd.f32 0.0, %v1139
        %v1141 = vpop.f32.mrb[0].mxu0
        %1142 = vdwg.mxu0
        %s1143 = scalar_lea.vmem [#allocation2], 48
        %v1144 = vld [vmem:[%s1143] sm:$0xff]
        %v1145 = vld [vmem:[%s1143 + $0x8] sm:$0x3]
        %v1147 = vsel %vm420, %v1144, 0
        %v1150 = vsel %vm420, %v1145, 0
        %1152 = vmatprep.subr.mxu0 0.0
        %1153 = vmatpush1.msra.mxu0 %v436
        %1154 = vmatprep.subr.mxu0 0.0
        %1155 = vmatpush1.msra.mxu0 %v437
        %1156 = vmatprep.subr.mxu0 0.0
        %1157 = vmatpush1.msra.mxu0 0.0
        %1158 = vmatprep.subr.mxu0 0.0
        %1159 = vmatpush1.msra.mxu0 0.0
        %1160 = vmatprep.subr.mxu0 0.0
        %1161 = vmatpush1.msra.mxu0 0.0
        %1162 = vmatprep.subr.mxu0 0.0
        %1163 = vmatpush1.msra.mxu0 0.0
        %1164 = vmatprep.subr.mxu0 0.0
        %1165 = vmatpush1.msra.mxu0 0.0
        %1166 = vmatprep.subr.mxu0 0.0
        %1167 = vmatpush1.msra.mxu0 0.0
        %1168 = vmatprep.subr.mxu0 0.0
        %1169 = vmatpush1.msra.mxu0 0.0
        %1170 = vmatprep.subr.mxu0 0.0
        %1171 = vmatpush1.msra.mxu0 0.0
        %1172 = vmatprep.subr.mxu0 0.0
        %1173 = vmatpush1.msra.mxu0 0.0
        %1174 = vmatprep.subr.mxu0 0.0
        %1175 = vmatpush1.msra.mxu0 0.0
        %1176 = vmatprep.subr.mxu0 0.0
        %1177 = vmatpush1.msra.mxu0 0.0
        %1178 = vmatprep.subr.mxu0 0.0
        %1179 = vmatpush1.msra.mxu0 0.0
        %1180 = vmatprep.subr.mxu0 0.0
        %1181 = vmatpush1.msra.mxu0 0.0
        %1182 = vmatprep.subr.mxu0 0.0
        %1183 = vmatpush1.msra.mxu0 0.0
        %1184 = vmatprep.subr.mxu0 0.0
        %1185 = vmatpush1.msra.mxu0 0.0
        %1186 = vmatprep.subr.mxu0 0.0
        %1187 = vmatpush1.msra.mxu0 0.0
        %1188 = vmatprep.subr.mxu0 0.0
        %1189 = vmatpush1.msra.mxu0 0.0
        %1190 = vmatprep.subr.mxu0 0.0
        %1191 = vmatpush1.msra.mxu0 0.0
        %1192 = vmatprep.subr.mxu0 0.0
        %1193 = vmatpush1.msra.mxu0 0.0
        %1194 = vmatprep.subr.mxu0 0.0
        %1195 = vmatpush1.msra.mxu0 0.0
        %1196 = vmatprep.subr.mxu0 0.0
        %1197 = vmatpush1.msra.mxu0 0.0
        %1198 = vmatprep.subr.mxu0 0.0
        %1199 = vmatpush1.msra.mxu0 0.0
        %1200 = vmatprep.subr.mxu0 0.0
        %1201 = vmatpush1.msra.mxu0 0.0
        %1202 = vmatprep.subr.mxu0 0.0
        %1203 = vmatpush1.msra.mxu0 0.0
        %1204 = vmatprep.subr.mxu0 0.0
        %1205 = vmatpush1.msra.mxu0 0.0
        %1206 = vmatprep.subr.mxu0 0.0
        %1207 = vmatpush1.msra.mxu0 0.0
        %1208 = vmatprep.subr.mxu0 0.0
        %1209 = vmatpush1.msra.mxu0 0.0
        %1210 = vmatprep.subr.mxu0 0.0
        %1211 = vmatpush1.msra.mxu0 0.0
        %1212 = vmatprep.subr.mxu0 0.0
        %1213 = vmatpush1.msra.mxu0 0.0
        %1214 = vmatprep.subr.mxu0 0.0
        %1215 = vmatpush1.msra.mxu0 0.0
        %1216 = vmatprep.mubr.f32.mxu0 0.0
        %1217 = vmatmul.mubr.f32.gmra.mrb[0].mxu0 %v1147
        %v1218 = vpop.f32.mrb[0].mxu0
        %v1219 = vadd.f32 0.0, %v1218
        %v1220 = vpop.f32.mrb[0].mxu0
        %1221 = vmatprep.mubr.f32.mxu0 0.0
        %1222 = vmatmul.mubr.f32.gmra.mrb[0].mxu0 %v1150
        %v1223 = vpop.f32.mrb[0].mxu0
        %v1224 = vadd.f32 0.0, %v1223
        %v1225 = vpop.f32.mrb[0].mxu0
        %1226 = vdwg.mxu0
        %1227 = vmatprep.subr.mxu0 0.0
        %1228 = vmatpush1.msra.mxu0 %v520
        %1229 = vmatprep.subr.mxu0 0.0
        %1230 = vmatpush1.msra.mxu0 %v521
        %1231 = vmatprep.subr.mxu0 0.0
        %1232 = vmatpush1.msra.mxu0 0.0
        %1233 = vmatprep.subr.mxu0 0.0
        %1234 = vmatpush1.msra.mxu0 0.0
        %1235 = vmatprep.subr.mxu0 0.0
        %1236 = vmatpush1.msra.mxu0 0.0
        %1237 = vmatprep.subr.mxu0 0.0
        %1238 = vmatpush1.msra.mxu0 0.0
        %1239 = vmatprep.subr.mxu0 0.0
        %1240 = vmatpush1.msra.mxu0 0.0
        %1241 = vmatprep.subr.mxu0 0.0
        %1242 = vmatpush1.msra.mxu0 0.0
        %1243 = vmatprep.subr.mxu0 0.0
        %1244 = vmatpush1.msra.mxu0 0.0
        %1245 = vmatprep.subr.mxu0 0.0
        %1246 = vmatpush1.msra.mxu0 0.0
        %1247 = vmatprep.subr.mxu0 0.0
        %1248 = vmatpush1.msra.mxu0 0.0
        %1249 = vmatprep.subr.mxu0 0.0
        %1250 = vmatpush1.msra.mxu0 0.0
        %1251 = vmatprep.subr.mxu0 0.0
        %1252 = vmatpush1.msra.mxu0 0.0
        %1253 = vmatprep.subr.mxu0 0.0
        %1254 = vmatpush1.msra.mxu0 0.0
        %1255 = vmatprep.subr.mxu0 0.0
        %1256 = vmatpush1.msra.mxu0 0.0
        %1257 = vmatprep.subr.mxu0 0.0
        %1258 = vmatpush1.msra.mxu0 0.0
        %1259 = vmatprep.subr.mxu0 0.0
        %1260 = vmatpush1.msra.mxu0 0.0
        %1261 = vmatprep.subr.mxu0 0.0
        %1262 = vmatpush1.msra.mxu0 0.0
        %1263 = vmatprep.subr.mxu0 0.0
        %1264 = vmatpush1.msra.mxu0 0.0
        %1265 = vmatprep.subr.mxu0 0.0
        %1266 = vmatpush1.msra.mxu0 0.0
        %1267 = vmatprep.subr.mxu0 0.0
        %1268 = vmatpush1.msra.mxu0 0.0
        %1269 = vmatprep.subr.mxu0 0.0
        %1270 = vmatpush1.msra.mxu0 0.0
        %1271 = vmatprep.subr.mxu0 0.0
        %1272 = vmatpush1.msra.mxu0 0.0
        %1273 = vmatprep.subr.mxu0 0.0
        %1274 = vmatpush1.msra.mxu0 0.0
        %1275 = vmatprep.subr.mxu0 0.0
        %1276 = vmatpush1.msra.mxu0 0.0
        %1277 = vmatprep.subr.mxu0 0.0
        %1278 = vmatpush1.msra.mxu0 0.0
        %1279 = vmatprep.subr.mxu0 0.0
        %1280 = vmatpush1.msra.mxu0 0.0
        %1281 = vmatprep.subr.mxu0 0.0
        %1282 = vmatpush1.msra.mxu0 0.0
        %1283 = vmatprep.subr.mxu0 0.0
        %1284 = vmatpush1.msra.mxu0 0.0
        %1285 = vmatprep.subr.mxu0 0.0
        %1286 = vmatpush1.msra.mxu0 0.0
        %1287 = vmatprep.subr.mxu0 0.0
        %1288 = vmatpush1.msra.mxu0 0.0
        %1289 = vmatprep.subr.mxu0 0.0
        %1290 = vmatpush1.msra.mxu0 0.0
        %1291 = vmatprep.mubr.f32.mxu0 0.0
        %1292 = vmatmul.mubr.f32.gmra.mrb[0].mxu0 %v1147
        %v1293 = vpop.f32.mrb[0].mxu0
        %v1294 = vadd.f32 0.0, %v1293
        %v1295 = vpop.f32.mrb[0].mxu0
        %1296 = vmatprep.mubr.f32.mxu0 0.0
        %1297 = vmatmul.mubr.f32.gmra.mrb[0].mxu0 %v1150
        %v1298 = vpop.f32.mrb[0].mxu0
        %v1299 = vadd.f32 0.0, %v1298
        %v1300 = vpop.f32.mrb[0].mxu0
        %1301 = vdwg.mxu0
        %1302 = vmatprep.subr.mxu0 0.0
        %1303 = vmatpush1.msra.mxu0 %v598
        %1304 = vmatprep.subr.mxu0 0.0
        %1305 = vmatpush1.msra.mxu0 %v599
        %1306 = vmatprep.subr.mxu0 0.0
        %1307 = vmatpush1.msra.mxu0 0.0
        %1308 = vmatprep.subr.mxu0 0.0
        %1309 = vmatpush1.msra.mxu0 0.0
        %1310 = vmatprep.subr.mxu0 0.0
        %1311 = vmatpush1.msra.mxu0 0.0
        %1312 = vmatprep.subr.mxu0 0.0
        %1313 = vmatpush1.msra.mxu0 0.0
        %1314 = vmatprep.subr.mxu0 0.0
        %1315 = vmatpush1.msra.mxu0 0.0
        %1316 = vmatprep.subr.mxu0 0.0
        %1317 = vmatpush1.msra.mxu0 0.0
        %1318 = vmatprep.subr.mxu0 0.0
        %1319 = vmatpush1.msra.mxu0 0.0
        %1320 = vmatprep.subr.mxu0 0.0
        %1321 = vmatpush1.msra.mxu0 0.0
        %1322 = vmatprep.subr.mxu0 0.0
        %1323 = vmatpush1.msra.mxu0 0.0
        %1324 = vmatprep.subr.mxu0 0.0
        %1325 = vmatpush1.msra.mxu0 0.0
        %1326 = vmatprep.subr.mxu0 0.0
        %1327 = vmatpush1.msra.mxu0 0.0
        %1328 = vmatprep.subr.mxu0 0.0
        %1329 = vmatpush1.msra.mxu0 0.0
        %1330 = vmatprep.subr.mxu0 0.0
        %1331 = vmatpush1.msra.mxu0 0.0
        %1332 = vmatprep.subr.mxu0 0.0
        %1333 = vmatpush1.msra.mxu0 0.0
        %1334 = vmatprep.subr.mxu0 0.0
        %1335 = vmatpush1.msra.mxu0 0.0
        %1336 = vmatprep.subr.mxu0 0.0
        %1337 = vmatpush1.msra.mxu0 0.0
        %1338 = vmatprep.subr.mxu0 0.0
        %1339 = vmatpush1.msra.mxu0 0.0
        %1340 = vmatprep.subr.mxu0 0.0
        %1341 = vmatpush1.msra.mxu0 0.0
        %1342 = vmatprep.subr.mxu0 0.0
        %1343 = vmatpush1.msra.mxu0 0.0
        %1344 = vmatprep.subr.mxu0 0.0
        %1345 = vmatpush1.msra.mxu0 0.0
        %1346 = vmatprep.subr.mxu0 0.0
        %1347 = vmatpush1.msra.mxu0 0.0
        %1348 = vmatprep.subr.mxu0 0.0
        %1349 = vmatpush1.msra.mxu0 0.0
        %1350 = vmatprep.subr.mxu0 0.0
        %1351 = vmatpush1.msra.mxu0 0.0
        %1352 = vmatprep.subr.mxu0 0.0
        %1353 = vmatpush1.msra.mxu0 0.0
        %1354 = vmatprep.subr.mxu0 0.0
        %1355 = vmatpush1.msra.mxu0 0.0
        %1356 = vmatprep.subr.mxu0 0.0
        %1357 = vmatpush1.msra.mxu0 0.0
        %1358 = vmatprep.subr.mxu0 0.0
        %1359 = vmatpush1.msra.mxu0 0.0
        %1360 = vmatprep.subr.mxu0 0.0
        %1361 = vmatpush1.msra.mxu0 0.0
        %1362 = vmatprep.subr.mxu0 0.0
        %1363 = vmatpush1.msra.mxu0 0.0
        %1364 = vmatprep.subr.mxu0 0.0
        %1365 = vmatpush1.msra.mxu0 0.0
        %1366 = vmatprep.mubr.f32.mxu0 0.0
        %1367 = vmatmul.mubr.f32.gmra.mrb[0].mxu0 %v1147
        %v1368 = vpop.f32.mrb[0].mxu0
        %v1369 = vadd.f32 0.0, %v1368
        %v1370 = vpop.f32.mrb[0].mxu0
        %1371 = vmatprep.mubr.f32.mxu0 0.0
        %1372 = vmatmul.mubr.f32.gmra.mrb[0].mxu0 %v1150
        %v1373 = vpop.f32.mrb[0].mxu0
        %v1374 = vadd.f32 0.0, %v1373
        %v1375 = vpop.f32.mrb[0].mxu0
        %1376 = vdwg.mxu0
        %s1377 = sld [smem:[#allocation5]]
        %v1378 = vstv %s1377
        %v1379 = vmul.f32 %v1378, %v511
        %v1380 = vmul.f32 %v1378, %v516
        %s1381 = sld [smem:[#allocation5 + $0x4]]
        %v1382 = vstv %s1381
        %v1383 = vmul.f32 %v1382, %v751
        %v1384 = vmul.f32 %v1382, %v756
        %v1385 = vadd.f32 %v1379, %v1383
        %v1386 = vadd.f32 %v1380, %v1384
        %s1387 = sld [smem:[#allocation5 + $0x8]]
        %v1388 = vstv %s1387
        %v1389 = vmul.f32 %v1388, %v985
        %v1390 = vmul.f32 %v1388, %v990
        %v1391 = vadd.f32 %v1385, %v1389
        %v1392 = vadd.f32 %v1386, %v1390
        %s1393 = sld [smem:[#allocation5 + $0xc]]
        %v1394 = vstv %s1393
        %v1395 = vmul.f32 %v1394, %v1219
        %v1396 = vmul.f32 %v1394, %v1224
        %v1397 = vadd.f32 %v1391, %v1395
        %v1398 = vadd.f32 %v1392, %v1396
        %s1399 = sld [smem:[#allocation5 + $0x10]]
        %v1400 = vstv %s1399
        %v1401 = vmul.f32 %v1400, %v589
        %v1402 = vmul.f32 %v1400, %v594
        %v1403 = vadd.f32 %v1397, %v1401
        %v1404 = vadd.f32 %v1398, %v1402
        %s1405 = sld [smem:[#allocation5 + $0x14]]
        %v1406 = vstv %s1405
        %v1407 = vmul.f32 %v1406, %v826
        %v1408 = vmul.f32 %v1406, %v831
        %v1409 = vadd.f32 %v1403, %v1407
        %v1410 = vadd.f32 %v1404, %v1408
        %s1411 = sld [smem:[#allocation5 + $0x18]]
        %v1412 = vstv %s1411
        %v1413 = vmul.f32 %v1412, %v1060
        %v1414 = vmul.f32 %v1412, %v1065
        %v1415 = vadd.f32 %v1409, %v1413
        %v1416 = vadd.f32 %v1410, %v1414
        %s1417 = sld [smem:[#allocation5 + $0x1c]]
        %v1418 = vstv %s1417
        %v1419 = vmul.f32 %v1418, %v1294
        %v1420 = vmul.f32 %v1418, %v1299
        %v1421 = vadd.f32 %v1415, %v1419
        %v1422 = vadd.f32 %v1416, %v1420
        %s1423 = sld [smem:[#allocation5 + $0x20]]
        %v1424 = vstv %s1423
        %v1425 = vmul.f32 %v1424, %v667
        %v1426 = vmul.f32 %v1424, %v672
        %v1427 = vadd.f32 %v1421, %v1425
        %v1428 = vadd.f32 %v1422, %v1426
        %s1429 = sld [smem:[#allocation5 + $0x24]]
        %v1430 = vstv %s1429
        %v1431 = vmul.f32 %v1430, %v901
        %v1432 = vmul.f32 %v1430, %v906
        %v1433 = vadd.f32 %v1427, %v1431
        %v1434 = vadd.f32 %v1428, %v1432
        %s1435 = sld [smem:[#allocation5 + $0x28]]
        %v1436 = vstv %s1435
        %v1437 = vmul.f32 %v1436, %v1135
        %v1438 = vmul.f32 %v1436, %v1140
        %v1439 = vadd.f32 %v1433, %v1437
        %v1440 = vadd.f32 %v1434, %v1438
        %s1441 = sld [smem:[#allocation5 + $0x2c]]
        %v1442 = vstv %s1441
        %v1443 = vmul.f32 %v1442, %v1369
        %v1444 = vmul.f32 %v1442, %v1374
        %v1445 = vadd.f32 %v1439, %v1443
        %v1446 = vadd.f32 %v1440, %v1444
        %v1447 = vld [vmem:[%s3] sm:$0xff]
        %v1448 = vld [vmem:[%s3 + $0x8] sm:$0xff]
        %s1449 = sld [smem:[#allocation5 + $0x30]]
        %v1450 = vstv %s1449
        %v1451 = vmul.f32 %v1450, %v511
        %v1452 = vmul.f32 %v1450, %v516
        %s1453 = sld [smem:[#allocation5 + $0x34]]
        %v1454 = vstv %s1453
        %v1455 = vmul.f32 %v1454, %v751
        %v1456 = vmul.f32 %v1454, %v756
        %v1457 = vadd.f32 %v1451, %v1455
        %v1458 = vadd.f32 %v1452, %v1456
        %s1459 = sld [smem:[#allocation5 + $0x38]]
        %v1460 = vstv %s1459
        %v1461 = vmul.f32 %v1460, %v985
        %v1462 = vmul.f32 %v1460, %v990
        %v1463 = vadd.f32 %v1457, %v1461
        %v1464 = vadd.f32 %v1458, %v1462
        %s1465 = sld [smem:[#allocation5 + $0x3c]]
        %v1466 = vstv %s1465
        %v1467 = vmul.f32 %v1466, %v1219
        %v1468 = vmul.f32 %v1466, %v1224
        %v1469 = vadd.f32 %v1463, %v1467
        %v1470 = vadd.f32 %v1464, %v1468
        %s1471 = sld [smem:[#allocation5 + $0x40]]
        %v1472 = vstv %s1471
        %v1473 = vmul.f32 %v1472, %v589
        %v1474 = vmul.f32 %v1472, %v594
        %v1475 = vadd.f32 %v1469, %v1473
        %v1476 = vadd.f32 %v1470, %v1474
        %s1477 = sld [smem:[#allocation5 + $0x44]]
        %v1478 = vstv %s1477
        %v1479 = vmul.f32 %v1478, %v826
        %v1480 = vmul.f32 %v1478, %v831
        %v1481 = vadd.f32 %v1475, %v1479
        %v1482 = vadd.f32 %v1476, %v1480
        %s1483 = sld [smem:[#allocation5 + $0x48]]
        %v1484 = vstv %s1483
        %v1485 = vmul.f32 %v1484, %v1060
        %v1486 = vmul.f32 %v1484, %v1065
        %v1487 = vadd.f32 %v1481, %v1485
        %v1488 = vadd.f32 %v1482, %v1486
        %s1489 = sld [smem:[#allocation5 + $0x4c]]
        %v1490 = vstv %s1489
        %v1491 = vmul.f32 %v1490, %v1294
        %v1492 = vmul.f32 %v1490, %v1299
        %v1493 = vadd.f32 %v1487, %v1491
        %v1494 = vadd.f32 %v1488, %v1492
        %s1495 = sld [smem:[#allocation5 + $0x50]]
        %v1496 = vstv %s1495
        %v1497 = vmul.f32 %v1496, %v667
        %v1498 = vmul.f32 %v1496, %v672
        %v1499 = vadd.f32 %v1493, %v1497
        %v1500 = vadd.f32 %v1494, %v1498
        %s1501 = sld [smem:[#allocation5 + $0x54]]
        %v1502 = vstv %s1501
        %v1503 = vmul.f32 %v1502, %v901
        %v1504 = vmul.f32 %v1502, %v906
        %v1505 = vadd.f32 %v1499, %v1503
        %v1506 = vadd.f32 %v1500, %v1504
        %s1507 = sld [smem:[#allocation5 + $0x58]]
        %v1508 = vstv %s1507
        %v1509 = vmul.f32 %v1508, %v1135
        %v1510 = vmul.f32 %v1508, %v1140
        %v1511 = vadd.f32 %v1505, %v1509
        %v1512 = vadd.f32 %v1506, %v1510
        %s1513 = sld [smem:[#allocation5 + $0x5c]]
        %v1514 = vstv %s1513
        %v1515 = vmul.f32 %v1514, %v1369
        %v1516 = vmul.f32 %v1514, %v1374
        %v1517 = vadd.f32 %v1511, %v1515
        %v1518 = vadd.f32 %v1512, %v1516
        %s1519 = scalar_lea.vmem %s3, 16
        %v1520 = vld [vmem:[%s1519] sm:$0xff]
        %v1521 = vld [vmem:[%s1519 + $0x8] sm:$0xff]
        %vm1522 = vcmask 80896
        %v1524 = vsel %vm1522, %v1520, 0
        %v1527 = vsel %vm1522, %v1521, 0
        %vm1529 = vcmask 1041408
        %v1531 = vsel %vm1529, %v1518, 0
        %1533 = vmatprep.subr.mxu0 0.0
        %1534 = vmatpush1.msra.mxu0 %v1517
        %1535 = vmatprep.subr.mxu0 0.0
        %1536 = vmatpush1.msra.mxu0 %v1531
        %1537 = vmatprep.subr.mxu0 0.0
        %1538 = vmatpush1.msra.mxu0 0.0
        %1539 = vmatprep.subr.mxu0 0.0
        %1540 = vmatpush1.msra.mxu0 0.0
        %1541 = vmatprep.subr.mxu0 0.0
        %1542 = vmatpush1.msra.mxu0 0.0
        %1543 = vmatprep.subr.mxu0 0.0
        %1544 = vmatpush1.msra.mxu0 0.0
        %1545 = vmatprep.subr.mxu0 0.0
        %1546 = vmatpush1.msra.mxu0 0.0
        %1547 = vmatprep.subr.mxu0 0.0
        %1548 = vmatpush1.msra.mxu0 0.0
        %1549 = vmatprep.subr.mxu0 0.0
        %1550 = vmatpush1.msra.mxu0 0.0
        %1551 = vmatprep.subr.mxu0 0.0
        %1552 = vmatpush1.msra.mxu0 0.0
        %1553 = vmatprep.subr.mxu0 0.0
        %1554 = vmatpush1.msra.mxu0 0.0
        %1555 = vmatprep.subr.mxu0 0.0
        %1556 = vmatpush1.msra.mxu0 0.0
        %1557 = vmatprep.subr.mxu0 0.0
        %1558 = vmatpush1.msra.mxu0 0.0
        %1559 = vmatprep.subr.mxu0 0.0
        %1560 = vmatpush1.msra.mxu0 0.0
        %1561 = vmatprep.subr.mxu0 0.0
        %1562 = vmatpush1.msra.mxu0 0.0
        %1563 = vmatprep.subr.mxu0 0.0
        %1564 = vmatpush1.msra.mxu0 0.0
        %1565 = vmatprep.subr.mxu0 0.0
        %1566 = vmatpush1.msra.mxu0 0.0
        %1567 = vmatprep.subr.mxu0 0.0
        %1568 = vmatpush1.msra.mxu0 0.0
        %1569 = vmatprep.subr.mxu0 0.0
        %1570 = vmatpush1.msra.mxu0 0.0
        %1571 = vmatprep.subr.mxu0 0.0
        %1572 = vmatpush1.msra.mxu0 0.0
        %1573 = vmatprep.subr.mxu0 0.0
        %1574 = vmatpush1.msra.mxu0 0.0
        %1575 = vmatprep.subr.mxu0 0.0
        %1576 = vmatpush1.msra.mxu0 0.0
        %1577 = vmatprep.subr.mxu0 0.0
        %1578 = vmatpush1.msra.mxu0 0.0
        %1579 = vmatprep.subr.mxu0 0.0
        %1580 = vmatpush1.msra.mxu0 0.0
        %1581 = vmatprep.subr.mxu0 0.0
        %1582 = vmatpush1.msra.mxu0 0.0
        %1583 = vmatprep.subr.mxu0 0.0
        %1584 = vmatpush1.msra.mxu0 0.0
        %1585 = vmatprep.subr.mxu0 0.0
        %1586 = vmatpush1.msra.mxu0 0.0
        %1587 = vmatprep.subr.mxu0 0.0
        %1588 = vmatpush1.msra.mxu0 0.0
        %1589 = vmatprep.subr.mxu0 0.0
        %1590 = vmatpush1.msra.mxu0 0.0
        %1591 = vmatprep.subr.mxu0 0.0
        %1592 = vmatpush1.msra.mxu0 0.0
        %1593 = vmatprep.subr.mxu0 0.0
        %1594 = vmatpush1.msra.mxu0 0.0
        %1595 = vmatprep.subr.mxu0 0.0
        %1596 = vmatpush1.msra.mxu0 0.0
        %1597 = vmatprep.mubr.f32.mxu0 0.0
        %1598 = vmatmul.mubr.f32.gmra.mrb[0].mxu0 %v1524
        %v1599 = vpop.f32.mrb[0].mxu0
        %v1600 = vadd.f32 0.0, %v1599
        %v1601 = vpop.f32.mrb[0].mxu0
        %1602 = vmatprep.mubr.f32.mxu0 0.0
        %1603 = vmatmul.mubr.f32.gmra.mrb[0].mxu0 %v1527
        %v1604 = vpop.f32.mrb[0].mxu0
        %v1605 = vadd.f32 0.0, %v1604
        %v1606 = vpop.f32.mrb[0].mxu0
        %1607 = vdwg.mxu0
        %v1609 = vsel %vm1522, %v1447, 0
        %v1612 = vsel %vm1522, %v1448, 0
        %v1615 = vsel %vm1529, %v1446, 0
        %1617 = vmatprep.subr.mxu0 0.0
        %1618 = vmatpush1.msra.mxu0 %v1445
        %1619 = vmatprep.subr.mxu0 0.0
        %1620 = vmatpush1.msra.mxu0 %v1615
        %1621 = vmatprep.subr.mxu0 0.0
        %1622 = vmatpush1.msra.mxu0 0.0
        %1623 = vmatprep.subr.mxu0 0.0
        %1624 = vmatpush1.msra.mxu0 0.0
        %1625 = vmatprep.subr.mxu0 0.0
        %1626 = vmatpush1.msra.mxu0 0.0
        %1627 = vmatprep.subr.mxu0 0.0
        %1628 = vmatpush1.msra.mxu0 0.0
        %1629 = vmatprep.subr.mxu0 0.0
        %1630 = vmatpush1.msra.mxu0 0.0
        %1631 = vmatprep.subr.mxu0 0.0
        %1632 = vmatpush1.msra.mxu0 0.0
        %1633 = vmatprep.subr.mxu0 0.0
        %1634 = vmatpush1.msra.mxu0 0.0
        %1635 = vmatprep.subr.mxu0 0.0
        %1636 = vmatpush1.msra.mxu0 0.0
        %1637 = vmatprep.subr.mxu0 0.0
        %1638 = vmatpush1.msra.mxu0 0.0
        %1639 = vmatprep.subr.mxu0 0.0
        %1640 = vmatpush1.msra.mxu0 0.0
        %1641 = vmatprep.subr.mxu0 0.0
        %1642 = vmatpush1.msra.mxu0 0.0
        %1643 = vmatprep.subr.mxu0 0.0
        %1644 = vmatpush1.msra.mxu0 0.0
        %1645 = vmatprep.subr.mxu0 0.0
        %1646 = vmatpush1.msra.mxu0 0.0
        %1647 = vmatprep.subr.mxu0 0.0
        %1648 = vmatpush1.msra.mxu0 0.0
        %1649 = vmatprep.subr.mxu0 0.0
        %1650 = vmatpush1.msra.mxu0 0.0
        %1651 = vmatprep.subr.mxu0 0.0
        %1652 = vmatpush1.msra.mxu0 0.0
        %1653 = vmatprep.subr.mxu0 0.0
        %1654 = vmatpush1.msra.mxu0 0.0
        %1655 = vmatprep.subr.mxu0 0.0
        %1656 = vmatpush1.msra.mxu0 0.0
        %1657 = vmatprep.subr.mxu0 0.0
        %1658 = vmatpush1.msra.mxu0 0.0
        %1659 = vmatprep.subr.mxu0 0.0
        %1660 = vmatpush1.msra.mxu0 0.0
        %1661 = vmatprep.subr.mxu0 0.0
        %1662 = vmatpush1.msra.mxu0 0.0
        %1663 = vmatprep.subr.mxu0 0.0
        %1664 = vmatpush1.msra.mxu0 0.0
        %1665 = vmatprep.subr.mxu0 0.0
        %1666 = vmatpush1.msra.mxu0 0.0
        %1667 = vmatprep.subr.mxu0 0.0
        %1668 = vmatpush1.msra.mxu0 0.0
        %1669 = vmatprep.subr.mxu0 0.0
        %1670 = vmatpush1.msra.mxu0 0.0
        %1671 = vmatprep.subr.mxu0 0.0
        %1672 = vmatpush1.msra.mxu0 0.0
        %1673 = vmatprep.subr.mxu0 0.0
        %1674 = vmatpush1.msra.mxu0 0.0
        %1675 = vmatprep.subr.mxu0 0.0
        %1676 = vmatpush1.msra.mxu0 0.0
        %1677 = vmatprep.subr.mxu0 0.0
        %1678 = vmatpush1.msra.mxu0 0.0
        %1679 = vmatprep.subr.mxu0 0.0
        %1680 = vmatpush1.msra.mxu0 0.0
        %1681 = vmatprep.mubr.f32.mxu0 0.0
        %1682 = vmatmul.mubr.f32.gmra.mrb[0].mxu0 %v1609
        %v1683 = vpop.f32.mrb[0].mxu0
        %v1684 = vadd.f32 %v1600, %v1683
        %v1685 = vpop.f32.mrb[0].mxu0
        %1686 = vmatprep.mubr.f32.mxu0 0.0
        %1687 = vmatmul.mubr.f32.gmra.mrb[0].mxu0 %v1612
        %v1688 = vpop.f32.mrb[0].mxu0
        %v1689 = vadd.f32 %v1605, %v1688
        %v1690 = vpop.f32.mrb[0].mxu0
        %1691 = vdwg.mxu0
        %s1692 = sld [smem:[#allocation5 + $0x60]]
        %v1693 = vstv %s1692
        %v1694 = vmul.f32 %v1693, %v511
        %v1695 = vmul.f32 %v1693, %v516
        %s1696 = sld [smem:[#allocation5 + $0x64]]
        %v1697 = vstv %s1696
        %v1698 = vmul.f32 %v1697, %v751
        %v1699 = vmul.f32 %v1697, %v756
        %v1700 = vadd.f32 %v1694, %v1698
        %v1701 = vadd.f32 %v1695, %v1699
        %s1702 = sld [smem:[#allocation5 + $0x68]]
        %v1703 = vstv %s1702
        %v1704 = vmul.f32 %v1703, %v985
        %v1705 = vmul.f32 %v1703, %v990
        %v1706 = vadd.f32 %v1700, %v1704
        %v1707 = vadd.f32 %v1701, %v1705
        %s1708 = sld [smem:[#allocation5 + $0x6c]]
        %v1709 = vstv %s1708
        %v1710 = vmul.f32 %v1709, %v1219
        %v1711 = vmul.f32 %v1709, %v1224
        %v1712 = vadd.f32 %v1706, %v1710
        %v1713 = vadd.f32 %v1707, %v1711
        %s1714 = sld [smem:[#allocation5 + $0x70]]
        %v1715 = vstv %s1714
        %v1716 = vmul.f32 %v1715, %v589
        %v1717 = vmul.f32 %v1715, %v594
        %v1718 = vadd.f32 %v1712, %v1716
        %v1719 = vadd.f32 %v1713, %v1717
        %s1720 = sld [smem:[#allocation5 + $0x74]]
        %v1721 = vstv %s1720
        %v1722 = vmul.f32 %v1721, %v826
        %v1723 = vmul.f32 %v1721, %v831
        %v1724 = vadd.f32 %v1718, %v1722
        %v1725 = vadd.f32 %v1719, %v1723
        %s1726 = sld [smem:[#allocation5 + $0x78]]
        %v1727 = vstv %s1726
        %v1728 = vmul.f32 %v1727, %v1060
        %v1729 = vmul.f32 %v1727, %v1065
        %v1730 = vadd.f32 %v1724, %v1728
        %v1731 = vadd.f32 %v1725, %v1729
        %s1732 = sld [smem:[#allocation5 + $0x7c]]
        %v1733 = vstv %s1732
        %v1734 = vmul.f32 %v1733, %v1294
        %v1735 = vmul.f32 %v1733, %v1299
        %v1736 = vadd.f32 %v1730, %v1734
        %v1737 = vadd.f32 %v1731, %v1735
        %s1738 = sld [smem:[#allocation5 + $0x80]]
        %v1739 = vstv %s1738
        %v1740 = vmul.f32 %v1739, %v667
        %v1741 = vmul.f32 %v1739, %v672
        %v1742 = vadd.f32 %v1736, %v1740
        %v1743 = vadd.f32 %v1737, %v1741
        %s1744 = sld [smem:[#allocation5 + $0x84]]
        %v1745 = vstv %s1744
        %v1746 = vmul.f32 %v1745, %v901
        %v1747 = vmul.f32 %v1745, %v906
        %v1748 = vadd.f32 %v1742, %v1746
        %v1749 = vadd.f32 %v1743, %v1747
        %s1750 = sld [smem:[#allocation5 + $0x88]]
        %v1751 = vstv %s1750
        %v1752 = vmul.f32 %v1751, %v1135
        %v1753 = vmul.f32 %v1751, %v1140
        %v1754 = vadd.f32 %v1748, %v1752
        %v1755 = vadd.f32 %v1749, %v1753
        %s1756 = sld [smem:[#allocation5 + $0x8c]]
        %v1757 = vstv %s1756
        %v1758 = vmul.f32 %v1757, %v1369
        %v1759 = vmul.f32 %v1757, %v1374
        %v1760 = vadd.f32 %v1754, %v1758
        %v1761 = vadd.f32 %v1755, %v1759
        %s1762 = scalar_lea.vmem %s3, 32
        %v1763 = vld [vmem:[%s1762] sm:$0xff]
        %v1764 = vld [vmem:[%s1762 + $0x8] sm:$0xff]
        %v1766 = vsel %vm1522, %v1763, 0
        %v1769 = vsel %vm1522, %v1764, 0
        %v1772 = vsel %vm1529, %v1761, 0
        %1774 = vmatprep.subr.mxu0 0.0
        %1775 = vmatpush1.msra.mxu0 %v1760
        %1776 = vmatprep.subr.mxu0 0.0
        %1777 = vmatpush1.msra.mxu0 %v1772
        %1778 = vmatprep.subr.mxu0 0.0
        %1779 = vmatpush1.msra.mxu0 0.0
        %1780 = vmatprep.subr.mxu0 0.0
        %1781 = vmatpush1.msra.mxu0 0.0
        %1782 = vmatprep.subr.mxu0 0.0
        %1783 = vmatpush1.msra.mxu0 0.0
        %1784 = vmatprep.subr.mxu0 0.0
        %1785 = vmatpush1.msra.mxu0 0.0
        %1786 = vmatprep.subr.mxu0 0.0
        %1787 = vmatpush1.msra.mxu0 0.0
        %1788 = vmatprep.subr.mxu0 0.0
        %1789 = vmatpush1.msra.mxu0 0.0
        %1790 = vmatprep.subr.mxu0 0.0
        %1791 = vmatpush1.msra.mxu0 0.0
        %1792 = vmatprep.subr.mxu0 0.0
        %1793 = vmatpush1.msra.mxu0 0.0
        %1794 = vmatprep.subr.mxu0 0.0
        %1795 = vmatpush1.msra.mxu0 0.0
        %1796 = vmatprep.subr.mxu0 0.0
        %1797 = vmatpush1.msra.mxu0 0.0
        %1798 = vmatprep.subr.mxu0 0.0
        %1799 = vmatpush1.msra.mxu0 0.0
        %1800 = vmatprep.subr.mxu0 0.0
        %1801 = vmatpush1.msra.mxu0 0.0
        %1802 = vmatprep.subr.mxu0 0.0
        %1803 = vmatpush1.msra.mxu0 0.0
        %1804 = vmatprep.subr.mxu0 0.0
        %1805 = vmatpush1.msra.mxu0 0.0
        %1806 = vmatprep.subr.mxu0 0.0
        %1807 = vmatpush1.msra.mxu0 0.0
        %1808 = vmatprep.subr.mxu0 0.0
        %1809 = vmatpush1.msra.mxu0 0.0
        %1810 = vmatprep.subr.mxu0 0.0
        %1811 = vmatpush1.msra.mxu0 0.0
        %1812 = vmatprep.subr.mxu0 0.0
        %1813 = vmatpush1.msra.mxu0 0.0
        %1814 = vmatprep.subr.mxu0 0.0
        %1815 = vmatpush1.msra.mxu0 0.0
        %1816 = vmatprep.subr.mxu0 0.0
        %1817 = vmatpush1.msra.mxu0 0.0
        %1818 = vmatprep.subr.mxu0 0.0
        %1819 = vmatpush1.msra.mxu0 0.0
        %1820 = vmatprep.subr.mxu0 0.0
        %1821 = vmatpush1.msra.mxu0 0.0
        %1822 = vmatprep.subr.mxu0 0.0
        %1823 = vmatpush1.msra.mxu0 0.0
        %1824 = vmatprep.subr.mxu0 0.0
        %1825 = vmatpush1.msra.mxu0 0.0
        %1826 = vmatprep.subr.mxu0 0.0
        %1827 = vmatpush1.msra.mxu0 0.0
        %1828 = vmatprep.subr.mxu0 0.0
        %1829 = vmatpush1.msra.mxu0 0.0
        %1830 = vmatprep.subr.mxu0 0.0
        %1831 = vmatpush1.msra.mxu0 0.0
        %1832 = vmatprep.subr.mxu0 0.0
        %1833 = vmatpush1.msra.mxu0 0.0
        %1834 = vmatprep.subr.mxu0 0.0
        %1835 = vmatpush1.msra.mxu0 0.0
        %1836 = vmatprep.subr.mxu0 0.0
        %1837 = vmatpush1.msra.mxu0 0.0
        %1838 = vmatprep.mubr.f32.mxu0 0.0
        %1839 = vmatmul.mubr.f32.gmra.mrb[0].mxu0 %v1766
        %v1840 = vpop.f32.mrb[0].mxu0
        %v1841 = vadd.f32 0.0, %v1840
        %v1842 = vpop.f32.mrb[0].mxu0
        %1843 = vmatprep.mubr.f32.mxu0 0.0
        %1844 = vmatmul.mubr.f32.gmra.mrb[0].mxu0 %v1769
        %v1845 = vpop.f32.mrb[0].mxu0
        %v1846 = vadd.f32 0.0, %v1845
        %v1847 = vpop.f32.mrb[0].mxu0
        %1848 = vdwg.mxu0
        %v1849 = vadd.f32 %v1684, %v1841
        %v1850 = vadd.f32 %v1689, %v1846
        %s1851 = sld [smem:[#allocation5 + $0x90]]
        %v1852 = vstv %s1851
        %v1853 = vmul.f32 %v1852, %v511
        %v1854 = vmul.f32 %v1852, %v516
        %s1855 = sld [smem:[#allocation5 + $0x94]]
        %v1856 = vstv %s1855
        %v1857 = vmul.f32 %v1856, %v751
        %v1858 = vmul.f32 %v1856, %v756
        %v1859 = vadd.f32 %v1853, %v1857
        %v1860 = vadd.f32 %v1854, %v1858
        %s1861 = sld [smem:[#allocation5 + $0x98]]
        %v1862 = vstv %s1861
        %v1863 = vmul.f32 %v1862, %v985
        %v1864 = vmul.f32 %v1862, %v990
        %v1865 = vadd.f32 %v1859, %v1863
        %v1866 = vadd.f32 %v1860, %v1864
        %s1867 = sld [smem:[#allocation5 + $0x9c]]
        %v1868 = vstv %s1867
        %v1869 = vmul.f32 %v1868, %v1219
        %v1870 = vmul.f32 %v1868, %v1224
        %v1871 = vadd.f32 %v1865, %v1869
        %v1872 = vadd.f32 %v1866, %v1870
        %s1873 = sld [smem:[#allocation5 + $0xa0]]
        %v1874 = vstv %s1873
        %v1875 = vmul.f32 %v1874, %v589
        %v1876 = vmul.f32 %v1874, %v594
        %v1877 = vadd.f32 %v1871, %v1875
        %v1878 = vadd.f32 %v1872, %v1876
        %s1879 = sld [smem:[#allocation5 + $0xa4]]
        %v1880 = vstv %s1879
        %v1881 = vmul.f32 %v1880, %v826
        %v1882 = vmul.f32 %v1880, %v831
        %v1883 = vadd.f32 %v1877, %v1881
        %v1884 = vadd.f32 %v1878, %v1882
        %s1885 = sld [smem:[#allocation5 + $0xa8]]
        %v1886 = vstv %s1885
        %v1887 = vmul.f32 %v1886, %v1060
        %v1888 = vmul.f32 %v1886, %v1065
        %v1889 = vadd.f32 %v1883, %v1887
        %v1890 = vadd.f32 %v1884, %v1888
        %s1891 = sld [smem:[#allocation5 + $0xac]]
        %v1892 = vstv %s1891
        %v1893 = vmul.f32 %v1892, %v1294
        %v1894 = vmul.f32 %v1892, %v1299
        %v1895 = vadd.f32 %v1889, %v1893
        %v1896 = vadd.f32 %v1890, %v1894
        %s1897 = sld [smem:[#allocation5 + $0xb0]]
        %v1898 = vstv %s1897
        %v1899 = vmul.f32 %v1898, %v667
        %v1900 = vmul.f32 %v1898, %v672
        %v1901 = vadd.f32 %v1895, %v1899
        %v1902 = vadd.f32 %v1896, %v1900
        %s1903 = sld [smem:[#allocation5 + $0xb4]]
        %v1904 = vstv %s1903
        %v1905 = vmul.f32 %v1904, %v901
        %v1906 = vmul.f32 %v1904, %v906
        %v1907 = vadd.f32 %v1901, %v1905
        %v1908 = vadd.f32 %v1902, %v1906
        %s1909 = sld [smem:[#allocation5 + $0xb8]]
        %v1910 = vstv %s1909
        %v1911 = vmul.f32 %v1910, %v1135
        %v1912 = vmul.f32 %v1910, %v1140
        %v1913 = vadd.f32 %v1907, %v1911
        %v1914 = vadd.f32 %v1908, %v1912
        %s1915 = sld [smem:[#allocation5 + $0xbc]]
        %v1916 = vstv %s1915
        %v1917 = vmul.f32 %v1916, %v1369
        %v1918 = vmul.f32 %v1916, %v1374
        %v1919 = vadd.f32 %v1913, %v1917
        %v1920 = vadd.f32 %v1914, %v1918
        %s1921 = scalar_lea.vmem %s3, 48
        %v1922 = vld [vmem:[%s1921] sm:$0xff]
        %v1923 = vld [vmem:[%s1921 + $0x8] sm:$0xff]
        %v1925 = vsel %vm1522, %v1922, 0
        %v1928 = vsel %vm1522, %v1923, 0
        %v1931 = vsel %vm1529, %v1920, 0
        %1933 = vmatprep.subr.mxu0 0.0
        %1934 = vmatpush1.msra.mxu0 %v1919
        %1935 = vmatprep.subr.mxu0 0.0
        %1936 = vmatpush1.msra.mxu0 %v1931
        %1937 = vmatprep.subr.mxu0 0.0
        %1938 = vmatpush1.msra.mxu0 0.0
        %1939 = vmatprep.subr.mxu0 0.0
        %1940 = vmatpush1.msra.mxu0 0.0
        %1941 = vmatprep.subr.mxu0 0.0
        %1942 = vmatpush1.msra.mxu0 0.0
        %1943 = vmatprep.subr.mxu0 0.0
        %1944 = vmatpush1.msra.mxu0 0.0
        %1945 = vmatprep.subr.mxu0 0.0
        %1946 = vmatpush1.msra.mxu0 0.0
        %1947 = vmatprep.subr.mxu0 0.0
        %1948 = vmatpush1.msra.mxu0 0.0
        %1949 = vmatprep.subr.mxu0 0.0
        %1950 = vmatpush1.msra.mxu0 0.0
        %1951 = vmatprep.subr.mxu0 0.0
        %1952 = vmatpush1.msra.mxu0 0.0
        %1953 = vmatprep.subr.mxu0 0.0
        %1954 = vmatpush1.msra.mxu0 0.0
        %1955 = vmatprep.subr.mxu0 0.0
        %1956 = vmatpush1.msra.mxu0 0.0
        %1957 = vmatprep.subr.mxu0 0.0
        %1958 = vmatpush1.msra.mxu0 0.0
        %1959 = vmatprep.subr.mxu0 0.0
        %1960 = vmatpush1.msra.mxu0 0.0
        %1961 = vmatprep.subr.mxu0 0.0
        %1962 = vmatpush1.msra.mxu0 0.0
        %1963 = vmatprep.subr.mxu0 0.0
        %1964 = vmatpush1.msra.mxu0 0.0
        %1965 = vmatprep.subr.mxu0 0.0
        %1966 = vmatpush1.msra.mxu0 0.0
        %1967 = vmatprep.subr.mxu0 0.0
        %1968 = vmatpush1.msra.mxu0 0.0
        %1969 = vmatprep.subr.mxu0 0.0
        %1970 = vmatpush1.msra.mxu0 0.0
        %1971 = vmatprep.subr.mxu0 0.0
        %1972 = vmatpush1.msra.mxu0 0.0
        %1973 = vmatprep.subr.mxu0 0.0
        %1974 = vmatpush1.msra.mxu0 0.0
        %1975 = vmatprep.subr.mxu0 0.0
        %1976 = vmatpush1.msra.mxu0 0.0
        %1977 = vmatprep.subr.mxu0 0.0
        %1978 = vmatpush1.msra.mxu0 0.0
        %1979 = vmatprep.subr.mxu0 0.0
        %1980 = vmatpush1.msra.mxu0 0.0
        %1981 = vmatprep.subr.mxu0 0.0
        %1982 = vmatpush1.msra.mxu0 0.0
        %1983 = vmatprep.subr.mxu0 0.0
        %1984 = vmatpush1.msra.mxu0 0.0
        %1985 = vmatprep.subr.mxu0 0.0
        %1986 = vmatpush1.msra.mxu0 0.0
        %1987 = vmatprep.subr.mxu0 0.0
        %1988 = vmatpush1.msra.mxu0 0.0
        %1989 = vmatprep.subr.mxu0 0.0
        %1990 = vmatpush1.msra.mxu0 0.0
        %1991 = vmatprep.subr.mxu0 0.0
        %1992 = vmatpush1.msra.mxu0 0.0
        %1993 = vmatprep.subr.mxu0 0.0
        %1994 = vmatpush1.msra.mxu0 0.0
        %1995 = vmatprep.subr.mxu0 0.0
        %1996 = vmatpush1.msra.mxu0 0.0
        %1997 = vmatprep.mubr.f32.mxu0 0.0
        %1998 = vmatmul.mubr.f32.gmra.mrb[0].mxu0 %v1925
        %v1999 = vpop.f32.mrb[0].mxu0
        %v2000 = vadd.f32 0.0, %v1999
        %v2001 = vpop.f32.mrb[0].mxu0
        %2002 = vmatprep.mubr.f32.mxu0 0.0
        %2003 = vmatmul.mubr.f32.gmra.mrb[0].mxu0 %v1928
        %v2004 = vpop.f32.mrb[0].mxu0
        %v2005 = vadd.f32 0.0, %v2004
        %v2006 = vpop.f32.mrb[0].mxu0
        %2007 = vdwg.mxu0
        %v2008 = vadd.f32 %v1849, %v2000
        %v2009 = vadd.f32 %v1850, %v2005
        %s2010 = sld [smem:[#allocation8]]
        %v2011 = vstv %s2010
        %v2012 = vadd.f32 %v2008, %v2011
        %v2013 = vadd.f32 %v2009, %v2011
        %vm2014 = vcmask 261120
        %2015 = vst.msk [vmem:[%s413] sm:$0xff] %vm2014, %v2012
        %2016 = vst.msk [vmem:[%s413 + $0x8] sm:$0xff] %vm2014, %v2013
        %s2017 = sld [smem:[#allocation5 + $0x1]]
        %v2018 = vstv %s2017
        %v2019 = vmul.f32 %v2018, %v511
        %v2020 = vmul.f32 %v2018, %v516
        %s2021 = sld [smem:[#allocation5 + $0x5]]
        %v2022 = vstv %s2021
        %v2023 = vmul.f32 %v2022, %v751
        %v2024 = vmul.f32 %v2022, %v756
        %v2025 = vadd.f32 %v2019, %v2023
        %v2026 = vadd.f32 %v2020, %v2024
        %s2027 = sld [smem:[#allocation5 + $0x9]]
        %v2028 = vstv %s2027
        %v2029 = vmul.f32 %v2028, %v985
        %v2030 = vmul.f32 %v2028, %v990
        %v2031 = vadd.f32 %v2025, %v2029
        %v2032 = vadd.f32 %v2026, %v2030
        %s2033 = sld [smem:[#allocation5 + $0xd]]
        %v2034 = vstv %s2033
        %v2035 = vmul.f32 %v2034, %v1219
        %v2036 = vmul.f32 %v2034, %v1224
        %v2037 = vadd.f32 %v2031, %v2035
        %v2038 = vadd.f32 %v2032, %v2036
        %s2039 = sld [smem:[#allocation5 + $0x11]]
        %v2040 = vstv %s2039
        %v2041 = vmul.f32 %v2040, %v589
        %v2042 = vmul.f32 %v2040, %v594
        %v2043 = vadd.f32 %v2037, %v2041
        %v2044 = vadd.f32 %v2038, %v2042
        %s2045 = sld [smem:[#allocation5 + $0x15]]
        %v2046 = vstv %s2045
        %v2047 = vmul.f32 %v2046, %v826
        %v2048 = vmul.f32 %v2046, %v831
        %v2049 = vadd.f32 %v2043, %v2047
        %v2050 = vadd.f32 %v2044, %v2048
        %s2051 = sld [smem:[#allocation5 + $0x19]]
        %v2052 = vstv %s2051
        %v2053 = vmul.f32 %v2052, %v1060
        %v2054 = vmul.f32 %v2052, %v1065
        %v2055 = vadd.f32 %v2049, %v2053
        %v2056 = vadd.f32 %v2050, %v2054
        %s2057 = sld [smem:[#allocation5 + $0x1d]]
        %v2058 = vstv %s2057
        %v2059 = vmul.f32 %v2058, %v1294
        %v2060 = vmul.f32 %v2058, %v1299
        %v2061 = vadd.f32 %v2055, %v2059
        %v2062 = vadd.f32 %v2056, %v2060
        %s2063 = sld [smem:[#allocation5 + $0x21]]
        %v2064 = vstv %s2063
        %v2065 = vmul.f32 %v2064, %v667
        %v2066 = vmul.f32 %v2064, %v672
        %v2067 = vadd.f32 %v2061, %v2065
        %v2068 = vadd.f32 %v2062, %v2066
        %s2069 = sld [smem:[#allocation5 + $0x25]]
        %v2070 = vstv %s2069
        %v2071 = vmul.f32 %v2070, %v901
        %v2072 = vmul.f32 %v2070, %v906
        %v2073 = vadd.f32 %v2067, %v2071
        %v2074 = vadd.f32 %v2068, %v2072
        %s2075 = sld [smem:[#allocation5 + $0x29]]
        %v2076 = vstv %s2075
        %v2077 = vmul.f32 %v2076, %v1135
        %v2078 = vmul.f32 %v2076, %v1140
        %v2079 = vadd.f32 %v2073, %v2077
        %v2080 = vadd.f32 %v2074, %v2078
        %s2081 = sld [smem:[#allocation5 + $0x2d]]
        %v2082 = vstv %s2081
        %v2083 = vmul.f32 %v2082, %v1369
        %v2084 = vmul.f32 %v2082, %v1374
        %v2085 = vadd.f32 %v2079, %v2083
        %v2086 = vadd.f32 %v2080, %v2084
        %v2087 = vld [vmem:[%s3] sm:$0xff]
        %v2088 = vld [vmem:[%s3 + $0x8] sm:$0xff]
        %s2089 = sld [smem:[#allocation5 + $0x31]]
        %v2090 = vstv %s2089
        %v2091 = vmul.f32 %v2090, %v511
        %v2092 = vmul.f32 %v2090, %v516
        %s2093 = sld [smem:[#allocation5 + $0x35]]
        %v2094 = vstv %s2093
        %v2095 = vmul.f32 %v2094, %v751
        %v2096 = vmul.f32 %v2094, %v756
        %v2097 = vadd.f32 %v2091, %v2095
        %v2098 = vadd.f32 %v2092, %v2096
        %s2099 = sld [smem:[#allocation5 + $0x39]]
        %v2100 = vstv %s2099
        %v2101 = vmul.f32 %v2100, %v985
        %v2102 = vmul.f32 %v2100, %v990
        %v2103 = vadd.f32 %v2097, %v2101
        %v2104 = vadd.f32 %v2098, %v2102
        %s2105 = sld [smem:[#allocation5 + $0x3d]]
        %v2106 = vstv %s2105
        %v2107 = vmul.f32 %v2106, %v1219
        %v2108 = vmul.f32 %v2106, %v1224
        %v2109 = vadd.f32 %v2103, %v2107
        %v2110 = vadd.f32 %v2104, %v2108
        %s2111 = sld [smem:[#allocation5 + $0x41]]
        %v2112 = vstv %s2111
        %v2113 = vmul.f32 %v2112, %v589
        %v2114 = vmul.f32 %v2112, %v594
        %v2115 = vadd.f32 %v2109, %v2113
        %v2116 = vadd.f32 %v2110, %v2114
        %s2117 = sld [smem:[#allocation5 + $0x45]]
        %v2118 = vstv %s2117
        %v2119 = vmul.f32 %v2118, %v826
        %v2120 = vmul.f32 %v2118, %v831
        %v2121 = vadd.f32 %v2115, %v2119
        %v2122 = vadd.f32 %v2116, %v2120
        %s2123 = sld [smem:[#allocation5 + $0x49]]
        %v2124 = vstv %s2123
        %v2125 = vmul.f32 %v2124, %v1060
        %v2126 = vmul.f32 %v2124, %v1065
        %v2127 = vadd.f32 %v2121, %v2125
        %v2128 = vadd.f32 %v2122, %v2126
        %s2129 = sld [smem:[#allocation5 + $0x4d]]
        %v2130 = vstv %s2129
        %v2131 = vmul.f32 %v2130, %v1294
        %v2132 = vmul.f32 %v2130, %v1299
        %v2133 = vadd.f32 %v2127, %v2131
        %v2134 = vadd.f32 %v2128, %v2132
        %s2135 = sld [smem:[#allocation5 + $0x51]]
        %v2136 = vstv %s2135
        %v2137 = vmul.f32 %v2136, %v667
        %v2138 = vmul.f32 %v2136, %v672
        %v2139 = vadd.f32 %v2133, %v2137
        %v2140 = vadd.f32 %v2134, %v2138
        %s2141 = sld [smem:[#allocation5 + $0x55]]
        %v2142 = vstv %s2141
        %v2143 = vmul.f32 %v2142, %v901
        %v2144 = vmul.f32 %v2142, %v906
        %v2145 = vadd.f32 %v2139, %v2143
        %v2146 = vadd.f32 %v2140, %v2144
        %s2147 = sld [smem:[#allocation5 + $0x59]]
        %v2148 = vstv %s2147
        %v2149 = vmul.f32 %v2148, %v1135
        %v2150 = vmul.f32 %v2148, %v1140
        %v2151 = vadd.f32 %v2145, %v2149
        %v2152 = vadd.f32 %v2146, %v2150
        %s2153 = sld [smem:[#allocation5 + $0x5d]]
        %v2154 = vstv %s2153
        %v2155 = vmul.f32 %v2154, %v1369
        %v2156 = vmul.f32 %v2154, %v1374
        %v2157 = vadd.f32 %v2151, %v2155
        %v2158 = vadd.f32 %v2152, %v2156
        %v2159 = vld [vmem:[%s1519] sm:$0xff]
        %v2160 = vld [vmem:[%s1519 + $0x8] sm:$0xff]
        %v2162 = vsel %vm1522, %v2159, 0
        %v2165 = vsel %vm1522, %v2160, 0
        %v2168 = vsel %vm1529, %v2158, 0
        %2170 = vmatprep.subr.mxu0 0.0
        %2171 = vmatpush1.msra.mxu0 %v2157
        %2172 = vmatprep.subr.mxu0 0.0
        %2173 = vmatpush1.msra.mxu0 %v2168
        %2174 = vmatprep.subr.mxu0 0.0
        %2175 = vmatpush1.msra.mxu0 0.0
        %2176 = vmatprep.subr.mxu0 0.0
        %2177 = vmatpush1.msra.mxu0 0.0
        %2178 = vmatprep.subr.mxu0 0.0
        %2179 = vmatpush1.msra.mxu0 0.0
        %2180 = vmatprep.subr.mxu0 0.0
        %2181 = vmatpush1.msra.mxu0 0.0
        %2182 = vmatprep.subr.mxu0 0.0
        %2183 = vmatpush1.msra.mxu0 0.0
        %2184 = vmatprep.subr.mxu0 0.0
        %2185 = vmatpush1.msra.mxu0 0.0
        %2186 = vmatprep.subr.mxu0 0.0
        %2187 = vmatpush1.msra.mxu0 0.0
        %2188 = vmatprep.subr.mxu0 0.0
        %2189 = vmatpush1.msra.mxu0 0.0
        %2190 = vmatprep.subr.mxu0 0.0
        %2191 = vmatpush1.msra.mxu0 0.0
        %2192 = vmatprep.subr.mxu0 0.0
        %2193 = vmatpush1.msra.mxu0 0.0
        %2194 = vmatprep.subr.mxu0 0.0
        %2195 = vmatpush1.msra.mxu0 0.0
        %2196 = vmatprep.subr.mxu0 0.0
        %2197 = vmatpush1.msra.mxu0 0.0
        %2198 = vmatprep.subr.mxu0 0.0
        %2199 = vmatpush1.msra.mxu0 0.0
        %2200 = vmatprep.subr.mxu0 0.0
        %2201 = vmatpush1.msra.mxu0 0.0
        %2202 = vmatprep.subr.mxu0 0.0
        %2203 = vmatpush1.msra.mxu0 0.0
        %2204 = vmatprep.subr.mxu0 0.0
        %2205 = vmatpush1.msra.mxu0 0.0
        %2206 = vmatprep.subr.mxu0 0.0
        %2207 = vmatpush1.msra.mxu0 0.0
        %2208 = vmatprep.subr.mxu0 0.0
        %2209 = vmatpush1.msra.mxu0 0.0
        %2210 = vmatprep.subr.mxu0 0.0
        %2211 = vmatpush1.msra.mxu0 0.0
        %2212 = vmatprep.subr.mxu0 0.0
        %2213 = vmatpush1.msra.mxu0 0.0
        %2214 = vmatprep.subr.mxu0 0.0
        %2215 = vmatpush1.msra.mxu0 0.0
        %2216 = vmatprep.subr.mxu0 0.0
        %2217 = vmatpush1.msra.mxu0 0.0
        %2218 = vmatprep.subr.mxu0 0.0
        %2219 = vmatpush1.msra.mxu0 0.0
        %2220 = vmatprep.subr.mxu0 0.0
        %2221 = vmatpush1.msra.mxu0 0.0
        %2222 = vmatprep.subr.mxu0 0.0
        %2223 = vmatpush1.msra.mxu0 0.0
        %2224 = vmatprep.subr.mxu0 0.0
        %2225 = vmatpush1.msra.mxu0 0.0
        %2226 = vmatprep.subr.mxu0 0.0
        %2227 = vmatpush1.msra.mxu0 0.0
        %2228 = vmatprep.subr.mxu0 0.0
        %2229 = vmatpush1.msra.mxu0 0.0
        %2230 = vmatprep.subr.mxu0 0.0
        %2231 = vmatpush1.msra.mxu0 0.0
        %2232 = vmatprep.subr.mxu0 0.0
        %2233 = vmatpush1.msra.mxu0 0.0
        %2234 = vmatprep.mubr.f32.mxu0 0.0
        %2235 = vmatmul.mubr.f32.gmra.mrb[0].mxu0 %v2162
        %v2236 = vpop.f32.mrb[0].mxu0
        %v2237 = vadd.f32 0.0, %v2236
        %v2238 = vpop.f32.mrb[0].mxu0
        %2239 = vmatprep.mubr.f32.mxu0 0.0
        %2240 = vmatmul.mubr.f32.gmra.mrb[0].mxu0 %v2165
        %v2241 = vpop.f32.mrb[0].mxu0
        %v2242 = vadd.f32 0.0, %v2241
        %v2243 = vpop.f32.mrb[0].mxu0
        %2244 = vdwg.mxu0
        %v2246 = vsel %vm1522, %v2087, 0
        %v2249 = vsel %vm1522, %v2088, 0
        %v2252 = vsel %vm1529, %v2086, 0
        %2254 = vmatprep.subr.mxu0 0.0
        %2255 = vmatpush1.msra.mxu0 %v2085
        %2256 = vmatprep.subr.mxu0 0.0
        %2257 = vmatpush1.msra.mxu0 %v2252
        %2258 = vmatprep.subr.mxu0 0.0
        %2259 = vmatpush1.msra.mxu0 0.0
        %2260 = vmatprep.subr.mxu0 0.0
        %2261 = vmatpush1.msra.mxu0 0.0
        %2262 = vmatprep.subr.mxu0 0.0
        %2263 = vmatpush1.msra.mxu0 0.0
        %2264 = vmatprep.subr.mxu0 0.0
        %2265 = vmatpush1.msra.mxu0 0.0
        %2266 = vmatprep.subr.mxu0 0.0
        %2267 = vmatpush1.msra.mxu0 0.0
        %2268 = vmatprep.subr.mxu0 0.0
        %2269 = vmatpush1.msra.mxu0 0.0
        %2270 = vmatprep.subr.mxu0 0.0
        %2271 = vmatpush1.msra.mxu0 0.0
        %2272 = vmatprep.subr.mxu0 0.0
        %2273 = vmatpush1.msra.mxu0 0.0
        %2274 = vmatprep.subr.mxu0 0.0
        %2275 = vmatpush1.msra.mxu0 0.0
        %2276 = vmatprep.subr.mxu0 0.0
        %2277 = vmatpush1.msra.mxu0 0.0
        %2278 = vmatprep.subr.mxu0 0.0
        %2279 = vmatpush1.msra.mxu0 0.0
        %2280 = vmatprep.subr.mxu0 0.0
        %2281 = vmatpush1.msra.mxu0 0.0
        %2282 = vmatprep.subr.mxu0 0.0
        %2283 = vmatpush1.msra.mxu0 0.0
        %2284 = vmatprep.subr.mxu0 0.0
        %2285 = vmatpush1.msra.mxu0 0.0
        %2286 = vmatprep.subr.mxu0 0.0
        %2287 = vmatpush1.msra.mxu0 0.0
        %2288 = vmatprep.subr.mxu0 0.0
        %2289 = vmatpush1.msra.mxu0 0.0
        %2290 = vmatprep.subr.mxu0 0.0
        %2291 = vmatpush1.msra.mxu0 0.0
        %2292 = vmatprep.subr.mxu0 0.0
        %2293 = vmatpush1.msra.mxu0 0.0
        %2294 = vmatprep.subr.mxu0 0.0
        %2295 = vmatpush1.msra.mxu0 0.0
        %2296 = vmatprep.subr.mxu0 0.0
        %2297 = vmatpush1.msra.mxu0 0.0
        %2298 = vmatprep.subr.mxu0 0.0
        %2299 = vmatpush1.msra.mxu0 0.0
        %2300 = vmatprep.subr.mxu0 0.0
        %2301 = vmatpush1.msra.mxu0 0.0
        %2302 = vmatprep.subr.mxu0 0.0
        %2303 = vmatpush1.msra.mxu0 0.0
        %2304 = vmatprep.subr.mxu0 0.0
        %2305 = vmatpush1.msra.mxu0 0.0
        %2306 = vmatprep.subr.mxu0 0.0
        %2307 = vmatpush1.msra.mxu0 0.0
        %2308 = vmatprep.subr.mxu0 0.0
        %2309 = vmatpush1.msra.mxu0 0.0
        %2310 = vmatprep.subr.mxu0 0.0
        %2311 = vmatpush1.msra.mxu0 0.0
        %2312 = vmatprep.subr.mxu0 0.0
        %2313 = vmatpush1.msra.mxu0 0.0
        %2314 = vmatprep.subr.mxu0 0.0
        %2315 = vmatpush1.msra.mxu0 0.0
        %2316 = vmatprep.subr.mxu0 0.0
        %2317 = vmatpush1.msra.mxu0 0.0
        %2318 = vmatprep.mubr.f32.mxu0 0.0
        %2319 = vmatmul.mubr.f32.gmra.mrb[0].mxu0 %v2246
        %v2320 = vpop.f32.mrb[0].mxu0
        %v2321 = vadd.f32 %v2237, %v2320
        %v2322 = vpop.f32.mrb[0].mxu0
        %2323 = vmatprep.mubr.f32.mxu0 0.0
        %2324 = vmatmul.mubr.f32.gmra.mrb[0].mxu0 %v2249
        %v2325 = vpop.f32.mrb[0].mxu0
        %v2326 = vadd.f32 %v2242, %v2325
        %v2327 = vpop.f32.mrb[0].mxu0
        %2328 = vdwg.mxu0
        %s2329 = sld [smem:[#allocation5 + $0x61]]
        %v2330 = vstv %s2329
        %v2331 = vmul.f32 %v2330, %v511
        %v2332 = vmul.f32 %v2330, %v516
        %s2333 = sld [smem:[#allocation5 + $0x65]]
        %v2334 = vstv %s2333
        %v2335 = vmul.f32 %v2334, %v751
        %v2336 = vmul.f32 %v2334, %v756
        %v2337 = vadd.f32 %v2331, %v2335
        %v2338 = vadd.f32 %v2332, %v2336
        %s2339 = sld [smem:[#allocation5 + $0x69]]
        %v2340 = vstv %s2339
        %v2341 = vmul.f32 %v2340, %v985
        %v2342 = vmul.f32 %v2340, %v990
        %v2343 = vadd.f32 %v2337, %v2341
        %v2344 = vadd.f32 %v2338, %v2342
        %s2345 = sld [smem:[#allocation5 + $0x6d]]
        %v2346 = vstv %s2345
        %v2347 = vmul.f32 %v2346, %v1219
        %v2348 = vmul.f32 %v2346, %v1224
        %v2349 = vadd.f32 %v2343, %v2347
        %v2350 = vadd.f32 %v2344, %v2348
        %s2351 = sld [smem:[#allocation5 + $0x71]]
        %v2352 = vstv %s2351
        %v2353 = vmul.f32 %v2352, %v589
        %v2354 = vmul.f32 %v2352, %v594
        %v2355 = vadd.f32 %v2349, %v2353
        %v2356 = vadd.f32 %v2350, %v2354
        %s2357 = sld [smem:[#allocation5 + $0x75]]
        %v2358 = vstv %s2357
        %v2359 = vmul.f32 %v2358, %v826
        %v2360 = vmul.f32 %v2358, %v831
        %v2361 = vadd.f32 %v2355, %v2359
        %v2362 = vadd.f32 %v2356, %v2360
        %s2363 = sld [smem:[#allocation5 + $0x79]]
        %v2364 = vstv %s2363
        %v2365 = vmul.f32 %v2364, %v1060
        %v2366 = vmul.f32 %v2364, %v1065
        %v2367 = vadd.f32 %v2361, %v2365
        %v2368 = vadd.f32 %v2362, %v2366
        %s2369 = sld [smem:[#allocation5 + $0x7d]]
        %v2370 = vstv %s2369
        %v2371 = vmul.f32 %v2370, %v1294
        %v2372 = vmul.f32 %v2370, %v1299
        %v2373 = vadd.f32 %v2367, %v2371
        %v2374 = vadd.f32 %v2368, %v2372
        %s2375 = sld [smem:[#allocation5 + $0x81]]
        %v2376 = vstv %s2375
        %v2377 = vmul.f32 %v2376, %v667
        %v2378 = vmul.f32 %v2376, %v672
        %v2379 = vadd.f32 %v2373, %v2377
        %v2380 = vadd.f32 %v2374, %v2378
        %s2381 = sld [smem:[#allocation5 + $0x85]]
        %v2382 = vstv %s2381
        %v2383 = vmul.f32 %v2382, %v901
        %v2384 = vmul.f32 %v2382, %v906
        %v2385 = vadd.f32 %v2379, %v2383
        %v2386 = vadd.f32 %v2380, %v2384
        %s2387 = sld [smem:[#allocation5 + $0x89]]
        %v2388 = vstv %s2387
        %v2389 = vmul.f32 %v2388, %v1135
        %v2390 = vmul.f32 %v2388, %v1140
        %v2391 = vadd.f32 %v2385, %v2389
        %v2392 = vadd.f32 %v2386, %v2390
        %s2393 = sld [smem:[#allocation5 + $0x8d]]
        %v2394 = vstv %s2393
        %v2395 = vmul.f32 %v2394, %v1369
        %v2396 = vmul.f32 %v2394, %v1374
        %v2397 = vadd.f32 %v2391, %v2395
        %v2398 = vadd.f32 %v2392, %v2396
        %v2399 = vld [vmem:[%s1762] sm:$0xff]
        %v2400 = vld [vmem:[%s1762 + $0x8] sm:$0xff]
        %v2402 = vsel %vm1522, %v2399, 0
        %v2405 = vsel %vm1522, %v2400, 0
        %v2408 = vsel %vm1529, %v2398, 0
        %2410 = vmatprep.subr.mxu0 0.0
        %2411 = vmatpush1.msra.mxu0 %v2397
        %2412 = vmatprep.subr.mxu0 0.0
        %2413 = vmatpush1.msra.mxu0 %v2408
        %2414 = vmatprep.subr.mxu0 0.0
        %2415 = vmatpush1.msra.mxu0 0.0
        %2416 = vmatprep.subr.mxu0 0.0
        %2417 = vmatpush1.msra.mxu0 0.0
        %2418 = vmatprep.subr.mxu0 0.0
        %2419 = vmatpush1.msra.mxu0 0.0
        %2420 = vmatprep.subr.mxu0 0.0
        %2421 = vmatpush1.msra.mxu0 0.0
        %2422 = vmatprep.subr.mxu0 0.0
        %2423 = vmatpush1.msra.mxu0 0.0
        %2424 = vmatprep.subr.mxu0 0.0
        %2425 = vmatpush1.msra.mxu0 0.0
        %2426 = vmatprep.subr.mxu0 0.0
        %2427 = vmatpush1.msra.mxu0 0.0
        %2428 = vmatprep.subr.mxu0 0.0
        %2429 = vmatpush1.msra.mxu0 0.0
        %2430 = vmatprep.subr.mxu0 0.0
        %2431 = vmatpush1.msra.mxu0 0.0
        %2432 = vmatprep.subr.mxu0 0.0
        %2433 = vmatpush1.msra.mxu0 0.0
        %2434 = vmatprep.subr.mxu0 0.0
        %2435 = vmatpush1.msra.mxu0 0.0
        %2436 = vmatprep.subr.mxu0 0.0
        %2437 = vmatpush1.msra.mxu0 0.0
        %2438 = vmatprep.subr.mxu0 0.0
        %2439 = vmatpush1.msra.mxu0 0.0
        %2440 = vmatprep.subr.mxu0 0.0
        %2441 = vmatpush1.msra.mxu0 0.0
        %2442 = vmatprep.subr.mxu0 0.0
        %2443 = vmatpush1.msra.mxu0 0.0
        %2444 = vmatprep.subr.mxu0 0.0
        %2445 = vmatpush1.msra.mxu0 0.0
        %2446 = vmatprep.subr.mxu0 0.0
        %2447 = vmatpush1.msra.mxu0 0.0
        %2448 = vmatprep.subr.mxu0 0.0
        %2449 = vmatpush1.msra.mxu0 0.0
        %2450 = vmatprep.subr.mxu0 0.0
        %2451 = vmatpush1.msra.mxu0 0.0
        %2452 = vmatprep.subr.mxu0 0.0
        %2453 = vmatpush1.msra.mxu0 0.0
        %2454 = vmatprep.subr.mxu0 0.0
        %2455 = vmatpush1.msra.mxu0 0.0
        %2456 = vmatprep.subr.mxu0 0.0
        %2457 = vmatpush1.msra.mxu0 0.0
        %2458 = vmatprep.subr.mxu0 0.0
        %2459 = vmatpush1.msra.mxu0 0.0
        %2460 = vmatprep.subr.mxu0 0.0
        %2461 = vmatpush1.msra.mxu0 0.0
        %2462 = vmatprep.subr.mxu0 0.0
        %2463 = vmatpush1.msra.mxu0 0.0
        %2464 = vmatprep.subr.mxu0 0.0
        %2465 = vmatpush1.msra.mxu0 0.0
        %2466 = vmatprep.subr.mxu0 0.0
        %2467 = vmatpush1.msra.mxu0 0.0
        %2468 = vmatprep.subr.mxu0 0.0
        %2469 = vmatpush1.msra.mxu0 0.0
        %2470 = vmatprep.subr.mxu0 0.0
        %2471 = vmatpush1.msra.mxu0 0.0
        %2472 = vmatprep.subr.mxu0 0.0
        %2473 = vmatpush1.msra.mxu0 0.0
        %2474 = vmatprep.mubr.f32.mxu0 0.0
        %2475 = vmatmul.mubr.f32.gmra.mrb[0].mxu0 %v2402
        %v2476 = vpop.f32.mrb[0].mxu0
        %v2477 = vadd.f32 0.0, %v2476
        %v2478 = vpop.f32.mrb[0].mxu0
        %2479 = vmatprep.mubr.f32.mxu0 0.0
        %2480 = vmatmul.mubr.f32.gmra.mrb[0].mxu0 %v2405
        %v2481 = vpop.f32.mrb[0].mxu0
        %v2482 = vadd.f32 0.0, %v2481
        %v2483 = vpop.f32.mrb[0].mxu0
        %2484 = vdwg.mxu0
        %v2485 = vadd.f32 %v2321, %v2477
        %v2486 = vadd.f32 %v2326, %v2482
        %s2487 = sld [smem:[#allocation5 + $0x91]]
        %v2488 = vstv %s2487
        %v2489 = vmul.f32 %v2488, %v511
        %v2490 = vmul.f32 %v2488, %v516
        %s2491 = sld [smem:[#allocation5 + $0x95]]
        %v2492 = vstv %s2491
        %v2493 = vmul.f32 %v2492, %v751
        %v2494 = vmul.f32 %v2492, %v756
        %v2495 = vadd.f32 %v2489, %v2493
        %v2496 = vadd.f32 %v2490, %v2494
        %s2497 = sld [smem:[#allocation5 + $0x99]]
        %v2498 = vstv %s2497
        %v2499 = vmul.f32 %v2498, %v985
        %v2500 = vmul.f32 %v2498, %v990
        %v2501 = vadd.f32 %v2495, %v2499
        %v2502 = vadd.f32 %v2496, %v2500
        %s2503 = sld [smem:[#allocation5 + $0x9d]]
        %v2504 = vstv %s2503
        %v2505 = vmul.f32 %v2504, %v1219
        %v2506 = vmul.f32 %v2504, %v1224
        %v2507 = vadd.f32 %v2501, %v2505
        %v2508 = vadd.f32 %v2502, %v2506
        %s2509 = sld [smem:[#allocation5 + $0xa1]]
        %v2510 = vstv %s2509
        %v2511 = vmul.f32 %v2510, %v589
        %v2512 = vmul.f32 %v2510, %v594
        %v2513 = vadd.f32 %v2507, %v2511
        %v2514 = vadd.f32 %v2508, %v2512
        %s2515 = sld [smem:[#allocation5 + $0xa5]]
        %v2516 = vstv %s2515
        %v2517 = vmul.f32 %v2516, %v826
        %v2518 = vmul.f32 %v2516, %v831
        %v2519 = vadd.f32 %v2513, %v2517
        %v2520 = vadd.f32 %v2514, %v2518
        %s2521 = sld [smem:[#allocation5 + $0xa9]]
        %v2522 = vstv %s2521
        %v2523 = vmul.f32 %v2522, %v1060
        %v2524 = vmul.f32 %v2522, %v1065
        %v2525 = vadd.f32 %v2519, %v2523
        %v2526 = vadd.f32 %v2520, %v2524
        %s2527 = sld [smem:[#allocation5 + $0xad]]
        %v2528 = vstv %s2527
        %v2529 = vmul.f32 %v2528, %v1294
        %v2530 = vmul.f32 %v2528, %v1299
        %v2531 = vadd.f32 %v2525, %v2529
        %v2532 = vadd.f32 %v2526, %v2530
        %s2533 = sld [smem:[#allocation5 + $0xb1]]
        %v2534 = vstv %s2533
        %v2535 = vmul.f32 %v2534, %v667
        %v2536 = vmul.f32 %v2534, %v672
        %v2537 = vadd.f32 %v2531, %v2535
        %v2538 = vadd.f32 %v2532, %v2536
        %s2539 = sld [smem:[#allocation5 + $0xb5]]
        %v2540 = vstv %s2539
        %v2541 = vmul.f32 %v2540, %v901
        %v2542 = vmul.f32 %v2540, %v906
        %v2543 = vadd.f32 %v2537, %v2541
        %v2544 = vadd.f32 %v2538, %v2542
        %s2545 = sld [smem:[#allocation5 + $0xb9]]
        %v2546 = vstv %s2545
        %v2547 = vmul.f32 %v2546, %v1135
        %v2548 = vmul.f32 %v2546, %v1140
        %v2549 = vadd.f32 %v2543, %v2547
        %v2550 = vadd.f32 %v2544, %v2548
        %s2551 = sld [smem:[#allocation5 + $0xbd]]
        %v2552 = vstv %s2551
        %v2553 = vmul.f32 %v2552, %v1369
        %v2554 = vmul.f32 %v2552, %v1374
        %v2555 = vadd.f32 %v2549, %v2553
        %v2556 = vadd.f32 %v2550, %v2554
        %v2557 = vld [vmem:[%s1921] sm:$0xff]
        %v2558 = vld [vmem:[%s1921 + $0x8] sm:$0xff]
        %v2560 = vsel %vm1522, %v2557, 0
        %v2563 = vsel %vm1522, %v2558, 0
        %v2566 = vsel %vm1529, %v2556, 0
        %2568 = vmatprep.subr.mxu0 0.0
        %2569 = vmatpush1.msra.mxu0 %v2555
        %2570 = vmatprep.subr.mxu0 0.0
        %2571 = vmatpush1.msra.mxu0 %v2566
        %2572 = vmatprep.subr.mxu0 0.0
        %2573 = vmatpush1.msra.mxu0 0.0
        %2574 = vmatprep.subr.mxu0 0.0
        %2575 = vmatpush1.msra.mxu0 0.0
        %2576 = vmatprep.subr.mxu0 0.0
        %2577 = vmatpush1.msra.mxu0 0.0
        %2578 = vmatprep.subr.mxu0 0.0
        %2579 = vmatpush1.msra.mxu0 0.0
        %2580 = vmatprep.subr.mxu0 0.0
        %2581 = vmatpush1.msra.mxu0 0.0
        %2582 = vmatprep.subr.mxu0 0.0
        %2583 = vmatpush1.msra.mxu0 0.0
        %2584 = vmatprep.subr.mxu0 0.0
        %2585 = vmatpush1.msra.mxu0 0.0
        %2586 = vmatprep.subr.mxu0 0.0
        %2587 = vmatpush1.msra.mxu0 0.0
        %2588 = vmatprep.subr.mxu0 0.0
        %2589 = vmatpush1.msra.mxu0 0.0
        %2590 = vmatprep.subr.mxu0 0.0
        %2591 = vmatpush1.msra.mxu0 0.0
        %2592 = vmatprep.subr.mxu0 0.0
        %2593 = vmatpush1.msra.mxu0 0.0
        %2594 = vmatprep.subr.mxu0 0.0
        %2595 = vmatpush1.msra.mxu0 0.0
        %2596 = vmatprep.subr.mxu0 0.0
        %2597 = vmatpush1.msra.mxu0 0.0
        %2598 = vmatprep.subr.mxu0 0.0
        %2599 = vmatpush1.msra.mxu0 0.0
        %2600 = vmatprep.subr.mxu0 0.0
        %2601 = vmatpush1.msra.mxu0 0.0
        %2602 = vmatprep.subr.mxu0 0.0
        %2603 = vmatpush1.msra.mxu0 0.0
        %2604 = vmatprep.subr.mxu0 0.0
        %2605 = vmatpush1.msra.mxu0 0.0
        %2606 = vmatprep.subr.mxu0 0.0
        %2607 = vmatpush1.msra.mxu0 0.0
        %2608 = vmatprep.subr.mxu0 0.0
        %2609 = vmatpush1.msra.mxu0 0.0
        %2610 = vmatprep.subr.mxu0 0.0
        %2611 = vmatpush1.msra.mxu0 0.0
        %2612 = vmatprep.subr.mxu0 0.0
        %2613 = vmatpush1.msra.mxu0 0.0
        %2614 = vmatprep.subr.mxu0 0.0
        %2615 = vmatpush1.msra.mxu0 0.0
        %2616 = vmatprep.subr.mxu0 0.0
        %2617 = vmatpush1.msra.mxu0 0.0
        %2618 = vmatprep.subr.mxu0 0.0
        %2619 = vmatpush1.msra.mxu0 0.0
        %2620 = vmatprep.subr.mxu0 0.0
        %2621 = vmatpush1.msra.mxu0 0.0
        %2622 = vmatprep.subr.mxu0 0.0
        %2623 = vmatpush1.msra.mxu0 0.0
        %2624 = vmatprep.subr.mxu0 0.0
        %2625 = vmatpush1.msra.mxu0 0.0
        %2626 = vmatprep.subr.mxu0 0.0
        %2627 = vmatpush1.msra.mxu0 0.0
        %2628 = vmatprep.subr.mxu0 0.0
        %2629 = vmatpush1.msra.mxu0 0.0
        %2630 = vmatprep.subr.mxu0 0.0
        %2631 = vmatpush1.msra.mxu0 0.0
        %2632 = vmatprep.mubr.f32.mxu0 0.0
        %2633 = vmatmul.mubr.f32.gmra.mrb[0].mxu0 %v2560
        %v2634 = vpop.f32.mrb[0].mxu0
        %v2635 = vadd.f32 0.0, %v2634
        %v2636 = vpop.f32.mrb[0].mxu0
        %2637 = vmatprep.mubr.f32.mxu0 0.0
        %2638 = vmatmul.mubr.f32.gmra.mrb[0].mxu0 %v2563
        %v2639 = vpop.f32.mrb[0].mxu0
        %v2640 = vadd.f32 0.0, %v2639
        %v2641 = vpop.f32.mrb[0].mxu0
        %2642 = vdwg.mxu0
        %v2643 = vadd.f32 %v2485, %v2635
        %v2644 = vadd.f32 %v2486, %v2640
        %s2645 = sld [smem:[#allocation8 + $0x1]]
        %v2646 = vstv %s2645
        %v2647 = vadd.f32 %v2643, %v2646
        %v2648 = vadd.f32 %v2644, %v2646
        %s2649 = scalar_lea.vmem %s413, 16 [#allocation10]
        %2650 = vst.msk [vmem:[%s2649] sm:$0xff] %vm2014, %v2647
        %2651 = vst.msk [vmem:[%s2649 + $0x8] sm:$0xff] %vm2014, %v2648
        %s2652 = sld [smem:[#allocation5 + $0x2]]
        %v2653 = vstv %s2652
        %v2654 = vmul.f32 %v2653, %v511
        %v2655 = vmul.f32 %v2653, %v516
        %s2656 = sld [smem:[#allocation5 + $0x6]]
        %v2657 = vstv %s2656
        %v2658 = vmul.f32 %v2657, %v751
        %v2659 = vmul.f32 %v2657, %v756
        %v2660 = vadd.f32 %v2654, %v2658
        %v2661 = vadd.f32 %v2655, %v2659
        %s2662 = sld [smem:[#allocation5 + $0xa]]
        %v2663 = vstv %s2662
        %v2664 = vmul.f32 %v2663, %v985
        %v2665 = vmul.f32 %v2663, %v990
        %v2666 = vadd.f32 %v2660, %v2664
        %v2667 = vadd.f32 %v2661, %v2665
        %s2668 = sld [smem:[#allocation5 + $0xe]]
        %v2669 = vstv %s2668
        %v2670 = vmul.f32 %v2669, %v1219
        %v2671 = vmul.f32 %v2669, %v1224
        %v2672 = vadd.f32 %v2666, %v2670
        %v2673 = vadd.f32 %v2667, %v2671
        %s2674 = sld [smem:[#allocation5 + $0x12]]
        %v2675 = vstv %s2674
        %v2676 = vmul.f32 %v2675, %v589
        %v2677 = vmul.f32 %v2675, %v594
        %v2678 = vadd.f32 %v2672, %v2676
        %v2679 = vadd.f32 %v2673, %v2677
        %s2680 = sld [smem:[#allocation5 + $0x16]]
        %v2681 = vstv %s2680
        %v2682 = vmul.f32 %v2681, %v826
        %v2683 = vmul.f32 %v2681, %v831
        %v2684 = vadd.f32 %v2678, %v2682
        %v2685 = vadd.f32 %v2679, %v2683
        %s2686 = sld [smem:[#allocation5 + $0x1a]]
        %v2687 = vstv %s2686
        %v2688 = vmul.f32 %v2687, %v1060
        %v2689 = vmul.f32 %v2687, %v1065
        %v2690 = vadd.f32 %v2684, %v2688
        %v2691 = vadd.f32 %v2685, %v2689
        %s2692 = sld [smem:[#allocation5 + $0x1e]]
        %v2693 = vstv %s2692
        %v2694 = vmul.f32 %v2693, %v1294
        %v2695 = vmul.f32 %v2693, %v1299
        %v2696 = vadd.f32 %v2690, %v2694
        %v2697 = vadd.f32 %v2691, %v2695
        %s2698 = sld [smem:[#allocation5 + $0x22]]
        %v2699 = vstv %s2698
        %v2700 = vmul.f32 %v2699, %v667
        %v2701 = vmul.f32 %v2699, %v672
        %v2702 = vadd.f32 %v2696, %v2700
        %v2703 = vadd.f32 %v2697, %v2701
        %s2704 = sld [smem:[#allocation5 + $0x26]]
        %v2705 = vstv %s2704
        %v2706 = vmul.f32 %v2705, %v901
        %v2707 = vmul.f32 %v2705, %v906
        %v2708 = vadd.f32 %v2702, %v2706
        %v2709 = vadd.f32 %v2703, %v2707
        %s2710 = sld [smem:[#allocation5 + $0x2a]]
        %v2711 = vstv %s2710
        %v2712 = vmul.f32 %v2711, %v1135
        %v2713 = vmul.f32 %v2711, %v1140
        %v2714 = vadd.f32 %v2708, %v2712
        %v2715 = vadd.f32 %v2709, %v2713
        %s2716 = sld [smem:[#allocation5 + $0x2e]]
        %v2717 = vstv %s2716
        %v2718 = vmul.f32 %v2717, %v1369
        %v2719 = vmul.f32 %v2717, %v1374
        %v2720 = vadd.f32 %v2714, %v2718
        %v2721 = vadd.f32 %v2715, %v2719
        %v2722 = vld [vmem:[%s3] sm:$0xff]
        %v2723 = vld [vmem:[%s3 + $0x8] sm:$0xff]
        %s2724 = sld [smem:[#allocation5 + $0x32]]
        %v2725 = vstv %s2724
        %v2726 = vmul.f32 %v2725, %v511
        %v2727 = vmul.f32 %v2725, %v516
        %s2728 = sld [smem:[#allocation5 + $0x36]]
        %v2729 = vstv %s2728
        %v2730 = vmul.f32 %v2729, %v751
        %v2731 = vmul.f32 %v2729, %v756
        %v2732 = vadd.f32 %v2726, %v2730
        %v2733 = vadd.f32 %v2727, %v2731
        %s2734 = sld [smem:[#allocation5 + $0x3a]]
        %v2735 = vstv %s2734
        %v2736 = vmul.f32 %v2735, %v985
        %v2737 = vmul.f32 %v2735, %v990
        %v2738 = vadd.f32 %v2732, %v2736
        %v2739 = vadd.f32 %v2733, %v2737
        %s2740 = sld [smem:[#allocation5 + $0x3e]]
        %v2741 = vstv %s2740
        %v2742 = vmul.f32 %v2741, %v1219
        %v2743 = vmul.f32 %v2741, %v1224
        %v2744 = vadd.f32 %v2738, %v2742
        %v2745 = vadd.f32 %v2739, %v2743
        %s2746 = sld [smem:[#allocation5 + $0x42]]
        %v2747 = vstv %s2746
        %v2748 = vmul.f32 %v2747, %v589
        %v2749 = vmul.f32 %v2747, %v594
        %v2750 = vadd.f32 %v2744, %v2748
        %v2751 = vadd.f32 %v2745, %v2749
        %s2752 = sld [smem:[#allocation5 + $0x46]]
        %v2753 = vstv %s2752
        %v2754 = vmul.f32 %v2753, %v826
        %v2755 = vmul.f32 %v2753, %v831
        %v2756 = vadd.f32 %v2750, %v2754
        %v2757 = vadd.f32 %v2751, %v2755
        %s2758 = sld [smem:[#allocation5 + $0x4a]]
        %v2759 = vstv %s2758
        %v2760 = vmul.f32 %v2759, %v1060
        %v2761 = vmul.f32 %v2759, %v1065
        %v2762 = vadd.f32 %v2756, %v2760
        %v2763 = vadd.f32 %v2757, %v2761
        %s2764 = sld [smem:[#allocation5 + $0x4e]]
        %v2765 = vstv %s2764
        %v2766 = vmul.f32 %v2765, %v1294
        %v2767 = vmul.f32 %v2765, %v1299
        %v2768 = vadd.f32 %v2762, %v2766
        %v2769 = vadd.f32 %v2763, %v2767
        %s2770 = sld [smem:[#allocation5 + $0x52]]
        %v2771 = vstv %s2770
        %v2772 = vmul.f32 %v2771, %v667
        %v2773 = vmul.f32 %v2771, %v672
        %v2774 = vadd.f32 %v2768, %v2772
        %v2775 = vadd.f32 %v2769, %v2773
        %s2776 = sld [smem:[#allocation5 + $0x56]]
        %v2777 = vstv %s2776
        %v2778 = vmul.f32 %v2777, %v901
        %v2779 = vmul.f32 %v2777, %v906
        %v2780 = vadd.f32 %v2774, %v2778
        %v2781 = vadd.f32 %v2775, %v2779
        %s2782 = sld [smem:[#allocation5 + $0x5a]]
        %v2783 = vstv %s2782
        %v2784 = vmul.f32 %v2783, %v1135
        %v2785 = vmul.f32 %v2783, %v1140
        %v2786 = vadd.f32 %v2780, %v2784
        %v2787 = vadd.f32 %v2781, %v2785
        %s2788 = sld [smem:[#allocation5 + $0x5e]]
        %v2789 = vstv %s2788
        %v2790 = vmul.f32 %v2789, %v1369
        %v2791 = vmul.f32 %v2789, %v1374
        %v2792 = vadd.f32 %v2786, %v2790
        %v2793 = vadd.f32 %v2787, %v2791
        %v2794 = vld [vmem:[%s1519] sm:$0xff]
        %v2795 = vld [vmem:[%s1519 + $0x8] sm:$0xff]
        %v2797 = vsel %vm1522, %v2794, 0
        %v2800 = vsel %vm1522, %v2795, 0
        %v2803 = vsel %vm1529, %v2793, 0
        %2805 = vmatprep.subr.mxu0 0.0
        %2806 = vmatpush1.msra.mxu0 %v2792
        %2807 = vmatprep.subr.mxu0 0.0
        %2808 = vmatpush1.msra.mxu0 %v2803
        %2809 = vmatprep.subr.mxu0 0.0
        %2810 = vmatpush1.msra.mxu0 0.0
        %2811 = vmatprep.subr.mxu0 0.0
        %2812 = vmatpush1.msra.mxu0 0.0
        %2813 = vmatprep.subr.mxu0 0.0
        %2814 = vmatpush1.msra.mxu0 0.0
        %2815 = vmatprep.subr.mxu0 0.0
        %2816 = vmatpush1.msra.mxu0 0.0
        %2817 = vmatprep.subr.mxu0 0.0
        %2818 = vmatpush1.msra.mxu0 0.0
        %2819 = vmatprep.subr.mxu0 0.0
        %2820 = vmatpush1.msra.mxu0 0.0
        %2821 = vmatprep.subr.mxu0 0.0
        %2822 = vmatpush1.msra.mxu0 0.0
        %2823 = vmatprep.subr.mxu0 0.0
        %2824 = vmatpush1.msra.mxu0 0.0
        %2825 = vmatprep.subr.mxu0 0.0
        %2826 = vmatpush1.msra.mxu0 0.0
        %2827 = vmatprep.subr.mxu0 0.0
        %2828 = vmatpush1.msra.mxu0 0.0
        %2829 = vmatprep.subr.mxu0 0.0
        %2830 = vmatpush1.msra.mxu0 0.0
        %2831 = vmatprep.subr.mxu0 0.0
        %2832 = vmatpush1.msra.mxu0 0.0
        %2833 = vmatprep.subr.mxu0 0.0
        %2834 = vmatpush1.msra.mxu0 0.0
        %2835 = vmatprep.subr.mxu0 0.0
        %2836 = vmatpush1.msra.mxu0 0.0
        %2837 = vmatprep.subr.mxu0 0.0
        %2838 = vmatpush1.msra.mxu0 0.0
        %2839 = vmatprep.subr.mxu0 0.0
        %2840 = vmatpush1.msra.mxu0 0.0
        %2841 = vmatprep.subr.mxu0 0.0
        %2842 = vmatpush1.msra.mxu0 0.0
        %2843 = vmatprep.subr.mxu0 0.0
        %2844 = vmatpush1.msra.mxu0 0.0
        %2845 = vmatprep.subr.mxu0 0.0
        %2846 = vmatpush1.msra.mxu0 0.0
        %2847 = vmatprep.subr.mxu0 0.0
        %2848 = vmatpush1.msra.mxu0 0.0
        %2849 = vmatprep.subr.mxu0 0.0
        %2850 = vmatpush1.msra.mxu0 0.0
        %2851 = vmatprep.subr.mxu0 0.0
        %2852 = vmatpush1.msra.mxu0 0.0
        %2853 = vmatprep.subr.mxu0 0.0
        %2854 = vmatpush1.msra.mxu0 0.0
        %2855 = vmatprep.subr.mxu0 0.0
        %2856 = vmatpush1.msra.mxu0 0.0
        %2857 = vmatprep.subr.mxu0 0.0
        %2858 = vmatpush1.msra.mxu0 0.0
        %2859 = vmatprep.subr.mxu0 0.0
        %2860 = vmatpush1.msra.mxu0 0.0
        %2861 = vmatprep.subr.mxu0 0.0
        %2862 = vmatpush1.msra.mxu0 0.0
        %2863 = vmatprep.subr.mxu0 0.0
        %2864 = vmatpush1.msra.mxu0 0.0
        %2865 = vmatprep.subr.mxu0 0.0
        %2866 = vmatpush1.msra.mxu0 0.0
        %2867 = vmatprep.subr.mxu0 0.0
        %2868 = vmatpush1.msra.mxu0 0.0
        %2869 = vmatprep.mubr.f32.mxu0 0.0
        %2870 = vmatmul.mubr.f32.gmra.mrb[0].mxu0 %v2797
        %v2871 = vpop.f32.mrb[0].mxu0
        %v2872 = vadd.f32 0.0, %v2871
        %v2873 = vpop.f32.mrb[0].mxu0
        %2874 = vmatprep.mubr.f32.mxu0 0.0
        %2875 = vmatmul.mubr.f32.gmra.mrb[0].mxu0 %v2800
        %v2876 = vpop.f32.mrb[0].mxu0
        %v2877 = vadd.f32 0.0, %v2876
        %v2878 = vpop.f32.mrb[0].mxu0
        %2879 = vdwg.mxu0
        %v2881 = vsel %vm1522, %v2722, 0
        %v2884 = vsel %vm1522, %v2723, 0
        %v2887 = vsel %vm1529, %v2721, 0
        %2889 = vmatprep.subr.mxu0 0.0
        %2890 = vmatpush1.msra.mxu0 %v2720
        %2891 = vmatprep.subr.mxu0 0.0
        %2892 = vmatpush1.msra.mxu0 %v2887
        %2893 = vmatprep.subr.mxu0 0.0
        %2894 = vmatpush1.msra.mxu0 0.0
        %2895 = vmatprep.subr.mxu0 0.0
        %2896 = vmatpush1.msra.mxu0 0.0
        %2897 = vmatprep.subr.mxu0 0.0
        %2898 = vmatpush1.msra.mxu0 0.0
        %2899 = vmatprep.subr.mxu0 0.0
        %2900 = vmatpush1.msra.mxu0 0.0
        %2901 = vmatprep.subr.mxu0 0.0
        %2902 = vmatpush1.msra.mxu0 0.0
        %2903 = vmatprep.subr.mxu0 0.0
        %2904 = vmatpush1.msra.mxu0 0.0
        %2905 = vmatprep.subr.mxu0 0.0
        %2906 = vmatpush1.msra.mxu0 0.0
        %2907 = vmatprep.subr.mxu0 0.0
        %2908 = vmatpush1.msra.mxu0 0.0
        %2909 = vmatprep.subr.mxu0 0.0
        %2910 = vmatpush1.msra.mxu0 0.0
        %2911 = vmatprep.subr.mxu0 0.0
        %2912 = vmatpush1.msra.mxu0 0.0
        %2913 = vmatprep.subr.mxu0 0.0
        %2914 = vmatpush1.msra.mxu0 0.0
        %2915 = vmatprep.subr.mxu0 0.0
        %2916 = vmatpush1.msra.mxu0 0.0
        %2917 = vmatprep.subr.mxu0 0.0
        %2918 = vmatpush1.msra.mxu0 0.0
        %2919 = vmatprep.subr.mxu0 0.0
        %2920 = vmatpush1.msra.mxu0 0.0
        %2921 = vmatprep.subr.mxu0 0.0
        %2922 = vmatpush1.msra.mxu0 0.0
        %2923 = vmatprep.subr.mxu0 0.0
        %2924 = vmatpush1.msra.mxu0 0.0
        %2925 = vmatprep.subr.mxu0 0.0
        %2926 = vmatpush1.msra.mxu0 0.0
        %2927 = vmatprep.subr.mxu0 0.0
        %2928 = vmatpush1.msra.mxu0 0.0
        %2929 = vmatprep.subr.mxu0 0.0
        %2930 = vmatpush1.msra.mxu0 0.0
        %2931 = vmatprep.subr.mxu0 0.0
        %2932 = vmatpush1.msra.mxu0 0.0
        %2933 = vmatprep.subr.mxu0 0.0
        %2934 = vmatpush1.msra.mxu0 0.0
        %2935 = vmatprep.subr.mxu0 0.0
        %2936 = vmatpush1.msra.mxu0 0.0
        %2937 = vmatprep.subr.mxu0 0.0
        %2938 = vmatpush1.msra.mxu0 0.0
        %2939 = vmatprep.subr.mxu0 0.0
        %2940 = vmatpush1.msra.mxu0 0.0
        %2941 = vmatprep.subr.mxu0 0.0
        %2942 = vmatpush1.msra.mxu0 0.0
        %2943 = vmatprep.subr.mxu0 0.0
        %2944 = vmatpush1.msra.mxu0 0.0
        %2945 = vmatprep.subr.mxu0 0.0
        %2946 = vmatpush1.msra.mxu0 0.0
        %2947 = vmatprep.subr.mxu0 0.0
        %2948 = vmatpush1.msra.mxu0 0.0
        %2949 = vmatprep.subr.mxu0 0.0
        %2950 = vmatpush1.msra.mxu0 0.0
        %2951 = vmatprep.subr.mxu0 0.0
        %2952 = vmatpush1.msra.mxu0 0.0
        %2953 = vmatprep.mubr.f32.mxu0 0.0
        %2954 = vmatmul.mubr.f32.gmra.mrb[0].mxu0 %v2881
        %v2955 = vpop.f32.mrb[0].mxu0
        %v2956 = vadd.f32 %v2872, %v2955
        %v2957 = vpop.f32.mrb[0].mxu0
        %2958 = vmatprep.mubr.f32.mxu0 0.0
        %2959 = vmatmul.mubr.f32.gmra.mrb[0].mxu0 %v2884
        %v2960 = vpop.f32.mrb[0].mxu0
        %v2961 = vadd.f32 %v2877, %v2960
        %v2962 = vpop.f32.mrb[0].mxu0
        %2963 = vdwg.mxu0
        %s2964 = sld [smem:[#allocation5 + $0x62]]
        %v2965 = vstv %s2964
        %v2966 = vmul.f32 %v2965, %v511
        %v2967 = vmul.f32 %v2965, %v516
        %s2968 = sld [smem:[#allocation5 + $0x66]]
        %v2969 = vstv %s2968
        %v2970 = vmul.f32 %v2969, %v751
        %v2971 = vmul.f32 %v2969, %v756
        %v2972 = vadd.f32 %v2966, %v2970
        %v2973 = vadd.f32 %v2967, %v2971
        %s2974 = sld [smem:[#allocation5 + $0x6a]]
        %v2975 = vstv %s2974
        %v2976 = vmul.f32 %v2975, %v985
        %v2977 = vmul.f32 %v2975, %v990
        %v2978 = vadd.f32 %v2972, %v2976
        %v2979 = vadd.f32 %v2973, %v2977
        %s2980 = sld [smem:[#allocation5 + $0x6e]]
        %v2981 = vstv %s2980
        %v2982 = vmul.f32 %v2981, %v1219
        %v2983 = vmul.f32 %v2981, %v1224
        %v2984 = vadd.f32 %v2978, %v2982
        %v2985 = vadd.f32 %v2979, %v2983
        %s2986 = sld [smem:[#allocation5 + $0x72]]
        %v2987 = vstv %s2986
        %v2988 = vmul.f32 %v2987, %v589
        %v2989 = vmul.f32 %v2987, %v594
        %v2990 = vadd.f32 %v2984, %v2988
        %v2991 = vadd.f32 %v2985, %v2989
        %s2992 = sld [smem:[#allocation5 + $0x76]]
        %v2993 = vstv %s2992
        %v2994 = vmul.f32 %v2993, %v826
        %v2995 = vmul.f32 %v2993, %v831
        %v2996 = vadd.f32 %v2990, %v2994
        %v2997 = vadd.f32 %v2991, %v2995
        %s2998 = sld [smem:[#allocation5 + $0x7a]]
        %v2999 = vstv %s2998
        %v3000 = vmul.f32 %v2999, %v1060
        %v3001 = vmul.f32 %v2999, %v1065
        %v3002 = vadd.f32 %v2996, %v3000
        %v3003 = vadd.f32 %v2997, %v3001
        %s3004 = sld [smem:[#allocation5 + $0x7e]]
        %v3005 = vstv %s3004
        %v3006 = vmul.f32 %v3005, %v1294
        %v3007 = vmul.f32 %v3005, %v1299
        %v3008 = vadd.f32 %v3002, %v3006
        %v3009 = vadd.f32 %v3003, %v3007
        %s3010 = sld [smem:[#allocation5 + $0x82]]
        %v3011 = vstv %s3010
        %v3012 = vmul.f32 %v3011, %v667
        %v3013 = vmul.f32 %v3011, %v672
        %v3014 = vadd.f32 %v3008, %v3012
        %v3015 = vadd.f32 %v3009, %v3013
        %s3016 = sld [smem:[#allocation5 + $0x86]]
        %v3017 = vstv %s3016
        %v3018 = vmul.f32 %v3017, %v901
        %v3019 = vmul.f32 %v3017, %v906
        %v3020 = vadd.f32 %v3014, %v3018
        %v3021 = vadd.f32 %v3015, %v3019
        %s3022 = sld [smem:[#allocation5 + $0x8a]]
        %v3023 = vstv %s3022
        %v3024 = vmul.f32 %v3023, %v1135
        %v3025 = vmul.f32 %v3023, %v1140
        %v3026 = vadd.f32 %v3020, %v3024
        %v3027 = vadd.f32 %v3021, %v3025
        %s3028 = sld [smem:[#allocation5 + $0x8e]]
        %v3029 = vstv %s3028
        %v3030 = vmul.f32 %v3029, %v1369
        %v3031 = vmul.f32 %v3029, %v1374
        %v3032 = vadd.f32 %v3026, %v3030
        %v3033 = vadd.f32 %v3027, %v3031
        %v3034 = vld [vmem:[%s1762] sm:$0xff]
        %v3035 = vld [vmem:[%s1762 + $0x8] sm:$0xff]
        %v3037 = vsel %vm1522, %v3034, 0
        %v3040 = vsel %vm1522, %v3035, 0
        %v3043 = vsel %vm1529, %v3033, 0
        %3045 = vmatprep.subr.mxu0 0.0
        %3046 = vmatpush1.msra.mxu0 %v3032
        %3047 = vmatprep.subr.mxu0 0.0
        %3048 = vmatpush1.msra.mxu0 %v3043
        %3049 = vmatprep.subr.mxu0 0.0
        %3050 = vmatpush1.msra.mxu0 0.0
        %3051 = vmatprep.subr.mxu0 0.0
        %3052 = vmatpush1.msra.mxu0 0.0
        %3053 = vmatprep.subr.mxu0 0.0
        %3054 = vmatpush1.msra.mxu0 0.0
        %3055 = vmatprep.subr.mxu0 0.0
        %3056 = vmatpush1.msra.mxu0 0.0
        %3057 = vmatprep.subr.mxu0 0.0
        %3058 = vmatpush1.msra.mxu0 0.0
        %3059 = vmatprep.subr.mxu0 0.0
        %3060 = vmatpush1.msra.mxu0 0.0
        %3061 = vmatprep.subr.mxu0 0.0
        %3062 = vmatpush1.msra.mxu0 0.0
        %3063 = vmatprep.subr.mxu0 0.0
        %3064 = vmatpush1.msra.mxu0 0.0
        %3065 = vmatprep.subr.mxu0 0.0
        %3066 = vmatpush1.msra.mxu0 0.0
        %3067 = vmatprep.subr.mxu0 0.0
        %3068 = vmatpush1.msra.mxu0 0.0
        %3069 = vmatprep.subr.mxu0 0.0
        %3070 = vmatpush1.msra.mxu0 0.0
        %3071 = vmatprep.subr.mxu0 0.0
        %3072 = vmatpush1.msra.mxu0 0.0
        %3073 = vmatprep.subr.mxu0 0.0
        %3074 = vmatpush1.msra.mxu0 0.0
        %3075 = vmatprep.subr.mxu0 0.0
        %3076 = vmatpush1.msra.mxu0 0.0
        %3077 = vmatprep.subr.mxu0 0.0
        %3078 = vmatpush1.msra.mxu0 0.0
        %3079 = vmatprep.subr.mxu0 0.0
        %3080 = vmatpush1.msra.mxu0 0.0
        %3081 = vmatprep.subr.mxu0 0.0
        %3082 = vmatpush1.msra.mxu0 0.0
        %3083 = vmatprep.subr.mxu0 0.0
        %3084 = vmatpush1.msra.mxu0 0.0
        %3085 = vmatprep.subr.mxu0 0.0
        %3086 = vmatpush1.msra.mxu0 0.0
        %3087 = vmatprep.subr.mxu0 0.0
        %3088 = vmatpush1.msra.mxu0 0.0
        %3089 = vmatprep.subr.mxu0 0.0
        %3090 = vmatpush1.msra.mxu0 0.0
        %3091 = vmatprep.subr.mxu0 0.0
        %3092 = vmatpush1.msra.mxu0 0.0
        %3093 = vmatprep.subr.mxu0 0.0
        %3094 = vmatpush1.msra.mxu0 0.0
        %3095 = vmatprep.subr.mxu0 0.0
        %3096 = vmatpush1.msra.mxu0 0.0
        %3097 = vmatprep.subr.mxu0 0.0
        %3098 = vmatpush1.msra.mxu0 0.0
        %3099 = vmatprep.subr.mxu0 0.0
        %3100 = vmatpush1.msra.mxu0 0.0
        %3101 = vmatprep.subr.mxu0 0.0
        %3102 = vmatpush1.msra.mxu0 0.0
        %3103 = vmatprep.subr.mxu0 0.0
        %3104 = vmatpush1.msra.mxu0 0.0
        %3105 = vmatprep.subr.mxu0 0.0
        %3106 = vmatpush1.msra.mxu0 0.0
        %3107 = vmatprep.subr.mxu0 0.0
        %3108 = vmatpush1.msra.mxu0 0.0
        %3109 = vmatprep.mubr.f32.mxu0 0.0
        %3110 = vmatmul.mubr.f32.gmra.mrb[0].mxu0 %v3037
        %v3111 = vpop.f32.mrb[0].mxu0
        %v3112 = vadd.f32 0.0, %v3111
        %v3113 = vpop.f32.mrb[0].mxu0
        %3114 = vmatprep.mubr.f32.mxu0 0.0
        %3115 = vmatmul.mubr.f32.gmra.mrb[0].mxu0 %v3040
        %v3116 = vpop.f32.mrb[0].mxu0
        %v3117 = vadd.f32 0.0, %v3116
        %v3118 = vpop.f32.mrb[0].mxu0
        %3119 = vdwg.mxu0
        %v3120 = vadd.f32 %v2956, %v3112
        %v3121 = vadd.f32 %v2961, %v3117
        %s3122 = sld [smem:[#allocation5 + $0x92]]
        %v3123 = vstv %s3122
        %v3124 = vmul.f32 %v3123, %v511
        %v3125 = vmul.f32 %v3123, %v516
        %s3126 = sld [smem:[#allocation5 + $0x96]]
        %v3127 = vstv %s3126
        %v3128 = vmul.f32 %v3127, %v751
        %v3129 = vmul.f32 %v3127, %v756
        %v3130 = vadd.f32 %v3124, %v3128
        %v3131 = vadd.f32 %v3125, %v3129
        %s3132 = sld [smem:[#allocation5 + $0x9a]]
        %v3133 = vstv %s3132
        %v3134 = vmul.f32 %v3133, %v985
        %v3135 = vmul.f32 %v3133, %v990
        %v3136 = vadd.f32 %v3130, %v3134
        %v3137 = vadd.f32 %v3131, %v3135
        %s3138 = sld [smem:[#allocation5 + $0x9e]]
        %v3139 = vstv %s3138
        %v3140 = vmul.f32 %v3139, %v1219
        %v3141 = vmul.f32 %v3139, %v1224
        %v3142 = vadd.f32 %v3136, %v3140
        %v3143 = vadd.f32 %v3137, %v3141
        %s3144 = sld [smem:[#allocation5 + $0xa2]]
        %v3145 = vstv %s3144
        %v3146 = vmul.f32 %v3145, %v589
        %v3147 = vmul.f32 %v3145, %v594
        %v3148 = vadd.f32 %v3142, %v3146
        %v3149 = vadd.f32 %v3143, %v3147
        %s3150 = sld [smem:[#allocation5 + $0xa6]]
        %v3151 = vstv %s3150
        %v3152 = vmul.f32 %v3151, %v826
        %v3153 = vmul.f32 %v3151, %v831
        %v3154 = vadd.f32 %v3148, %v3152
        %v3155 = vadd.f32 %v3149, %v3153
        %s3156 = sld [smem:[#allocation5 + $0xaa]]
        %v3157 = vstv %s3156
        %v3158 = vmul.f32 %v3157, %v1060
        %v3159 = vmul.f32 %v3157, %v1065
        %v3160 = vadd.f32 %v3154, %v3158
        %v3161 = vadd.f32 %v3155, %v3159
        %s3162 = sld [smem:[#allocation5 + $0xae]]
        %v3163 = vstv %s3162
        %v3164 = vmul.f32 %v3163, %v1294
        %v3165 = vmul.f32 %v3163, %v1299
        %v3166 = vadd.f32 %v3160, %v3164
        %v3167 = vadd.f32 %v3161, %v3165
        %s3168 = sld [smem:[#allocation5 + $0xb2]]
        %v3169 = vstv %s3168
        %v3170 = vmul.f32 %v3169, %v667
        %v3171 = vmul.f32 %v3169, %v672
        %v3172 = vadd.f32 %v3166, %v3170
        %v3173 = vadd.f32 %v3167, %v3171
        %s3174 = sld [smem:[#allocation5 + $0xb6]]
        %v3175 = vstv %s3174
        %v3176 = vmul.f32 %v3175, %v901
        %v3177 = vmul.f32 %v3175, %v906
        %v3178 = vadd.f32 %v3172, %v3176
        %v3179 = vadd.f32 %v3173, %v3177
        %s3180 = sld [smem:[#allocation5 + $0xba]]
        %v3181 = vstv %s3180
        %v3182 = vmul.f32 %v3181, %v1135
        %v3183 = vmul.f32 %v3181, %v1140
        %v3184 = vadd.f32 %v3178, %v3182
        %v3185 = vadd.f32 %v3179, %v3183
        %s3186 = sld [smem:[#allocation5 + $0xbe]]
        %v3187 = vstv %s3186
        %v3188 = vmul.f32 %v3187, %v1369
        %v3189 = vmul.f32 %v3187, %v1374
        %v3190 = vadd.f32 %v3184, %v3188
        %v3191 = vadd.f32 %v3185, %v3189
        %v3192 = vld [vmem:[%s1921] sm:$0xff]
        %v3193 = vld [vmem:[%s1921 + $0x8] sm:$0xff]
        %v3195 = vsel %vm1522, %v3192, 0
        %v3198 = vsel %vm1522, %v3193, 0
        %v3201 = vsel %vm1529, %v3191, 0
        %3203 = vmatprep.subr.mxu0 0.0
        %3204 = vmatpush1.msra.mxu0 %v3190
        %3205 = vmatprep.subr.mxu0 0.0
        %3206 = vmatpush1.msra.mxu0 %v3201
        %3207 = vmatprep.subr.mxu0 0.0
        %3208 = vmatpush1.msra.mxu0 0.0
        %3209 = vmatprep.subr.mxu0 0.0
        %3210 = vmatpush1.msra.mxu0 0.0
        %3211 = vmatprep.subr.mxu0 0.0
        %3212 = vmatpush1.msra.mxu0 0.0
        %3213 = vmatprep.subr.mxu0 0.0
        %3214 = vmatpush1.msra.mxu0 0.0
        %3215 = vmatprep.subr.mxu0 0.0
        %3216 = vmatpush1.msra.mxu0 0.0
        %3217 = vmatprep.subr.mxu0 0.0
        %3218 = vmatpush1.msra.mxu0 0.0
        %3219 = vmatprep.subr.mxu0 0.0
        %3220 = vmatpush1.msra.mxu0 0.0
        %3221 = vmatprep.subr.mxu0 0.0
        %3222 = vmatpush1.msra.mxu0 0.0
        %3223 = vmatprep.subr.mxu0 0.0
        %3224 = vmatpush1.msra.mxu0 0.0
        %3225 = vmatprep.subr.mxu0 0.0
        %3226 = vmatpush1.msra.mxu0 0.0
        %3227 = vmatprep.subr.mxu0 0.0
        %3228 = vmatpush1.msra.mxu0 0.0
        %3229 = vmatprep.subr.mxu0 0.0
        %3230 = vmatpush1.msra.mxu0 0.0
        %3231 = vmatprep.subr.mxu0 0.0
        %3232 = vmatpush1.msra.mxu0 0.0
        %3233 = vmatprep.subr.mxu0 0.0
        %3234 = vmatpush1.msra.mxu0 0.0
        %3235 = vmatprep.subr.mxu0 0.0
        %3236 = vmatpush1.msra.mxu0 0.0
        %3237 = vmatprep.subr.mxu0 0.0
        %3238 = vmatpush1.msra.mxu0 0.0
        %3239 = vmatprep.subr.mxu0 0.0
        %3240 = vmatpush1.msra.mxu0 0.0
        %3241 = vmatprep.subr.mxu0 0.0
        %3242 = vmatpush1.msra.mxu0 0.0
        %3243 = vmatprep.subr.mxu0 0.0
        %3244 = vmatpush1.msra.mxu0 0.0
        %3245 = vmatprep.subr.mxu0 0.0
        %3246 = vmatpush1.msra.mxu0 0.0
        %3247 = vmatprep.subr.mxu0 0.0
        %3248 = vmatpush1.msra.mxu0 0.0
        %3249 = vmatprep.subr.mxu0 0.0
        %3250 = vmatpush1.msra.mxu0 0.0
        %3251 = vmatprep.subr.mxu0 0.0
        %3252 = vmatpush1.msra.mxu0 0.0
        %3253 = vmatprep.subr.mxu0 0.0
        %3254 = vmatpush1.msra.mxu0 0.0
        %3255 = vmatprep.subr.mxu0 0.0
        %3256 = vmatpush1.msra.mxu0 0.0
        %3257 = vmatprep.subr.mxu0 0.0
        %3258 = vmatpush1.msra.mxu0 0.0
        %3259 = vmatprep.subr.mxu0 0.0
        %3260 = vmatpush1.msra.mxu0 0.0
        %3261 = vmatprep.subr.mxu0 0.0
        %3262 = vmatpush1.msra.mxu0 0.0
        %3263 = vmatprep.subr.mxu0 0.0
        %3264 = vmatpush1.msra.mxu0 0.0
        %3265 = vmatprep.subr.mxu0 0.0
        %3266 = vmatpush1.msra.mxu0 0.0
        %3267 = vmatprep.mubr.f32.mxu0 0.0
        %3268 = vmatmul.mubr.f32.gmra.mrb[0].mxu0 %v3195
        %v3269 = vpop.f32.mrb[0].mxu0
        %v3270 = vadd.f32 0.0, %v3269
        %v3271 = vpop.f32.mrb[0].mxu0
        %3272 = vmatprep.mubr.f32.mxu0 0.0
        %3273 = vmatmul.mubr.f32.gmra.mrb[0].mxu0 %v3198
        %v3274 = vpop.f32.mrb[0].mxu0
        %v3275 = vadd.f32 0.0, %v3274
        %v3276 = vpop.f32.mrb[0].mxu0
        %3277 = vdwg.mxu0
        %v3278 = vadd.f32 %v3120, %v3270
        %v3279 = vadd.f32 %v3121, %v3275
        %s3280 = sld [smem:[#allocation8 + $0x2]]
        %v3281 = vstv %s3280
        %v3282 = vadd.f32 %v3278, %v3281
        %v3283 = vadd.f32 %v3279, %v3281
        %s3284 = scalar_lea.vmem %s413, 32 [#allocation10]
        %3285 = vst.msk [vmem:[%s3284] sm:$0xff] %vm2014, %v3282
        %3286 = vst.msk [vmem:[%s3284 + $0x8] sm:$0xff] %vm2014, %v3283
        %s3287 = sld [smem:[#allocation5 + $0x3]]
        %v3288 = vstv %s3287
        %v3289 = vmul.f32 %v3288, %v511
        %v3290 = vmul.f32 %v3288, %v516
        %s3291 = sld [smem:[#allocation5 + $0x7]]
        %v3292 = vstv %s3291
        %v3293 = vmul.f32 %v3292, %v751
        %v3294 = vmul.f32 %v3292, %v756
        %v3295 = vadd.f32 %v3289, %v3293
        %v3296 = vadd.f32 %v3290, %v3294
        %s3297 = sld [smem:[#allocation5 + $0xb]]
        %v3298 = vstv %s3297
        %v3299 = vmul.f32 %v3298, %v985
        %v3300 = vmul.f32 %v3298, %v990
        %v3301 = vadd.f32 %v3295, %v3299
        %v3302 = vadd.f32 %v3296, %v3300
        %s3303 = sld [smem:[#allocation5 + $0xf]]
        %v3304 = vstv %s3303
        %v3305 = vmul.f32 %v3304, %v1219
        %v3306 = vmul.f32 %v3304, %v1224
        %v3307 = vadd.f32 %v3301, %v3305
        %v3308 = vadd.f32 %v3302, %v3306
        %s3309 = sld [smem:[#allocation5 + $0x13]]
        %v3310 = vstv %s3309
        %v3311 = vmul.f32 %v3310, %v589
        %v3312 = vmul.f32 %v3310, %v594
        %v3313 = vadd.f32 %v3307, %v3311
        %v3314 = vadd.f32 %v3308, %v3312
        %s3315 = sld [smem:[#allocation5 + $0x17]]
        %v3316 = vstv %s3315
        %v3317 = vmul.f32 %v3316, %v826
        %v3318 = vmul.f32 %v3316, %v831
        %v3319 = vadd.f32 %v3313, %v3317
        %v3320 = vadd.f32 %v3314, %v3318
        %s3321 = sld [smem:[#allocation5 + $0x1b]]
        %v3322 = vstv %s3321
        %v3323 = vmul.f32 %v3322, %v1060
        %v3324 = vmul.f32 %v3322, %v1065
        %v3325 = vadd.f32 %v3319, %v3323
        %v3326 = vadd.f32 %v3320, %v3324
        %s3327 = sld [smem:[#allocation5 + $0x1f]]
        %v3328 = vstv %s3327
        %v3329 = vmul.f32 %v3328, %v1294
        %v3330 = vmul.f32 %v3328, %v1299
        %v3331 = vadd.f32 %v3325, %v3329
        %v3332 = vadd.f32 %v3326, %v3330
        %s3333 = sld [smem:[#allocation5 + $0x23]]
        %v3334 = vstv %s3333
        %v3335 = vmul.f32 %v3334, %v667
        %v3336 = vmul.f32 %v3334, %v672
        %v3337 = vadd.f32 %v3331, %v3335
        %v3338 = vadd.f32 %v3332, %v3336
        %s3339 = sld [smem:[#allocation5 + $0x27]]
        %v3340 = vstv %s3339
        %v3341 = vmul.f32 %v3340, %v901
        %v3342 = vmul.f32 %v3340, %v906
        %v3343 = vadd.f32 %v3337, %v3341
        %v3344 = vadd.f32 %v3338, %v3342
        %s3345 = sld [smem:[#allocation5 + $0x2b]]
        %v3346 = vstv %s3345
        %v3347 = vmul.f32 %v3346, %v1135
        %v3348 = vmul.f32 %v3346, %v1140
        %v3349 = vadd.f32 %v3343, %v3347
        %v3350 = vadd.f32 %v3344, %v3348
        %s3351 = sld [smem:[#allocation5 + $0x2f]]
        %v3352 = vstv %s3351
        %v3353 = vmul.f32 %v3352, %v1369
        %v3354 = vmul.f32 %v3352, %v1374
        %v3355 = vadd.f32 %v3349, %v3353
        %v3356 = vadd.f32 %v3350, %v3354
        %v3357 = vld [vmem:[%s3] sm:$0xff]
        %v3358 = vld [vmem:[%s3 + $0x8] sm:$0xff]
        %s3359 = sld [smem:[#allocation5 + $0x33]]
        %v3360 = vstv %s3359
        %v3361 = vmul.f32 %v3360, %v511
        %v3362 = vmul.f32 %v3360, %v516
        %s3363 = sld [smem:[#allocation5 + $0x37]]
        %v3364 = vstv %s3363
        %v3365 = vmul.f32 %v3364, %v751
        %v3366 = vmul.f32 %v3364, %v756
        %v3367 = vadd.f32 %v3361, %v3365
        %v3368 = vadd.f32 %v3362, %v3366
        %s3369 = sld [smem:[#allocation5 + $0x3b]]
        %v3370 = vstv %s3369
        %v3371 = vmul.f32 %v3370, %v985
        %v3372 = vmul.f32 %v3370, %v990
        %v3373 = vadd.f32 %v3367, %v3371
        %v3374 = vadd.f32 %v3368, %v3372
        %s3375 = sld [smem:[#allocation5 + $0x3f]]
        %v3376 = vstv %s3375
        %v3377 = vmul.f32 %v3376, %v1219
        %v3378 = vmul.f32 %v3376, %v1224
        %v3379 = vadd.f32 %v3373, %v3377
        %v3380 = vadd.f32 %v3374, %v3378
        %s3381 = sld [smem:[#allocation5 + $0x43]]
        %v3382 = vstv %s3381
        %v3383 = vmul.f32 %v3382, %v589
        %v3384 = vmul.f32 %v3382, %v594
        %v3385 = vadd.f32 %v3379, %v3383
        %v3386 = vadd.f32 %v3380, %v3384
        %s3387 = sld [smem:[#allocation5 + $0x47]]
        %v3388 = vstv %s3387
        %v3389 = vmul.f32 %v3388, %v826
        %v3390 = vmul.f32 %v3388, %v831
        %v3391 = vadd.f32 %v3385, %v3389
        %v3392 = vadd.f32 %v3386, %v3390
        %s3393 = sld [smem:[#allocation5 + $0x4b]]
        %v3394 = vstv %s3393
        %v3395 = vmul.f32 %v3394, %v1060
        %v3396 = vmul.f32 %v3394, %v1065
        %v3397 = vadd.f32 %v3391, %v3395
        %v3398 = vadd.f32 %v3392, %v3396
        %s3399 = sld [smem:[#allocation5 + $0x4f]]
        %v3400 = vstv %s3399
        %v3401 = vmul.f32 %v3400, %v1294
        %v3402 = vmul.f32 %v3400, %v1299
        %v3403 = vadd.f32 %v3397, %v3401
        %v3404 = vadd.f32 %v3398, %v3402
        %s3405 = sld [smem:[#allocation5 + $0x53]]
        %v3406 = vstv %s3405
        %v3407 = vmul.f32 %v3406, %v667
        %v3408 = vmul.f32 %v3406, %v672
        %v3409 = vadd.f32 %v3403, %v3407
        %v3410 = vadd.f32 %v3404, %v3408
        %s3411 = sld [smem:[#allocation5 + $0x57]]
        %v3412 = vstv %s3411
        %v3413 = vmul.f32 %v3412, %v901
        %v3414 = vmul.f32 %v3412, %v906
        %v3415 = vadd.f32 %v3409, %v3413
        %v3416 = vadd.f32 %v3410, %v3414
        %s3417 = sld [smem:[#allocation5 + $0x5b]]
        %v3418 = vstv %s3417
        %v3419 = vmul.f32 %v3418, %v1135
        %v3420 = vmul.f32 %v3418, %v1140
        %v3421 = vadd.f32 %v3415, %v3419
        %v3422 = vadd.f32 %v3416, %v3420
        %s3423 = sld [smem:[#allocation5 + $0x5f]]
        %v3424 = vstv %s3423
        %v3425 = vmul.f32 %v3424, %v1369
        %v3426 = vmul.f32 %v3424, %v1374
        %v3427 = vadd.f32 %v3421, %v3425
        %v3428 = vadd.f32 %v3422, %v3426
        %v3429 = vld [vmem:[%s1519] sm:$0xff]
        %v3430 = vld [vmem:[%s1519 + $0x8] sm:$0xff]
        %v3432 = vsel %vm1522, %v3429, 0
        %v3435 = vsel %vm1522, %v3430, 0
        %v3438 = vsel %vm1529, %v3428, 0
        %3440 = vmatprep.subr.mxu0 0.0
        %3441 = vmatpush1.msra.mxu0 %v3427
        %3442 = vmatprep.subr.mxu0 0.0
        %3443 = vmatpush1.msra.mxu0 %v3438
        %3444 = vmatprep.subr.mxu0 0.0
        %3445 = vmatpush1.msra.mxu0 0.0
        %3446 = vmatprep.subr.mxu0 0.0
        %3447 = vmatpush1.msra.mxu0 0.0
        %3448 = vmatprep.subr.mxu0 0.0
        %3449 = vmatpush1.msra.mxu0 0.0
        %3450 = vmatprep.subr.mxu0 0.0
        %3451 = vmatpush1.msra.mxu0 0.0
        %3452 = vmatprep.subr.mxu0 0.0
        %3453 = vmatpush1.msra.mxu0 0.0
        %3454 = vmatprep.subr.mxu0 0.0
        %3455 = vmatpush1.msra.mxu0 0.0
        %3456 = vmatprep.subr.mxu0 0.0
        %3457 = vmatpush1.msra.mxu0 0.0
        %3458 = vmatprep.subr.mxu0 0.0
        %3459 = vmatpush1.msra.mxu0 0.0
        %3460 = vmatprep.subr.mxu0 0.0
        %3461 = vmatpush1.msra.mxu0 0.0
        %3462 = vmatprep.subr.mxu0 0.0
        %3463 = vmatpush1.msra.mxu0 0.0
        %3464 = vmatprep.subr.mxu0 0.0
        %3465 = vmatpush1.msra.mxu0 0.0
        %3466 = vmatprep.subr.mxu0 0.0
        %3467 = vmatpush1.msra.mxu0 0.0
        %3468 = vmatprep.subr.mxu0 0.0
        %3469 = vmatpush1.msra.mxu0 0.0
        %3470 = vmatprep.subr.mxu0 0.0
        %3471 = vmatpush1.msra.mxu0 0.0
        %3472 = vmatprep.subr.mxu0 0.0
        %3473 = vmatpush1.msra.mxu0 0.0
        %3474 = vmatprep.subr.mxu0 0.0
        %3475 = vmatpush1.msra.mxu0 0.0
        %3476 = vmatprep.subr.mxu0 0.0
        %3477 = vmatpush1.msra.mxu0 0.0
        %3478 = vmatprep.subr.mxu0 0.0
        %3479 = vmatpush1.msra.mxu0 0.0
        %3480 = vmatprep.subr.mxu0 0.0
        %3481 = vmatpush1.msra.mxu0 0.0
        %3482 = vmatprep.subr.mxu0 0.0
        %3483 = vmatpush1.msra.mxu0 0.0
        %3484 = vmatprep.subr.mxu0 0.0
        %3485 = vmatpush1.msra.mxu0 0.0
        %3486 = vmatprep.subr.mxu0 0.0
        %3487 = vmatpush1.msra.mxu0 0.0
        %3488 = vmatprep.subr.mxu0 0.0
        %3489 = vmatpush1.msra.mxu0 0.0
        %3490 = vmatprep.subr.mxu0 0.0
        %3491 = vmatpush1.msra.mxu0 0.0
        %3492 = vmatprep.subr.mxu0 0.0
        %3493 = vmatpush1.msra.mxu0 0.0
        %3494 = vmatprep.subr.mxu0 0.0
        %3495 = vmatpush1.msra.mxu0 0.0
        %3496 = vmatprep.subr.mxu0 0.0
        %3497 = vmatpush1.msra.mxu0 0.0
        %3498 = vmatprep.subr.mxu0 0.0
        %3499 = vmatpush1.msra.mxu0 0.0
        %3500 = vmatprep.subr.mxu0 0.0
        %3501 = vmatpush1.msra.mxu0 0.0
        %3502 = vmatprep.subr.mxu0 0.0
        %3503 = vmatpush1.msra.mxu0 0.0
        %3504 = vmatprep.mubr.f32.mxu0 0.0
        %3505 = vmatmul.mubr.f32.gmra.mrb[0].mxu0 %v3432
        %v3506 = vpop.f32.mrb[0].mxu0
        %v3507 = vadd.f32 0.0, %v3506
        %v3508 = vpop.f32.mrb[0].mxu0
        %3509 = vmatprep.mubr.f32.mxu0 0.0
        %3510 = vmatmul.mubr.f32.gmra.mrb[0].mxu0 %v3435
        %v3511 = vpop.f32.mrb[0].mxu0
        %v3512 = vadd.f32 0.0, %v3511
        %v3513 = vpop.f32.mrb[0].mxu0
        %3514 = vdwg.mxu0
        %v3516 = vsel %vm1522, %v3357, 0
        %v3519 = vsel %vm1522, %v3358, 0
        %v3522 = vsel %vm1529, %v3356, 0
        %3524 = vmatprep.subr.mxu0 0.0
        %3525 = vmatpush1.msra.mxu0 %v3355
        %3526 = vmatprep.subr.mxu0 0.0
        %3527 = vmatpush1.msra.mxu0 %v3522
        %3528 = vmatprep.subr.mxu0 0.0
        %3529 = vmatpush1.msra.mxu0 0.0
        %3530 = vmatprep.subr.mxu0 0.0
        %3531 = vmatpush1.msra.mxu0 0.0
        %3532 = vmatprep.subr.mxu0 0.0
        %3533 = vmatpush1.msra.mxu0 0.0
        %3534 = vmatprep.subr.mxu0 0.0
        %3535 = vmatpush1.msra.mxu0 0.0
        %3536 = vmatprep.subr.mxu0 0.0
        %3537 = vmatpush1.msra.mxu0 0.0
        %3538 = vmatprep.subr.mxu0 0.0
        %3539 = vmatpush1.msra.mxu0 0.0
        %3540 = vmatprep.subr.mxu0 0.0
        %3541 = vmatpush1.msra.mxu0 0.0
        %3542 = vmatprep.subr.mxu0 0.0
        %3543 = vmatpush1.msra.mxu0 0.0
        %3544 = vmatprep.subr.mxu0 0.0
        %3545 = vmatpush1.msra.mxu0 0.0
        %3546 = vmatprep.subr.mxu0 0.0
        %3547 = vmatpush1.msra.mxu0 0.0
        %3548 = vmatprep.subr.mxu0 0.0
        %3549 = vmatpush1.msra.mxu0 0.0
        %3550 = vmatprep.subr.mxu0 0.0
        %3551 = vmatpush1.msra.mxu0 0.0
        %3552 = vmatprep.subr.mxu0 0.0
        %3553 = vmatpush1.msra.mxu0 0.0
        %3554 = vmatprep.subr.mxu0 0.0
        %3555 = vmatpush1.msra.mxu0 0.0
        %3556 = vmatprep.subr.mxu0 0.0
        %3557 = vmatpush1.msra.mxu0 0.0
        %3558 = vmatprep.subr.mxu0 0.0
        %3559 = vmatpush1.msra.mxu0 0.0
        %3560 = vmatprep.subr.mxu0 0.0
        %3561 = vmatpush1.msra.mxu0 0.0
        %3562 = vmatprep.subr.mxu0 0.0
        %3563 = vmatpush1.msra.mxu0 0.0
        %3564 = vmatprep.subr.mxu0 0.0
        %3565 = vmatpush1.msra.mxu0 0.0
        %3566 = vmatprep.subr.mxu0 0.0
        %3567 = vmatpush1.msra.mxu0 0.0
        %3568 = vmatprep.subr.mxu0 0.0
        %3569 = vmatpush1.msra.mxu0 0.0
        %3570 = vmatprep.subr.mxu0 0.0
        %3571 = vmatpush1.msra.mxu0 0.0
        %3572 = vmatprep.subr.mxu0 0.0
        %3573 = vmatpush1.msra.mxu0 0.0
        %3574 = vmatprep.subr.mxu0 0.0
        %3575 = vmatpush1.msra.mxu0 0.0
        %3576 = vmatprep.subr.mxu0 0.0
        %3577 = vmatpush1.msra.mxu0 0.0
        %3578 = vmatprep.subr.mxu0 0.0
        %3579 = vmatpush1.msra.mxu0 0.0
        %3580 = vmatprep.subr.mxu0 0.0
        %3581 = vmatpush1.msra.mxu0 0.0
        %3582 = vmatprep.subr.mxu0 0.0
        %3583 = vmatpush1.msra.mxu0 0.0
        %3584 = vmatprep.subr.mxu0 0.0
        %3585 = vmatpush1.msra.mxu0 0.0
        %3586 = vmatprep.subr.mxu0 0.0
        %3587 = vmatpush1.msra.mxu0 0.0
        %3588 = vmatprep.mubr.f32.mxu0 0.0
        %3589 = vmatmul.mubr.f32.gmra.mrb[0].mxu0 %v3516
        %v3590 = vpop.f32.mrb[0].mxu0
        %v3591 = vadd.f32 %v3507, %v3590
        %v3592 = vpop.f32.mrb[0].mxu0
        %3593 = vmatprep.mubr.f32.mxu0 0.0
        %3594 = vmatmul.mubr.f32.gmra.mrb[0].mxu0 %v3519
        %v3595 = vpop.f32.mrb[0].mxu0
        %v3596 = vadd.f32 %v3512, %v3595
        %v3597 = vpop.f32.mrb[0].mxu0
        %3598 = vdwg.mxu0
        %s3599 = sld [smem:[#allocation5 + $0x63]]
        %v3600 = vstv %s3599
        %v3601 = vmul.f32 %v3600, %v511
        %v3602 = vmul.f32 %v3600, %v516
        %s3603 = sld [smem:[#allocation5 + $0x67]]
        %v3604 = vstv %s3603
        %v3605 = vmul.f32 %v3604, %v751
        %v3606 = vmul.f32 %v3604, %v756
        %v3607 = vadd.f32 %v3601, %v3605
        %v3608 = vadd.f32 %v3602, %v3606
        %s3609 = sld [smem:[#allocation5 + $0x6b]]
        %v3610 = vstv %s3609
        %v3611 = vmul.f32 %v3610, %v985
        %v3612 = vmul.f32 %v3610, %v990
        %v3613 = vadd.f32 %v3607, %v3611
        %v3614 = vadd.f32 %v3608, %v3612
        %s3615 = sld [smem:[#allocation5 + $0x6f]]
        %v3616 = vstv %s3615
        %v3617 = vmul.f32 %v3616, %v1219
        %v3618 = vmul.f32 %v3616, %v1224
        %v3619 = vadd.f32 %v3613, %v3617
        %v3620 = vadd.f32 %v3614, %v3618
        %s3621 = sld [smem:[#allocation5 + $0x73]]
        %v3622 = vstv %s3621
        %v3623 = vmul.f32 %v3622, %v589
        %v3624 = vmul.f32 %v3622, %v594
        %v3625 = vadd.f32 %v3619, %v3623
        %v3626 = vadd.f32 %v3620, %v3624
        %s3627 = sld [smem:[#allocation5 + $0x77]]
        %v3628 = vstv %s3627
        %v3629 = vmul.f32 %v3628, %v826
        %v3630 = vmul.f32 %v3628, %v831
        %v3631 = vadd.f32 %v3625, %v3629
        %v3632 = vadd.f32 %v3626, %v3630
        %s3633 = sld [smem:[#allocation5 + $0x7b]]
        %v3634 = vstv %s3633
        %v3635 = vmul.f32 %v3634, %v1060
        %v3636 = vmul.f32 %v3634, %v1065
        %v3637 = vadd.f32 %v3631, %v3635
        %v3638 = vadd.f32 %v3632, %v3636
        %s3639 = sld [smem:[#allocation5 + $0x7f]]
        %v3640 = vstv %s3639
        %v3641 = vmul.f32 %v3640, %v1294
        %v3642 = vmul.f32 %v3640, %v1299
        %v3643 = vadd.f32 %v3637, %v3641
        %v3644 = vadd.f32 %v3638, %v3642
        %s3645 = sld [smem:[#allocation5 + $0x83]]
        %v3646 = vstv %s3645
        %v3647 = vmul.f32 %v3646, %v667
        %v3648 = vmul.f32 %v3646, %v672
        %v3649 = vadd.f32 %v3643, %v3647
        %v3650 = vadd.f32 %v3644, %v3648
        %s3651 = sld [smem:[#allocation5 + $0x87]]
        %v3652 = vstv %s3651
        %v3653 = vmul.f32 %v3652, %v901
        %v3654 = vmul.f32 %v3652, %v906
        %v3655 = vadd.f32 %v3649, %v3653
        %v3656 = vadd.f32 %v3650, %v3654
        %s3657 = sld [smem:[#allocation5 + $0x8b]]
        %v3658 = vstv %s3657
        %v3659 = vmul.f32 %v3658, %v1135
        %v3660 = vmul.f32 %v3658, %v1140
        %v3661 = vadd.f32 %v3655, %v3659
        %v3662 = vadd.f32 %v3656, %v3660
        %s3663 = sld [smem:[#allocation5 + $0x8f]]
        %v3664 = vstv %s3663
        %v3665 = vmul.f32 %v3664, %v1369
        %v3666 = vmul.f32 %v3664, %v1374
        %v3667 = vadd.f32 %v3661, %v3665
        %v3668 = vadd.f32 %v3662, %v3666
        %v3669 = vld [vmem:[%s1762] sm:$0xff]
        %v3670 = vld [vmem:[%s1762 + $0x8] sm:$0xff]
        %v3672 = vsel %vm1522, %v3669, 0
        %v3675 = vsel %vm1522, %v3670, 0
        %v3678 = vsel %vm1529, %v3668, 0
        %3680 = vmatprep.subr.mxu0 0.0
        %3681 = vmatpush1.msra.mxu0 %v3667
        %3682 = vmatprep.subr.mxu0 0.0
        %3683 = vmatpush1.msra.mxu0 %v3678
        %3684 = vmatprep.subr.mxu0 0.0
        %3685 = vmatpush1.msra.mxu0 0.0
        %3686 = vmatprep.subr.mxu0 0.0
        %3687 = vmatpush1.msra.mxu0 0.0
        %3688 = vmatprep.subr.mxu0 0.0
        %3689 = vmatpush1.msra.mxu0 0.0
        %3690 = vmatprep.subr.mxu0 0.0
        %3691 = vmatpush1.msra.mxu0 0.0
        %3692 = vmatprep.subr.mxu0 0.0
        %3693 = vmatpush1.msra.mxu0 0.0
        %3694 = vmatprep.subr.mxu0 0.0
        %3695 = vmatpush1.msra.mxu0 0.0
        %3696 = vmatprep.subr.mxu0 0.0
        %3697 = vmatpush1.msra.mxu0 0.0
        %3698 = vmatprep.subr.mxu0 0.0
        %3699 = vmatpush1.msra.mxu0 0.0
        %3700 = vmatprep.subr.mxu0 0.0
        %3701 = vmatpush1.msra.mxu0 0.0
        %3702 = vmatprep.subr.mxu0 0.0
        %3703 = vmatpush1.msra.mxu0 0.0
        %3704 = vmatprep.subr.mxu0 0.0
        %3705 = vmatpush1.msra.mxu0 0.0
        %3706 = vmatprep.subr.mxu0 0.0
        %3707 = vmatpush1.msra.mxu0 0.0
        %3708 = vmatprep.subr.mxu0 0.0
        %3709 = vmatpush1.msra.mxu0 0.0
        %3710 = vmatprep.subr.mxu0 0.0
        %3711 = vmatpush1.msra.mxu0 0.0
        %3712 = vmatprep.subr.mxu0 0.0
        %3713 = vmatpush1.msra.mxu0 0.0
        %3714 = vmatprep.subr.mxu0 0.0
        %3715 = vmatpush1.msra.mxu0 0.0
        %3716 = vmatprep.subr.mxu0 0.0
        %3717 = vmatpush1.msra.mxu0 0.0
        %3718 = vmatprep.subr.mxu0 0.0
        %3719 = vmatpush1.msra.mxu0 0.0
        %3720 = vmatprep.subr.mxu0 0.0
        %3721 = vmatpush1.msra.mxu0 0.0
        %3722 = vmatprep.subr.mxu0 0.0
        %3723 = vmatpush1.msra.mxu0 0.0
        %3724 = vmatprep.subr.mxu0 0.0
        %3725 = vmatpush1.msra.mxu0 0.0
        %3726 = vmatprep.subr.mxu0 0.0
        %3727 = vmatpush1.msra.mxu0 0.0
        %3728 = vmatprep.subr.mxu0 0.0
        %3729 = vmatpush1.msra.mxu0 0.0
        %3730 = vmatprep.subr.mxu0 0.0
        %3731 = vmatpush1.msra.mxu0 0.0
        %3732 = vmatprep.subr.mxu0 0.0
        %3733 = vmatpush1.msra.mxu0 0.0
        %3734 = vmatprep.subr.mxu0 0.0
        %3735 = vmatpush1.msra.mxu0 0.0
        %3736 = vmatprep.subr.mxu0 0.0
        %3737 = vmatpush1.msra.mxu0 0.0
        %3738 = vmatprep.subr.mxu0 0.0
        %3739 = vmatpush1.msra.mxu0 0.0
        %3740 = vmatprep.subr.mxu0 0.0
        %3741 = vmatpush1.msra.mxu0 0.0
        %3742 = vmatprep.subr.mxu0 0.0
        %3743 = vmatpush1.msra.mxu0 0.0
        %3744 = vmatprep.mubr.f32.mxu0 0.0
        %3745 = vmatmul.mubr.f32.gmra.mrb[0].mxu0 %v3672
        %v3746 = vpop.f32.mrb[0].mxu0
        %v3747 = vadd.f32 0.0, %v3746
        %v3748 = vpop.f32.mrb[0].mxu0
        %3749 = vmatprep.mubr.f32.mxu0 0.0
        %3750 = vmatmul.mubr.f32.gmra.mrb[0].mxu0 %v3675
        %v3751 = vpop.f32.mrb[0].mxu0
        %v3752 = vadd.f32 0.0, %v3751
        %v3753 = vpop.f32.mrb[0].mxu0
        %3754 = vdwg.mxu0
        %v3755 = vadd.f32 %v3591, %v3747
        %v3756 = vadd.f32 %v3596, %v3752
        %s3757 = sld [smem:[#allocation5 + $0x93]]
        %v3758 = vstv %s3757
        %v3759 = vmul.f32 %v3758, %v511
        %v3760 = vmul.f32 %v3758, %v516
        %s3761 = sld [smem:[#allocation5 + $0x97]]
        %v3762 = vstv %s3761
        %v3763 = vmul.f32 %v3762, %v751
        %v3764 = vmul.f32 %v3762, %v756
        %v3765 = vadd.f32 %v3759, %v3763
        %v3766 = vadd.f32 %v3760, %v3764
        %s3767 = sld [smem:[#allocation5 + $0x9b]]
        %v3768 = vstv %s3767
        %v3769 = vmul.f32 %v3768, %v985
        %v3770 = vmul.f32 %v3768, %v990
        %v3771 = vadd.f32 %v3765, %v3769
        %v3772 = vadd.f32 %v3766, %v3770
        %s3773 = sld [smem:[#allocation5 + $0x9f]]
        %v3774 = vstv %s3773
        %v3775 = vmul.f32 %v3774, %v1219
        %v3776 = vmul.f32 %v3774, %v1224
        %v3777 = vadd.f32 %v3771, %v3775
        %v3778 = vadd.f32 %v3772, %v3776
        %s3779 = sld [smem:[#allocation5 + $0xa3]]
        %v3780 = vstv %s3779
        %v3781 = vmul.f32 %v3780, %v589
        %v3782 = vmul.f32 %v3780, %v594
        %v3783 = vadd.f32 %v3777, %v3781
        %v3784 = vadd.f32 %v3778, %v3782
        %s3785 = sld [smem:[#allocation5 + $0xa7]]
        %v3786 = vstv %s3785
        %v3787 = vmul.f32 %v3786, %v826
        %v3788 = vmul.f32 %v3786, %v831
        %v3789 = vadd.f32 %v3783, %v3787
        %v3790 = vadd.f32 %v3784, %v3788
        %s3791 = sld [smem:[#allocation5 + $0xab]]
        %v3792 = vstv %s3791
        %v3793 = vmul.f32 %v3792, %v1060
        %v3794 = vmul.f32 %v3792, %v1065
        %v3795 = vadd.f32 %v3789, %v3793
        %v3796 = vadd.f32 %v3790, %v3794
        %s3797 = sld [smem:[#allocation5 + $0xaf]]
        %v3798 = vstv %s3797
        %v3799 = vmul.f32 %v3798, %v1294
        %v3800 = vmul.f32 %v3798, %v1299
        %v3801 = vadd.f32 %v3795, %v3799
        %v3802 = vadd.f32 %v3796, %v3800
        %s3803 = sld [smem:[#allocation5 + $0xb3]]
        %v3804 = vstv %s3803
        %v3805 = vmul.f32 %v3804, %v667
        %v3806 = vmul.f32 %v3804, %v672
        %v3807 = vadd.f32 %v3801, %v3805
        %v3808 = vadd.f32 %v3802, %v3806
        %s3809 = sld [smem:[#allocation5 + $0xb7]]
        %v3810 = vstv %s3809
        %v3811 = vmul.f32 %v3810, %v901
        %v3812 = vmul.f32 %v3810, %v906
        %v3813 = vadd.f32 %v3807, %v3811
        %v3814 = vadd.f32 %v3808, %v3812
        %s3815 = sld [smem:[#allocation5 + $0xbb]]
        %v3816 = vstv %s3815
        %v3817 = vmul.f32 %v3816, %v1135
        %v3818 = vmul.f32 %v3816, %v1140
        %v3819 = vadd.f32 %v3813, %v3817
        %v3820 = vadd.f32 %v3814, %v3818
        %s3821 = sld [smem:[#allocation5 + $0xbf]]
        %v3822 = vstv %s3821
        %v3823 = vmul.f32 %v3822, %v1369
        %v3824 = vmul.f32 %v3822, %v1374
        %v3825 = vadd.f32 %v3819, %v3823
        %v3826 = vadd.f32 %v3820, %v3824
        %v3827 = vld [vmem:[%s1921] sm:$0xff]
        %v3828 = vld [vmem:[%s1921 + $0x8] sm:$0xff]
        %v3830 = vsel %vm1522, %v3827, 0
        %v3833 = vsel %vm1522, %v3828, 0
        %v3836 = vsel %vm1529, %v3826, 0
        %3838 = vmatprep.subr.mxu0 0.0
        %3839 = vmatpush1.msra.mxu0 %v3825
        %3840 = vmatprep.subr.mxu0 0.0
        %3841 = vmatpush1.msra.mxu0 %v3836
        %3842 = vmatprep.subr.mxu0 0.0
        %3843 = vmatpush1.msra.mxu0 0.0
        %3844 = vmatprep.subr.mxu0 0.0
        %3845 = vmatpush1.msra.mxu0 0.0
        %3846 = vmatprep.subr.mxu0 0.0
        %3847 = vmatpush1.msra.mxu0 0.0
        %3848 = vmatprep.subr.mxu0 0.0
        %3849 = vmatpush1.msra.mxu0 0.0
        %3850 = vmatprep.subr.mxu0 0.0
        %3851 = vmatpush1.msra.mxu0 0.0
        %3852 = vmatprep.subr.mxu0 0.0
        %3853 = vmatpush1.msra.mxu0 0.0
        %3854 = vmatprep.subr.mxu0 0.0
        %3855 = vmatpush1.msra.mxu0 0.0
        %3856 = vmatprep.subr.mxu0 0.0
        %3857 = vmatpush1.msra.mxu0 0.0
        %3858 = vmatprep.subr.mxu0 0.0
        %3859 = vmatpush1.msra.mxu0 0.0
        %3860 = vmatprep.subr.mxu0 0.0
        %3861 = vmatpush1.msra.mxu0 0.0
        %3862 = vmatprep.subr.mxu0 0.0
        %3863 = vmatpush1.msra.mxu0 0.0
        %3864 = vmatprep.subr.mxu0 0.0
        %3865 = vmatpush1.msra.mxu0 0.0
        %3866 = vmatprep.subr.mxu0 0.0
        %3867 = vmatpush1.msra.mxu0 0.0
        %3868 = vmatprep.subr.mxu0 0.0
        %3869 = vmatpush1.msra.mxu0 0.0
        %3870 = vmatprep.subr.mxu0 0.0
        %3871 = vmatpush1.msra.mxu0 0.0
        %3872 = vmatprep.subr.mxu0 0.0
        %3873 = vmatpush1.msra.mxu0 0.0
        %3874 = vmatprep.subr.mxu0 0.0
        %3875 = vmatpush1.msra.mxu0 0.0
        %3876 = vmatprep.subr.mxu0 0.0
        %3877 = vmatpush1.msra.mxu0 0.0
        %3878 = vmatprep.subr.mxu0 0.0
        %3879 = vmatpush1.msra.mxu0 0.0
        %3880 = vmatprep.subr.mxu0 0.0
        %3881 = vmatpush1.msra.mxu0 0.0
        %3882 = vmatprep.subr.mxu0 0.0
        %3883 = vmatpush1.msra.mxu0 0.0
        %3884 = vmatprep.subr.mxu0 0.0
        %3885 = vmatpush1.msra.mxu0 0.0
        %3886 = vmatprep.subr.mxu0 0.0
        %3887 = vmatpush1.msra.mxu0 0.0
        %3888 = vmatprep.subr.mxu0 0.0
        %3889 = vmatpush1.msra.mxu0 0.0
        %3890 = vmatprep.subr.mxu0 0.0
        %3891 = vmatpush1.msra.mxu0 0.0
        %3892 = vmatprep.subr.mxu0 0.0
        %3893 = vmatpush1.msra.mxu0 0.0
        %3894 = vmatprep.subr.mxu0 0.0
        %3895 = vmatpush1.msra.mxu0 0.0
        %3896 = vmatprep.subr.mxu0 0.0
        %3897 = vmatpush1.msra.mxu0 0.0
        %3898 = vmatprep.subr.mxu0 0.0
        %3899 = vmatpush1.msra.mxu0 0.0
        %3900 = vmatprep.subr.mxu0 0.0
        %3901 = vmatpush1.msra.mxu0 0.0
        %3902 = vmatprep.mubr.f32.mxu0 0.0
        %3903 = vmatmul.mubr.f32.gmra.mrb[0].mxu0 %v3830
        %v3904 = vpop.f32.mrb[0].mxu0
        %v3905 = vadd.f32 0.0, %v3904
        %v3906 = vpop.f32.mrb[0].mxu0
        %3907 = vmatprep.mubr.f32.mxu0 0.0
        %3908 = vmatmul.mubr.f32.gmra.mrb[0].mxu0 %v3833
        %v3909 = vpop.f32.mrb[0].mxu0
        %v3910 = vadd.f32 0.0, %v3909
        %v3911 = vpop.f32.mrb[0].mxu0
        %3912 = vdwg.mxu0
        %v3913 = vadd.f32 %v3755, %v3905
        %v3914 = vadd.f32 %v3756, %v3910
        %s3915 = sld [smem:[#allocation8 + $0x3]]
        %v3916 = vstv %s3915
        %v3917 = vadd.f32 %v3913, %v3916
        %v3918 = vadd.f32 %v3914, %v3916
        %s3919 = scalar_lea.vmem %s413, 48 [#allocation10]
        %3920 = vst.msk [vmem:[%s3919] sm:$0xff] %vm2014, %v3917
        %3921 = vst.msk [vmem:[%s3919 + $0x8] sm:$0xff] %vm2014, %v3918
        %s3922 = sand.u32 %s186, 1
        %s3923 = scalar_lea.sflag [#allocation6], %s3922
        %s3924 = sand.u32 %s186, 1
        %s3925 = smul.addr %s3924, 64
        %s3926 = scalar_lea.vmem [#allocation10], %s3925
        // Predicated region
        $region129: #{upsample_forward.1} parent=111 // pred_check
          %p3927 = pneg %p196
        $region130: #{upsample_forward.1} parent=111 // pred_check_branch
          %3929 = sbr.rel (%p3927) target = $region132
        $region131: #{upsample_forward.1} parent=111 // pred_region
          #allocation12 [shape = 'u32[6]{0}', space=smem, size = 0x18, scoped, tag = 'DMA stride descriptor']
          %s3930 = smul.u32 2, %s27
          %s3932 = ssub.s32 1024, 1024
          %3933 = vsyncadd %s3923, %s3932
          %s3934 = smul.addr %s26, 16
          %s3935 = sadd.s32 %s3930, %s3934
          %s3936 = smul.addr %s3935, 128
          %s3937 = scalar_lea.hbm %s6, %s3936
          %s3939 = sshll.u32 1, 14
          %s3940 = sxor.u32 4294967295, %s3939
          %s3943 = sshll.u32 7, 18
          %s3944 = sxor.u32 4294967295, %s3943
          %s3945 = sand.u32 0, %s3944
          %s3947 = sor.u32 %s3945, 0
          %s3949 = sshll.u32 3, 24
          %s3950 = sxor.u32 4294967295, %s3949
          %s3951 = sand.u32 %s3947, %s3950
          %s3953 = sor.u32 %s3951, 0
          %s3954 = sshll.u32 %s3926, 4
          %s3955 = int_to_ptr.vmem [resolvable:$true] %s3954
          %3961 = sst [smem:[#allocation12]] 256
          %s3962 = scalar_lea.smem [#allocation12], 1
          %3963 = sst [smem:[%s3962]] 512
          %s3964 = scalar_lea.smem [#allocation12], 2
          %3965 = sst [smem:[%s3964]] 2
          %s3966 = scalar_lea.smem [#allocation12], 3
          %3967 = sst [smem:[%s3966]] 128
          %s3968 = scalar_lea.smem [#allocation12], 4
          %3969 = sst [smem:[%s3968]] 128
          %s3970 = scalar_lea.smem [#allocation12], 5
          %3971 = sst [smem:[%s3970]] 8
          %3973 = dma.general %s3955, 1024, %s3937, %s3923, [#allocation11], [#allocation12], %s3953, 0
        $region132: #{upsample_forward.1} parent=111 // pred_fallthru
          _
      $region112: #{upsample_forward.1} parent=5 // pred_fallthru
        _
      %p3974 = scmp.le.s32.totalorder 2, %s17
      // Predicated region
      $region133: #{upsample_forward.1} parent=5 // pred_check
        %p3975 = pneg %p3974
      $region134: #{upsample_forward.1} parent=5 // pred_check_branch
        %3977 = sbr.rel (%p3975) target = $region136
      $region135: #{upsample_forward.1} parent=5 // pred_region
        %s3978 = ssub.s32 %s17, 2
        // Predicated region
        $region137: #{upsample_forward.1} parent=135 // pred_check
          %p3979 = pneg %p202
        $region138: #{upsample_forward.1} parent=135 // pred_check_branch
          %3981 = sbr.rel (%p3979) target = $region140
        $region139: #{upsample_forward.1} parent=135 // pred_region
          %s3982 = sand.u32 %s187, 1
          %s3983 = scalar_lea.sflag [#allocation6], %s3982
          %s3984 = sand.u32 %s187, 1
          %s3985 = smul.addr %s3984, 64
          %s3986 = scalar_lea.vmem [#allocation10], %s3985
          %3987 = dma.done %s3983, 1024
        $region140: #{upsample_forward.1} parent=135 // pred_fallthru
          _
      $region136: #{upsample_forward.1} parent=5 // pred_fallthru
        _
    $region6: #{upsample_forward.1} parent=1 // loop_footer
      %s21 = sadd.s32 1, %s17
    $region7: #{upsample_forward.1} parent=1 // loop_footer_branch
      %16 = sbr.rel target = $region3
    $region8: #{upsample_forward.1} parent=1 // loop_exit
      _
    %3988 = vsyncpa [#allocation6], 1
    %s3989 = scalar_lea.sflag [#allocation6], 1
    %3990 = vsyncpa %s3989, 1
    %3991 = vsyncpa [#allocation7], 1
    %s3992 = scalar_lea.sflag [#allocation7], 1
    %3993 = vsyncpa %s3992, 1
    %3994 = vsyncpa [#allocation9], 1

</llo_original>
